<compile_context>
chip_gen: v7x
topology: tpu7x:2x2x1
jax: 0.10.0
libtpu: 0.0.40
codegen_flags: <defaults>
</compile_context>

<pallas_src>
import jax
import jax.numpy as jnp
from jax.experimental import pallas as pl
from jax.experimental.pallas import tpu as pltpu

HIDDEN = 64
LANES = 128


def value_mlp_kernel(s_ref, w1_ref, b1_ref, w2_ref, b2_ref, w3_ref, b3_ref, o_ref):
    x = s_ref[...]                                                   # (TB, n_obs) f32

    # Layer 1: Linear(n_obs, 64) + ReLU   (MXU, f32 accumulate)
    h1 = jnp.dot(x, w1_ref[...], preferred_element_type=jnp.float32)
    h1 = jnp.maximum(h1 + b1_ref[...], 0.0)

    # Layer 2: Linear(64, 64) + ReLU
    h2 = jnp.dot(h1, w2_ref[...], preferred_element_type=jnp.float32)
    h2 = jnp.maximum(h2 + b2_ref[...], 0.0)

    # Layer 3: Linear(64, 1) done on VPU (mul) + XLU (lane reduce) -- a 64x1
    # matmul would fill 1/256 of the MXU and still pay full FIFO latency.
    # w3_ref is the [1, 64] weight row, b3 is a scalar in SMEM.
    v = jnp.sum(h2 * w3_ref[...], axis=-1) + b3_ref[0, 0]            # (TB,)

    # Lane-dense store: pack the TB per-row values into a (1, TB//128, 128)
    # block (unmasked vst) instead of a [TB, 1] single-lane masked store.
    o_ref[...] = v.reshape(o_ref.shape).astype(o_ref.dtype)


def value_forward(s, params, *, tb=1024):
    """Fused 3-layer MLP critic forward pass.

    s: [B, n_obs] float32
    params: w1 [n_obs,64], b1 [1,64], w2 [64,64], b2 [1,64], w3 [64,1], b3 [1,1]
    returns: [B, 1] float32
    """
    # NOTE: keeping f32 end-to-end to match torch.FloatTensor semantics; if the
    # caller already has bf16 activations they can be passed through unchanged
    # (the MXU accumulates in f32 either way) to halve HBM traffic.
    s = s.astype(jnp.float32)
    B, n_obs = s.shape
    assert tb % (8 * LANES) == 0, "TB must be a multiple of 1024 for (8,128) output tiles"

    grid = pl.cdiv(B, tb)
    b_pad = grid * tb
    if b_pad != B:
        # Pad so every grid step sees a full tile (padded rows are sliced off).
        s = jnp.pad(s, ((0, b_pad - B), (0, 0)))

    w1, b1 = params["w1"], params["b1"]
    w2, b2 = params["w2"], params["b2"]
    w3, b3 = params["w3"], params["b3"]
    w3_row = w3.reshape(1, HIDDEN)   # [64,1] -> [1,64] (trivial, one dim is 1)

    # Weights/biases: constant block index -> stay VMEM-resident across steps.
    const = lambda shape: pl.BlockSpec(shape, lambda i: (0,) * len(shape))

    flops = 2 * b_pad * (n_obs * HIDDEN + HIDDEN * HIDDEN + HIDDEN)
    bytes_accessed = 4 * (b_pad * n_obs + b_pad
                          + w1.size + b1.size + w2.size + b2.size + w3.size + b3.size)

    out = pl.pallas_call(
        value_mlp_kernel,
        grid=(grid,),
        in_specs=[
            pl.BlockSpec((tb, n_obs), lambda i: (i, 0)),              # streamed input
            const(w1.shape), const(b1.shape),
            const(w2.shape), const(b2.shape),
            const(w3_row.shape),
            pl.BlockSpec(memory_space=pltpu.MemorySpace.SMEM),        # b3 scalar
        ],
        out_specs=pl.BlockSpec((1, tb // LANES, LANES), lambda i: (i, 0, 0)),
        out_shape=jax.ShapeDtypeStruct((grid, tb // LANES, LANES), jnp.float32),
        compiler_params=pltpu.CompilerParams(
            dimension_semantics=("parallel",),        # shard batch tiles across TCs (v7x)
        ),
        cost_estimate=pl.CostEstimate(
            flops=flops, transcendentals=0, bytes_accessed=bytes_accessed),
    )(s, w1, b1, w2, b2, w3_row, b3)

    # (grid, TB//128, 128) -> (B_pad, 1) -> (B, 1); row-major order matches the
    # in-kernel packing j -> (j // 128, j % 128).
    return out.reshape(b_pad, 1)[:B]


def init_params(key, n_obs, hidden=HIDDEN):
    """Deterministic synthetic init (PyTorch-like uniform fan-in scaling)."""
    ks = jax.random.split(key, 6)

    def lin(kw, kb, fan_in, fan_out):
        bound = 1.0 / jnp.sqrt(fan_in)
        w = jax.random.uniform(kw, (fan_in, fan_out), jnp.float32, -bound, bound)
        b = jax.random.uniform(kb, (1, fan_out), jnp.float32, -bound, bound)
        return w, b

    w1, b1 = lin(ks[0], ks[1], n_obs, hidden)
    w2, b2 = lin(ks[2], ks[3], hidden, hidden)
    w3, b3 = lin(ks[4], ks[5], hidden, 1)
    return {"w1": w1, "b1": b1, "w2": w2, "b2": b2, "w3": w3, "b3": b3}


def value_forward_ref(s, params):
    """Pure-JAX reference of the same forward pass (for correctness check)."""
    h = jnp.maximum(s @ params["w1"] + params["b1"], 0.0)
    h = jnp.maximum(h @ params["w2"] + params["b2"], 0.0)
    return h @ params["w3"] + params["b3"]


if __name__ == "__main__":
    key = jax.random.PRNGKey(0)
    k_param, k_obs = jax.random.split(key)

    n_obs = 32
    params = init_params(k_param, n_obs)

    # Two cases: multi-tile batch (exercises the grid / pipelining) and a small
    # non-multiple batch (exercises the pad + slice path).
    for B in (2048, 300):
        s = jax.random.normal(jax.random.fold_in(k_obs, B), (B, n_obs), dtype=jnp.float32)
        out = jax.block_until_ready(value_forward(s, params))
        ref = value_forward_ref(s, params)
        assert out.shape == (B, 1), out.shape
        assert jnp.allclose(out, ref, atol=1e-4, rtol=1e-5), \
            f"mismatch at B={B}: max abs err {jnp.max(jnp.abs(out - ref))}"

    print("KERNEL_OK")
</pallas_src>

<mosaic_0001>
module attributes {stable_mosaic.version = 11 : i64} {
  func.func @value_mlp_kernel(%arg0: i32, %arg1: memref<1024x32xf32, #tpu.memory_space<vmem>>, %arg2: memref<32x64xf32, #tpu.memory_space<vmem>>, %arg3: memref<1x64xf32, #tpu.memory_space<vmem>>, %arg4: memref<64x64xf32, #tpu.memory_space<vmem>>, %arg5: memref<1x64xf32, #tpu.memory_space<vmem>>, %arg6: memref<1x64xf32, #tpu.memory_space<vmem>>, %arg7: memref<1x1xf32, #tpu.memory_space<smem>>, %arg8: memref<1x8x128xf32, #tpu.memory_space<vmem>>) attributes {dimension_semantics = [#tpu.dimension_semantics<parallel>], iteration_bounds = array<i64: 2>, scalar_prefetch = 0 : i64, scratch_operands = 0 : i64, tpu.core_type = #tpu.core_type<tc>, window_params = [{transform_indices = @transform_0, window_bounds = array<i64: 1024, 32>}, {pipeline_mode = #tpu.pipeline_mode<synchronous>, transform_indices = @transform_1, window_bounds = array<i64: 32, 64>}, {pipeline_mode = #tpu.pipeline_mode<synchronous>, transform_indices = @transform_2, window_bounds = array<i64: 1, 64>}, {pipeline_mode = #tpu.pipeline_mode<synchronous>, transform_indices = @transform_3, window_bounds = array<i64: 64, 64>}, {pipeline_mode = #tpu.pipeline_mode<synchronous>, transform_indices = @transform_4, window_bounds = array<i64: 1, 64>}, {pipeline_mode = #tpu.pipeline_mode<synchronous>, transform_indices = @transform_5, window_bounds = array<i64: 1, 64>}, {transform_indices = @transform_6, window_bounds = array<i64: 1, 1>}, {transform_indices = @transform_7, window_bounds = array<i64: 1, 8, 128>}]} {
    %c0 = arith.constant 0 : index
    %c0_0 = arith.constant 0 : index
    %0 = vector.load %arg1[%c0, %c0_0] : memref<1024x32xf32, #tpu.memory_space<vmem>>, vector<1024x32xf32>
    %c0_1 = arith.constant 0 : index
    %c0_2 = arith.constant 0 : index
    %1 = vector.load %arg2[%c0_1, %c0_2] : memref<32x64xf32, #tpu.memory_space<vmem>>, vector<32x64xf32>
    %cst = arith.constant dense<0.000000e+00> : vector<1024x64xf32>
    %2 = tpu.matmul %0, %1, %cst {dimension_numbers = #tpu.dot_dimension_numbers<[1], [0], [0], [1], [0, 0, 1, 1], [], []>} : vector<1024x32xf32>, vector<32x64xf32>, vector<1024x64xf32> -> vector<1024x64xf32>
    %c0_3 = arith.constant 0 : index
    %c0_4 = arith.constant 0 : index
    %3 = vector.load %arg3[%c0_3, %c0_4] : memref<1x64xf32, #tpu.memory_space<vmem>>, vector<1x64xf32>
    %4 = vector.broadcast %3 : vector<1x64xf32> to vector<1024x64xf32>
    %5 = arith.addf %2, %4 : vector<1024x64xf32>
    %cst_5 = arith.constant 0.000000e+00 : f32
    %6 = vector.broadcast %cst_5 : f32 to vector<1024x64xf32>
    %7 = arith.maximumf %5, %6 : vector<1024x64xf32>
    %c0_6 = arith.constant 0 : index
    %c0_7 = arith.constant 0 : index
    %8 = vector.load %arg4[%c0_6, %c0_7] : memref<64x64xf32, #tpu.memory_space<vmem>>, vector<64x64xf32>
    %cst_8 = arith.constant dense<0.000000e+00> : vector<1024x64xf32>
    %9 = tpu.matmul %7, %8, %cst_8 {dimension_numbers = #tpu.dot_dimension_numbers<[1], [0], [0], [1], [0, 0, 1, 1], [], []>} : vector<1024x64xf32>, vector<64x64xf32>, vector<1024x64xf32> -> vector<1024x64xf32>
    %c0_9 = arith.constant 0 : index
    %c0_10 = arith.constant 0 : index
    %10 = vector.load %arg5[%c0_9, %c0_10] : memref<1x64xf32, #tpu.memory_space<vmem>>, vector<1x64xf32>
    %11 = vector.broadcast %10 : vector<1x64xf32> to vector<1024x64xf32>
    %12 = arith.addf %9, %11 : vector<1024x64xf32>
    %cst_11 = arith.constant 0.000000e+00 : f32
    %13 = vector.broadcast %cst_11 : f32 to vector<1024x64xf32>
    %14 = arith.maximumf %12, %13 : vector<1024x64xf32>
    %c0_12 = arith.constant 0 : index
    %c0_13 = arith.constant 0 : index
    %15 = vector.load %arg6[%c0_12, %c0_13] : memref<1x64xf32, #tpu.memory_space<vmem>>, vector<1x64xf32>
    %16 = vector.broadcast %15 : vector<1x64xf32> to vector<1024x64xf32>
    %17 = arith.mulf %14, %16 : vector<1024x64xf32>
    %cst_14 = arith.constant dense<0.000000e+00> : vector<1024xf32>
    %18 = vector.multi_reduction <add>, %17, %cst_14 [1] : vector<1024x64xf32> to vector<1024xf32>
    %c0_15 = arith.constant 0 : index
    %c0_16 = arith.constant 0 : index
    %19 = memref.load %arg7[%c0_15, %c0_16] : memref<1x1xf32, #tpu.memory_space<smem>>
    %20 = vector.broadcast %19 : f32 to vector<1024xf32>
    %21 = arith.addf %18, %20 : vector<1024xf32>
    %22 = vector.shape_cast %21 : vector<1024xf32> to vector<1x8x128xf32>
    %c0_17 = arith.constant 0 : index
    %c0_18 = arith.constant 0 : index
    %c0_19 = arith.constant 0 : index
    %23 = vector.load %arg8[%c0_17, %c0_18, %c0_19] : memref<1x8x128xf32, #tpu.memory_space<vmem>>, vector<1x8x128xf32>
    tpu.vector_store %arg8[%c0_17, %c0_18, %c0_19], %22 {strides = array<i32>} : memref<1x8x128xf32, #tpu.memory_space<vmem>>, vector<1x8x128xf32>,
    return
  }
  func.func @transform_0(%arg0: i32) -> (i32, i32) {
    %c0_i32 = arith.constant 0 : i32
    %c0_i32_0 = arith.constant 0 : i32
    return %arg0, %c0_i32 : i32, i32
  }
  func.func @transform_1(%arg0: i32) -> (i32, i32) {
    %c0_i32 = arith.constant 0 : i32
    %c0_i32_0 = arith.constant 0 : i32
    %c0_i32_1 = arith.constant 0 : i32
    return %c0_i32, %c0_i32_0 : i32, i32
  }
  func.func @transform_2(%arg0: i32) -> (i32, i32) {
    %c0_i32 = arith.constant 0 : i32
    %c0_i32_0 = arith.constant 0 : i32
    %c0_i32_1 = arith.constant 0 : i32
    return %c0_i32, %c0_i32_0 : i32, i32
  }
  func.func @transform_3(%arg0: i32) -> (i32, i32) {
    %c0_i32 = arith.constant 0 : i32
    %c0_i32_0 = arith.constant 0 : i32
    %c0_i32_1 = arith.constant 0 : i32
    return %c0_i32, %c0_i32_0 : i32, i32
  }
  func.func @transform_4(%arg0: i32) -> (i32, i32) {
    %c0_i32 = arith.constant 0 : i32
    %c0_i32_0 = arith.constant 0 : i32
    %c0_i32_1 = arith.constant 0 : i32
    return %c0_i32, %c0_i32_0 : i32, i32
  }
  func.func @transform_5(%arg0: i32) -> (i32, i32) {
    %c0_i32 = arith.constant 0 : i32
    %c0_i32_0 = arith.constant 0 : i32
    %c0_i32_1 = arith.constant 0 : i32
    return %c0_i32, %c0_i32_0 : i32, i32
  }
  func.func @transform_6(%arg0: i32) -> (i32, i32) {
    %c0_i32 = arith.constant 0 : i32
    %c0_i32_0 = arith.constant 0 : i32
    %c0_i32_1 = arith.constant 0 : i32
    return %c0_i32, %c0_i32_0 : i32, i32
  }
  func.func @transform_7(%arg0: i32) -> (i32, i32, i32) {
    %c0_i32 = arith.constant 0 : i32
    %c0_i32_0 = arith.constant 0 : i32
    %c0_i32_1 = arith.constant 0 : i32
    return %arg0, %c0_i32, %c0_i32_0 : i32, i32, i32
  }
}

</mosaic_0001>

<llo_original>
// kernel: tpu_custom_call.1
$region0: #{tpu_custom_call.1}
  #allocation0 [shape = 'u32[]', space=smem, size = 0x4, offset = 0x4, fixed_abs, tag = 'smem constant byte address 0x4 - core index']
  #allocation1 [shape = 'u32[144,128]{1,0:T(1,128)}', space=vmem, size = 0x12000, scoped, tag = 'internal scratch']
  #allocation2 [shape = 'f32[1,1]{1,0:T(1,128)S(6)}', space=smem, size = 0x200, scoped, tag = 'scoped memory for tpu_custom_call.1']
  %s0 = inlined_call_operand.vmem [shape: f32[2048,32], index: 0, kind: input, shape index: {}]
  %s1 = inlined_call_operand.vmem [shape: f32[32,64], index: 1, kind: input, shape index: {}]
  %s2 = inlined_call_operand.vmem [shape: f32[1,64], index: 2, kind: input, shape index: {}]
  %s3 = inlined_call_operand.vmem [shape: f32[64,64], index: 3, kind: input, shape index: {}]
  %s4 = inlined_call_operand.vmem [shape: f32[1,64], index: 4, kind: input, shape index: {}]
  %s5 = inlined_call_operand.vmem [shape: f32[1,64], index: 5, kind: input, shape index: {}]
  %s6 = inlined_call_operand.<no memory space> [shape: f32[1,1], index: 6, kind: input, shape index: {}]
  %s7 = inlined_call_operand.hbm [shape: f32[2,8,128], index: 7, kind: output, shape index: {}]
  %s8 = sld [smem:[#allocation0]]
  $region61: #{tpu_custom_call.1} parent=0
    _
  %s10 = ssub.s32 1, %s8
  %s11 = scalar_select 0, %s10, %s8
  %12 = sst [smem:[#allocation2]] %s6
  $region1: #{tpu_custom_call.1} parent=0
    #allocation3 [shape = 'u8[8192]{0}', space=vmem, size = 0x2000, scoped, tag = 'output window, operand 0']
    #allocation4 [shape = 's32[2]{0}', space=sflag, size = 0x8, scoped, tag = 'scoped memory for tpu_custom_call.1']
    %13 = vsyncpa [#allocation4], 0
    %s14 = scalar_lea.sflag [#allocation4], 1
    %15 = vsyncpa %s14, 0
    loop: start=0, step=1, limit=4
    $region2: #{tpu_custom_call.1} parent=1 // loop_pre_header
      _
    $region3: #{tpu_custom_call.1} parent=1 // loop_header
      %s17 = sphi 0, %s21
      %p18 = scmp.ge.s32.totalorder %s17, 4
      %s27 = sphi 0, %s29
      %s30 = sphi 0, %s27
      %s31 = sphi 0, %s30
      %s47 = sphi 0, %s31
      %s51 = sphi 0, %s51
      %s53 = sphi 0, %s51
      %s54 = sphi 0, %s53
      %s68 = sphi 0, %s54
      %s72 = sphi 0, %s72
      %s74 = sphi 0, %s72
      %s75 = sphi 0, %s74
      %s89 = sphi 0, %s75
      %s93 = sphi 0, %s93
      %s95 = sphi 0, %s93
      %s96 = sphi 0, %s95
      %s110 = sphi 0, %s96
      %s114 = sphi 0, %s114
      %s116 = sphi 0, %s114
      %s117 = sphi 0, %s116
      %s131 = sphi 0, %s117
      %s135 = sphi 0, %s135
      %s137 = sphi 0, %s135
      %s138 = sphi 0, %s137
      %s152 = sphi 0, %s138
      %s156 = sphi 0, %s156
      %s158 = sphi 0, %s156
      %s159 = sphi 0, %s158
      %s173 = sphi 0, %s159
      %s179 = sphi 0, %s181
      %s182 = sphi 0, %s179
      %s183 = sphi 0, %s182
      %s199 = sphi 0, %s183
    $region4: #{tpu_custom_call.1} parent=1 // loop_header_branch
      %20 = sbr.rel (%p18) target = $region8
    $region5: #{tpu_custom_call.1} parent=1 // loop_body
      %s22 = ssub.s32 %s17, 1
      %s23 = ssub.s32 %s17, 2
      %s24 = sadd.s32 %s17, 1
      %s25 = ssub.s32 %s17, %s24
      %p26 = scmp.eq.s32.totalorder %s25, 0
      %s28 = sadd.s32 %s27, 1
      %s29 = scalar_select %p26, %s27, %s28
      %p32 = pneg %p26
      %p33 = scmp.eq.s32.totalorder %s17, 1
      %p34 = por %p32, %p33
      %p35 = scmp.ne.s32.totalorder %s27, %s30
      %p36 = scmp.eq.s32.totalorder %s17, 0
      %p37 = por %p35, %p36
      %p38 = scmp.ne.s32.totalorder %s27, %s30
      %p39 = scmp.eq.s32.totalorder %s22, 1
      %p40 = por %p38, %p39
      %p41 = scmp.ne.s32.totalorder %s30, %s31
      %p42 = scmp.eq.s32.totalorder %s22, 0
      %p43 = por %p41, %p42
      %p44 = scmp.ne.s32.totalorder %s30, %s31
      %p45 = scmp.eq.s32.totalorder %s23, 1
      %p46 = por %p44, %p45
      %p48 = scmp.ne.s32.totalorder %s31, %s47
      %p49 = scmp.eq.s32.totalorder %s23, 0
      %p50 = por %p48, %p49
      %s52 = sadd.s32 %s51, 1
      %p55 = scmp.eq.s32.totalorder %s17, 1
      %p56 = scmp.ne.s32.totalorder %s51, %s53
      %p57 = scmp.eq.s32.totalorder %s17, 0
      %p58 = por %p56, %p57
      %p59 = scmp.ne.s32.totalorder %s51, %s53
      %p60 = scmp.eq.s32.totalorder %s22, 1
      %p61 = por %p59, %p60
      %p62 = scmp.ne.s32.totalorder %s53, %s54
      %p63 = scmp.eq.s32.totalorder %s22, 0
      %p64 = por %p62, %p63
      %p65 = scmp.ne.s32.totalorder %s53, %s54
      %p66 = scmp.eq.s32.totalorder %s23, 1
      %p67 = por %p65, %p66
      %p69 = scmp.ne.s32.totalorder %s54, %s68
      %p70 = scmp.eq.s32.totalorder %s23, 0
      %p71 = por %p69, %p70
      %s73 = sadd.s32 %s72, 1
      %p76 = scmp.eq.s32.totalorder %s17, 1
      %p77 = scmp.ne.s32.totalorder %s72, %s74
      %p78 = scmp.eq.s32.totalorder %s17, 0
      %p79 = por %p77, %p78
      %p80 = scmp.ne.s32.totalorder %s72, %s74
      %p81 = scmp.eq.s32.totalorder %s22, 1
      %p82 = por %p80, %p81
      %p83 = scmp.ne.s32.totalorder %s74, %s75
      %p84 = scmp.eq.s32.totalorder %s22, 0
      %p85 = por %p83, %p84
      %p86 = scmp.ne.s32.totalorder %s74, %s75
      %p87 = scmp.eq.s32.totalorder %s23, 1
      %p88 = por %p86, %p87
      %p90 = scmp.ne.s32.totalorder %s75, %s89
      %p91 = scmp.eq.s32.totalorder %s23, 0
      %p92 = por %p90, %p91
      %s94 = sadd.s32 %s93, 1
      %p97 = scmp.eq.s32.totalorder %s17, 1
      %p98 = scmp.ne.s32.totalorder %s93, %s95
      %p99 = scmp.eq.s32.totalorder %s17, 0
      %p100 = por %p98, %p99
      %p101 = scmp.ne.s32.totalorder %s93, %s95
      %p102 = scmp.eq.s32.totalorder %s22, 1
      %p103 = por %p101, %p102
      %p104 = scmp.ne.s32.totalorder %s95, %s96
      %p105 = scmp.eq.s32.totalorder %s22, 0
      %p106 = por %p104, %p105
      %p107 = scmp.ne.s32.totalorder %s95, %s96
      %p108 = scmp.eq.s32.totalorder %s23, 1
      %p109 = por %p107, %p108
      %p111 = scmp.ne.s32.totalorder %s96, %s110
      %p112 = scmp.eq.s32.totalorder %s23, 0
      %p113 = por %p111, %p112
      %s115 = sadd.s32 %s114, 1
      %p118 = scmp.eq.s32.totalorder %s17, 1
      %p119 = scmp.ne.s32.totalorder %s114, %s116
      %p120 = scmp.eq.s32.totalorder %s17, 0
      %p121 = por %p119, %p120
      %p122 = scmp.ne.s32.totalorder %s114, %s116
      %p123 = scmp.eq.s32.totalorder %s22, 1
      %p124 = por %p122, %p123
      %p125 = scmp.ne.s32.totalorder %s116, %s117
      %p126 = scmp.eq.s32.totalorder %s22, 0
      %p127 = por %p125, %p126
      %p128 = scmp.ne.s32.totalorder %s116, %s117
      %p129 = scmp.eq.s32.totalorder %s23, 1
      %p130 = por %p128, %p129
      %p132 = scmp.ne.s32.totalorder %s117, %s131
      %p133 = scmp.eq.s32.totalorder %s23, 0
      %p134 = por %p132, %p133
      %s136 = sadd.s32 %s135, 1
      %p139 = scmp.eq.s32.totalorder %s17, 1
      %p140 = scmp.ne.s32.totalorder %s135, %s137
      %p141 = scmp.eq.s32.totalorder %s17, 0
      %p142 = por %p140, %p141
      %p143 = scmp.ne.s32.totalorder %s135, %s137
      %p144 = scmp.eq.s32.totalorder %s22, 1
      %p145 = por %p143, %p144
      %p146 = scmp.ne.s32.totalorder %s137, %s138
      %p147 = scmp.eq.s32.totalorder %s22, 0
      %p148 = por %p146, %p147
      %p149 = scmp.ne.s32.totalorder %s137, %s138
      %p150 = scmp.eq.s32.totalorder %s23, 1
      %p151 = por %p149, %p150
      %p153 = scmp.ne.s32.totalorder %s138, %s152
      %p154 = scmp.eq.s32.totalorder %s23, 0
      %p155 = por %p153, %p154
      %s157 = sadd.s32 %s156, 1
      %p160 = scmp.eq.s32.totalorder %s17, 1
      %p161 = scmp.ne.s32.totalorder %s156, %s158
      %p162 = scmp.eq.s32.totalorder %s17, 0
      %p163 = por %p161, %p162
      %p164 = scmp.ne.s32.totalorder %s156, %s158
      %p165 = scmp.eq.s32.totalorder %s22, 1
      %p166 = por %p164, %p165
      %p167 = scmp.ne.s32.totalorder %s158, %s159
      %p168 = scmp.eq.s32.totalorder %s22, 0
      %p169 = por %p167, %p168
      %p170 = scmp.ne.s32.totalorder %s158, %s159
      %p171 = scmp.eq.s32.totalorder %s23, 1
      %p172 = por %p170, %p171
      %p174 = scmp.ne.s32.totalorder %s159, %s173
      %p175 = scmp.eq.s32.totalorder %s23, 0
      %p176 = por %p174, %p175
      %s177 = ssub.s32 %s17, %s24
      %p178 = scmp.eq.s32.totalorder %s177, 0
      %s180 = sadd.s32 %s179, 1
      %s181 = scalar_select %p178, %s179, %s180
      %p184 = pneg %p178
      %p185 = scmp.eq.s32.totalorder %s17, 1
      %p186 = por %p184, %p185
      %p187 = scmp.ne.s32.totalorder %s179, %s182
      %p188 = scmp.eq.s32.totalorder %s17, 0
      %p189 = por %p187, %p188
      %p190 = scmp.ne.s32.totalorder %s179, %s182
      %p191 = scmp.eq.s32.totalorder %s22, 1
      %p192 = por %p190, %p191
      %p193 = scmp.ne.s32.totalorder %s182, %s183
      %p194 = scmp.eq.s32.totalorder %s22, 0
      %p195 = por %p193, %p194
      %p196 = scmp.ne.s32.totalorder %s182, %s183
      %p197 = scmp.eq.s32.totalorder %s23, 1
      %p198 = por %p196, %p197
      %p200 = scmp.ne.s32.totalorder %s183, %s199
      %p201 = scmp.eq.s32.totalorder %s23, 0
      %p202 = por %p200, %p201
      %p203 = scmp.le.s32.totalorder 1, %s17
      %p204 = scmp.lt.s32.totalorder %s17, 3
      %p205 = pnand %p203, %p204
      %p206 = pneg %p205
      // Predicated region
      $region9: #{tpu_custom_call.1} parent=5 // pred_check
        _
      $region10: #{tpu_custom_call.1} parent=5 // pred_check_branch
        %208 = sbr.rel (%p205) target = $region12
      $region11: #{tpu_custom_call.1} parent=5 // pred_region
        %s209 = ssub.s32 %s17, 1
        // Predicated region
        $region13: #{tpu_custom_call.1} parent=11 // pred_check
          %p210 = pneg %p64
        $region14: #{tpu_custom_call.1} parent=11 // pred_check_branch
          %212 = sbr.rel (%p210) target = $region16
        $region15: #{tpu_custom_call.1} parent=11 // pred_region
          _
        $region16: #{tpu_custom_call.1} parent=11 // pred_fallthru
          _
        // Predicated region
        $region17: #{tpu_custom_call.1} parent=11 // pred_check
          %p213 = pneg %p85
        $region18: #{tpu_custom_call.1} parent=11 // pred_check_branch
          %215 = sbr.rel (%p213) target = $region20
        $region19: #{tpu_custom_call.1} parent=11 // pred_region
          _
        $region20: #{tpu_custom_call.1} parent=11 // pred_fallthru
          _
        // Predicated region
        $region21: #{tpu_custom_call.1} parent=11 // pred_check
          %p216 = pneg %p106
        $region22: #{tpu_custom_call.1} parent=11 // pred_check_branch
          %218 = sbr.rel (%p216) target = $region24
        $region23: #{tpu_custom_call.1} parent=11 // pred_region
          _
        $region24: #{tpu_custom_call.1} parent=11 // pred_fallthru
          _
        // Predicated region
        $region25: #{tpu_custom_call.1} parent=11 // pred_check
          %p219 = pneg %p127
        $region26: #{tpu_custom_call.1} parent=11 // pred_check_branch
          %221 = sbr.rel (%p219) target = $region28
        $region27: #{tpu_custom_call.1} parent=11 // pred_region
          _
        $region28: #{tpu_custom_call.1} parent=11 // pred_fallthru
          _
        // Predicated region
        $region29: #{tpu_custom_call.1} parent=11 // pred_check
          %p222 = pneg %p148
        $region30: #{tpu_custom_call.1} parent=11 // pred_check_branch
          %224 = sbr.rel (%p222) target = $region32
        $region31: #{tpu_custom_call.1} parent=11 // pred_region
          _
        $region32: #{tpu_custom_call.1} parent=11 // pred_fallthru
          _
        // Predicated region
        $region33: #{tpu_custom_call.1} parent=11 // pred_check
          %p225 = pneg %p169
        $region34: #{tpu_custom_call.1} parent=11 // pred_check_branch
          %227 = sbr.rel (%p225) target = $region36
        $region35: #{tpu_custom_call.1} parent=11 // pred_region
          _
        $region36: #{tpu_custom_call.1} parent=11 // pred_fallthru
          _
      $region12: #{tpu_custom_call.1} parent=5 // pred_fallthru
        _
      %p228 = scmp.lt.s32.totalorder %s17, 2
      // Predicated region
      $region37: #{tpu_custom_call.1} parent=5 // pred_check
        %p229 = pneg %p228
      $region38: #{tpu_custom_call.1} parent=5 // pred_check_branch
        %231 = sbr.rel (%p229) target = $region40
      $region39: #{tpu_custom_call.1} parent=5 // pred_region
        // Predicated region
        $region41: #{tpu_custom_call.1} parent=39 // pred_check
          %p232 = pneg %p37
        $region42: #{tpu_custom_call.1} parent=39 // pred_check_branch
          %234 = sbr.rel (%p232) target = $region44
        $region43: #{tpu_custom_call.1} parent=39 // pred_region
          %s235 = smul.u32 128, %s17
          %p236 = scmp.lt.s32.totalorder %s235, 255
          %s237 = scalar_select %p236, %s235, 255
          %s238 = smul.addr %s237, 8
          %s239 = scalar_lea.vmem %s0, %s238
          %s240 = smul.u32 128, %s17
        $region44: #{tpu_custom_call.1} parent=39 // pred_fallthru
          _
      $region40: #{tpu_custom_call.1} parent=5 // pred_fallthru
        _
      %p241 = scmp.le.s32.totalorder 1, %s17
      %p242 = scmp.lt.s32.totalorder %s17, 3
      %p243 = pnand %p241, %p242
      %p244 = pneg %p243
      // Predicated region
      $region45: #{tpu_custom_call.1} parent=5 // pred_check
        _
      $region46: #{tpu_custom_call.1} parent=5 // pred_check_branch
        %246 = sbr.rel (%p243) target = $region48
      $region47: #{tpu_custom_call.1} parent=5 // pred_region
        %s247 = ssub.s32 %s17, 1
        %s248 = smul.u32 128, %s22
        %p249 = scmp.lt.s32.totalorder %s248, 255
        %s250 = scalar_select %p249, %s248, 255
        %s251 = smul.addr %s250, 8
        %s252 = scalar_lea.vmem %s0, %s251
        %p253 = pneg %p43
        %p254 = pneg %p40
        %p255 = pneg %p64
        %p256 = pneg %p61
        %p257 = pneg %p85
        %p258 = pneg %p82
        %p259 = pneg %p106
        %p260 = pneg %p103
        %p261 = pneg %p127
        %p262 = pneg %p124
        %p263 = pneg %p148
        %p264 = pneg %p145
        %p265 = pneg %p169
        %p266 = pneg %p166
        %p267 = pneg %p195
        %p268 = pneg %p192
        %s269 = sand.u32 %s182, 1
        %s270 = scalar_lea.sflag [#allocation4], %s269
        %s271 = sand.u32 %s182, 1
        %s272 = smul.addr %s271, 8
        %s273 = scalar_lea.vmem [#allocation3], %s272
        %s274 = smul.u32 128, %s22
        %p275 = scmp.lt.s32.totalorder %s274, 255
        %s276 = scalar_select %p275, %s274, 255
        %s277 = smul.addr %s276, 8
        %s278 = scalar_lea.vmem %s0, %s277
        %s279 = smul.u32 128, %s22
        %v280 = vld [vmem:[%s278] sm:$0xff]
        %v281 = vld [vmem:[%s278 + $0x8] sm:$0xff]
        %v282 = vld [vmem:[%s278 + $0x10] sm:$0xff]
        %v283 = vld [vmem:[%s278 + $0x18] sm:$0xff]
        %v284 = vld [vmem:[%s278 + $0x20] sm:$0xff]
        %v285 = vld [vmem:[%s278 + $0x28] sm:$0xff]
        %v286 = vld [vmem:[%s278 + $0x30] sm:$0xff]
        %v287 = vld [vmem:[%s278 + $0x38] sm:$0xff]
        %v288 = vld [vmem:[%s278 + $0x40] sm:$0xff]
        %v289 = vld [vmem:[%s278 + $0x48] sm:$0xff]
        %v290 = vld [vmem:[%s278 + $0x50] sm:$0xff]
        %v291 = vld [vmem:[%s278 + $0x58] sm:$0xff]
        %v292 = vld [vmem:[%s278 + $0x60] sm:$0xff]
        %v293 = vld [vmem:[%s278 + $0x68] sm:$0xff]
        %v294 = vld [vmem:[%s278 + $0x70] sm:$0xff]
        %v295 = vld [vmem:[%s278 + $0x78] sm:$0xff]
        %v296 = vld [vmem:[%s278 + $0x80] sm:$0xff]
        %v297 = vld [vmem:[%s278 + $0x88] sm:$0xff]
        %v298 = vld [vmem:[%s278 + $0x90] sm:$0xff]
        %v299 = vld [vmem:[%s278 + $0x98] sm:$0xff]
        %v300 = vld [vmem:[%s278 + $0xa0] sm:$0xff]
        %v301 = vld [vmem:[%s278 + $0xa8] sm:$0xff]
        %v302 = vld [vmem:[%s278 + $0xb0] sm:$0xff]
        %v303 = vld [vmem:[%s278 + $0xb8] sm:$0xff]
        %v304 = vld [vmem:[%s278 + $0xc0] sm:$0xff]
        %v305 = vld [vmem:[%s278 + $0xc8] sm:$0xff]
        %v306 = vld [vmem:[%s278 + $0xd0] sm:$0xff]
        %v307 = vld [vmem:[%s278 + $0xd8] sm:$0xff]
        %v308 = vld [vmem:[%s278 + $0xe0] sm:$0xff]
        %v309 = vld [vmem:[%s278 + $0xe8] sm:$0xff]
        %v310 = vld [vmem:[%s278 + $0xf0] sm:$0xff]
        %v311 = vld [vmem:[%s278 + $0xf8] sm:$0xff]
        %v312 = vld [vmem:[%s278 + $0x100] sm:$0xff]
        %v313 = vld [vmem:[%s278 + $0x108] sm:$0xff]
        %v314 = vld [vmem:[%s278 + $0x110] sm:$0xff]
        %v315 = vld [vmem:[%s278 + $0x118] sm:$0xff]
        %v316 = vld [vmem:[%s278 + $0x120] sm:$0xff]
        %v317 = vld [vmem:[%s278 + $0x128] sm:$0xff]
        %v318 = vld [vmem:[%s278 + $0x130] sm:$0xff]
        %v319 = vld [vmem:[%s278 + $0x138] sm:$0xff]
        %v320 = vld [vmem:[%s278 + $0x140] sm:$0xff]
        %v321 = vld [vmem:[%s278 + $0x148] sm:$0xff]
        %v322 = vld [vmem:[%s278 + $0x150] sm:$0xff]
        %v323 = vld [vmem:[%s278 + $0x158] sm:$0xff]
        %v324 = vld [vmem:[%s278 + $0x160] sm:$0xff]
        %v325 = vld [vmem:[%s278 + $0x168] sm:$0xff]
        %v326 = vld [vmem:[%s278 + $0x170] sm:$0xff]
        %v327 = vld [vmem:[%s278 + $0x178] sm:$0xff]
        %v328 = vld [vmem:[%s278 + $0x180] sm:$0xff]
        %v329 = vld [vmem:[%s278 + $0x188] sm:$0xff]
        %v330 = vld [vmem:[%s278 + $0x190] sm:$0xff]
        %v331 = vld [vmem:[%s278 + $0x198] sm:$0xff]
        %v332 = vld [vmem:[%s278 + $0x1a0] sm:$0xff]
        %v333 = vld [vmem:[%s278 + $0x1a8] sm:$0xff]
        %v334 = vld [vmem:[%s278 + $0x1b0] sm:$0xff]
        %v335 = vld [vmem:[%s278 + $0x1b8] sm:$0xff]
        %v336 = vld [vmem:[%s278 + $0x1c0] sm:$0xff]
        %v337 = vld [vmem:[%s278 + $0x1c8] sm:$0xff]
        %v338 = vld [vmem:[%s278 + $0x1d0] sm:$0xff]
        %v339 = vld [vmem:[%s278 + $0x1d8] sm:$0xff]
        %v340 = vld [vmem:[%s278 + $0x1e0] sm:$0xff]
        %v341 = vld [vmem:[%s278 + $0x1e8] sm:$0xff]
        %v342 = vld [vmem:[%s278 + $0x1f0] sm:$0xff]
        %v343 = vld [vmem:[%s278 + $0x1f8] sm:$0xff]
        %v344 = vld [vmem:[%s278 + $0x200] sm:$0xff]
        %v345 = vld [vmem:[%s278 + $0x208] sm:$0xff]
        %v346 = vld [vmem:[%s278 + $0x210] sm:$0xff]
        %v347 = vld [vmem:[%s278 + $0x218] sm:$0xff]
        %v348 = vld [vmem:[%s278 + $0x220] sm:$0xff]
        %v349 = vld [vmem:[%s278 + $0x228] sm:$0xff]
        %v350 = vld [vmem:[%s278 + $0x230] sm:$0xff]
        %v351 = vld [vmem:[%s278 + $0x238] sm:$0xff]
        %v352 = vld [vmem:[%s278 + $0x240] sm:$0xff]
        %v353 = vld [vmem:[%s278 + $0x248] sm:$0xff]
        %v354 = vld [vmem:[%s278 + $0x250] sm:$0xff]
        %v355 = vld [vmem:[%s278 + $0x258] sm:$0xff]
        %v356 = vld [vmem:[%s278 + $0x260] sm:$0xff]
        %v357 = vld [vmem:[%s278 + $0x268] sm:$0xff]
        %v358 = vld [vmem:[%s278 + $0x270] sm:$0xff]
        %v359 = vld [vmem:[%s278 + $0x278] sm:$0xff]
        %v360 = vld [vmem:[%s278 + $0x280] sm:$0xff]
        %v361 = vld [vmem:[%s278 + $0x288] sm:$0xff]
        %v362 = vld [vmem:[%s278 + $0x290] sm:$0xff]
        %v363 = vld [vmem:[%s278 + $0x298] sm:$0xff]
        %v364 = vld [vmem:[%s278 + $0x2a0] sm:$0xff]
        %v365 = vld [vmem:[%s278 + $0x2a8] sm:$0xff]
        %v366 = vld [vmem:[%s278 + $0x2b0] sm:$0xff]
        %v367 = vld [vmem:[%s278 + $0x2b8] sm:$0xff]
        %v368 = vld [vmem:[%s278 + $0x2c0] sm:$0xff]
        %v369 = vld [vmem:[%s278 + $0x2c8] sm:$0xff]
        %v370 = vld [vmem:[%s278 + $0x2d0] sm:$0xff]
        %v371 = vld [vmem:[%s278 + $0x2d8] sm:$0xff]
        %v372 = vld [vmem:[%s278 + $0x2e0] sm:$0xff]
        %v373 = vld [vmem:[%s278 + $0x2e8] sm:$0xff]
        %v374 = vld [vmem:[%s278 + $0x2f0] sm:$0xff]
        %v375 = vld [vmem:[%s278 + $0x2f8] sm:$0xff]
        %v376 = vld [vmem:[%s278 + $0x300] sm:$0xff]
        %v377 = vld [vmem:[%s278 + $0x308] sm:$0xff]
        %v378 = vld [vmem:[%s278 + $0x310] sm:$0xff]
        %v379 = vld [vmem:[%s278 + $0x318] sm:$0xff]
        %v380 = vld [vmem:[%s278 + $0x320] sm:$0xff]
        %v381 = vld [vmem:[%s278 + $0x328] sm:$0xff]
        %v382 = vld [vmem:[%s278 + $0x330] sm:$0xff]
        %v383 = vld [vmem:[%s278 + $0x338] sm:$0xff]
        %v384 = vld [vmem:[%s278 + $0x340] sm:$0xff]
        %v385 = vld [vmem:[%s278 + $0x348] sm:$0xff]
        %v386 = vld [vmem:[%s278 + $0x350] sm:$0xff]
        %v387 = vld [vmem:[%s278 + $0x358] sm:$0xff]
        %v388 = vld [vmem:[%s278 + $0x360] sm:$0xff]
        %v389 = vld [vmem:[%s278 + $0x368] sm:$0xff]
        %v390 = vld [vmem:[%s278 + $0x370] sm:$0xff]
        %v391 = vld [vmem:[%s278 + $0x378] sm:$0xff]
        %v392 = vld [vmem:[%s278 + $0x380] sm:$0xff]
        %v393 = vld [vmem:[%s278 + $0x388] sm:$0xff]
        %v394 = vld [vmem:[%s278 + $0x390] sm:$0xff]
        %v395 = vld [vmem:[%s278 + $0x398] sm:$0xff]
        %v396 = vld [vmem:[%s278 + $0x3a0] sm:$0xff]
        %v397 = vld [vmem:[%s278 + $0x3a8] sm:$0xff]
        %v398 = vld [vmem:[%s278 + $0x3b0] sm:$0xff]
        %v399 = vld [vmem:[%s278 + $0x3b8] sm:$0xff]
        %v400 = vld [vmem:[%s278 + $0x3c0] sm:$0xff]
        %v401 = vld [vmem:[%s278 + $0x3c8] sm:$0xff]
        %v402 = vld [vmem:[%s278 + $0x3d0] sm:$0xff]
        %v403 = vld [vmem:[%s278 + $0x3d8] sm:$0xff]
        %v404 = vld [vmem:[%s278 + $0x3e0] sm:$0xff]
        %v405 = vld [vmem:[%s278 + $0x3e8] sm:$0xff]
        %v406 = vld [vmem:[%s278 + $0x3f0] sm:$0xff]
        %v407 = vld [vmem:[%s278 + $0x3f8] sm:$0xff]
        %v408 = vld [vmem:[%s1] sm:$0xff]
        %v409 = vld [vmem:[%s1 + $0x8] sm:$0xff]
        %v410 = vld [vmem:[%s1 + $0x10] sm:$0xff]
        %v411 = vld [vmem:[%s1 + $0x18] sm:$0xff]
        %v412 = vld [vmem:[%s2] sm:$0x1]
        %v414 = vlaneseq
        %v415 = vshrl.u32 %v414, 7
        %v416 = vsub.s32 0, %v415
        %v417 = vrot.slane %v412, %v416
        %vm419 = vcmask 261120
        %v421 = vsel %vm419, %v280, 0
        %v424 = vsel %vm419, %v281, 0
        %v427 = vsel %vm419, %v282, 0
        %v430 = vsel %vm419, %v283, 0
        %v433 = vsel %vm419, %v284, 0
        %v436 = vsel %vm419, %v285, 0
        %v439 = vsel %vm419, %v286, 0
        %v442 = vsel %vm419, %v287, 0
        %v445 = vsel %vm419, %v288, 0
        %v448 = vsel %vm419, %v289, 0
        %v451 = vsel %vm419, %v290, 0
        %v454 = vsel %vm419, %v291, 0
        %v457 = vsel %vm419, %v292, 0
        %v460 = vsel %vm419, %v293, 0
        %v463 = vsel %vm419, %v294, 0
        %v466 = vsel %vm419, %v295, 0
        %v469 = vsel %vm419, %v296, 0
        %v472 = vsel %vm419, %v297, 0
        %v475 = vsel %vm419, %v298, 0
        %v478 = vsel %vm419, %v299, 0
        %v481 = vsel %vm419, %v300, 0
        %v484 = vsel %vm419, %v301, 0
        %v487 = vsel %vm419, %v302, 0
        %v490 = vsel %vm419, %v303, 0
        %v493 = vsel %vm419, %v304, 0
        %v496 = vsel %vm419, %v305, 0
        %v499 = vsel %vm419, %v306, 0
        %v502 = vsel %vm419, %v307, 0
        %v505 = vsel %vm419, %v308, 0
        %v508 = vsel %vm419, %v309, 0
        %v511 = vsel %vm419, %v310, 0
        %v514 = vsel %vm419, %v311, 0
        %v517 = vsel %vm419, %v312, 0
        %v520 = vsel %vm419, %v313, 0
        %v523 = vsel %vm419, %v314, 0
        %v526 = vsel %vm419, %v315, 0
        %v529 = vsel %vm419, %v316, 0
        %v532 = vsel %vm419, %v317, 0
        %v535 = vsel %vm419, %v318, 0
        %v538 = vsel %vm419, %v319, 0
        %v541 = vsel %vm419, %v320, 0
        %v544 = vsel %vm419, %v321, 0
        %v547 = vsel %vm419, %v322, 0
        %v550 = vsel %vm419, %v323, 0
        %v553 = vsel %vm419, %v324, 0
        %v556 = vsel %vm419, %v325, 0
        %v559 = vsel %vm419, %v326, 0
        %v562 = vsel %vm419, %v327, 0
        %v565 = vsel %vm419, %v328, 0
        %v568 = vsel %vm419, %v329, 0
        %v571 = vsel %vm419, %v330, 0
        %v574 = vsel %vm419, %v331, 0
        %v577 = vsel %vm419, %v332, 0
        %v580 = vsel %vm419, %v333, 0
        %v583 = vsel %vm419, %v334, 0
        %v586 = vsel %vm419, %v335, 0
        %v589 = vsel %vm419, %v336, 0
        %v592 = vsel %vm419, %v337, 0
        %v595 = vsel %vm419, %v338, 0
        %v598 = vsel %vm419, %v339, 0
        %v601 = vsel %vm419, %v340, 0
        %v604 = vsel %vm419, %v341, 0
        %v607 = vsel %vm419, %v342, 0
        %v610 = vsel %vm419, %v343, 0
        %v613 = vsel %vm419, %v344, 0
        %v616 = vsel %vm419, %v345, 0
        %v619 = vsel %vm419, %v346, 0
        %v622 = vsel %vm419, %v347, 0
        %v625 = vsel %vm419, %v348, 0
        %v628 = vsel %vm419, %v349, 0
        %v631 = vsel %vm419, %v350, 0
        %v634 = vsel %vm419, %v351, 0
        %v637 = vsel %vm419, %v352, 0
        %v640 = vsel %vm419, %v353, 0
        %v643 = vsel %vm419, %v354, 0
        %v646 = vsel %vm419, %v355, 0
        %v649 = vsel %vm419, %v356, 0
        %v652 = vsel %vm419, %v357, 0
        %v655 = vsel %vm419, %v358, 0
        %v658 = vsel %vm419, %v359, 0
        %v661 = vsel %vm419, %v360, 0
        %v664 = vsel %vm419, %v361, 0
        %v667 = vsel %vm419, %v362, 0
        %v670 = vsel %vm419, %v363, 0
        %v673 = vsel %vm419, %v364, 0
        %v676 = vsel %vm419, %v365, 0
        %v679 = vsel %vm419, %v366, 0
        %v682 = vsel %vm419, %v367, 0
        %v685 = vsel %vm419, %v368, 0
        %v688 = vsel %vm419, %v369, 0
        %v691 = vsel %vm419, %v370, 0
        %v694 = vsel %vm419, %v371, 0
        %v697 = vsel %vm419, %v372, 0
        %v700 = vsel %vm419, %v373, 0
        %v703 = vsel %vm419, %v374, 0
        %v706 = vsel %vm419, %v375, 0
        %v709 = vsel %vm419, %v376, 0
        %v712 = vsel %vm419, %v377, 0
        %v715 = vsel %vm419, %v378, 0
        %v718 = vsel %vm419, %v379, 0
        %v721 = vsel %vm419, %v380, 0
        %v724 = vsel %vm419, %v381, 0
        %v727 = vsel %vm419, %v382, 0
        %v730 = vsel %vm419, %v383, 0
        %v733 = vsel %vm419, %v384, 0
        %v736 = vsel %vm419, %v385, 0
        %v739 = vsel %vm419, %v386, 0
        %v742 = vsel %vm419, %v387, 0
        %v745 = vsel %vm419, %v388, 0
        %v748 = vsel %vm419, %v389, 0
        %v751 = vsel %vm419, %v390, 0
        %v754 = vsel %vm419, %v391, 0
        %v757 = vsel %vm419, %v392, 0
        %v760 = vsel %vm419, %v393, 0
        %v763 = vsel %vm419, %v394, 0
        %v766 = vsel %vm419, %v395, 0
        %v769 = vsel %vm419, %v396, 0
        %v772 = vsel %vm419, %v397, 0
        %v775 = vsel %vm419, %v398, 0
        %v778 = vsel %vm419, %v399, 0
        %v781 = vsel %vm419, %v400, 0
        %v784 = vsel %vm419, %v401, 0
        %v787 = vsel %vm419, %v402, 0
        %v790 = vsel %vm419, %v403, 0
        %v793 = vsel %vm419, %v404, 0
        %v796 = vsel %vm419, %v405, 0
        %v799 = vsel %vm419, %v406, 0
        %v802 = vsel %vm419, %v407, 0
        %804 = vmatprep.subr.mxu0 0.0
        %805 = vmatpush1.msra.mxu0 %v408
        %806 = vmatprep.subr.mxu0 0.0
        %807 = vmatpush1.msra.mxu0 %v409
        %808 = vmatprep.subr.mxu0 0.0
        %809 = vmatpush1.msra.mxu0 %v410
        %810 = vmatprep.subr.mxu0 0.0
        %811 = vmatpush1.msra.mxu0 %v411
        %812 = vmatprep.subr.mxu0 0.0
        %813 = vmatpush1.msra.mxu0 0.0
        %814 = vmatprep.subr.mxu0 0.0
        %815 = vmatpush1.msra.mxu0 0.0
        %816 = vmatprep.subr.mxu0 0.0
        %817 = vmatpush1.msra.mxu0 0.0
        %818 = vmatprep.subr.mxu0 0.0
        %819 = vmatpush1.msra.mxu0 0.0
        %820 = vmatprep.subr.mxu0 0.0
        %821 = vmatpush1.msra.mxu0 0.0
        %822 = vmatprep.subr.mxu0 0.0
        %823 = vmatpush1.msra.mxu0 0.0
        %824 = vmatprep.subr.mxu0 0.0
        %825 = vmatpush1.msra.mxu0 0.0
        %826 = vmatprep.subr.mxu0 0.0
        %827 = vmatpush1.msra.mxu0 0.0
        %828 = vmatprep.subr.mxu0 0.0
        %829 = vmatpush1.msra.mxu0 0.0
        %830 = vmatprep.subr.mxu0 0.0
        %831 = vmatpush1.msra.mxu0 0.0
        %832 = vmatprep.subr.mxu0 0.0
        %833 = vmatpush1.msra.mxu0 0.0
        %834 = vmatprep.subr.mxu0 0.0
        %835 = vmatpush1.msra.mxu0 0.0
        %836 = vmatprep.subr.mxu0 0.0
        %837 = vmatpush1.msra.mxu0 0.0
        %838 = vmatprep.subr.mxu0 0.0
        %839 = vmatpush1.msra.mxu0 0.0
        %840 = vmatprep.subr.mxu0 0.0
        %841 = vmatpush1.msra.mxu0 0.0
        %842 = vmatprep.subr.mxu0 0.0
        %843 = vmatpush1.msra.mxu0 0.0
        %844 = vmatprep.subr.mxu0 0.0
        %845 = vmatpush1.msra.mxu0 0.0
        %846 = vmatprep.subr.mxu0 0.0
        %847 = vmatpush1.msra.mxu0 0.0
        %848 = vmatprep.subr.mxu0 0.0
        %849 = vmatpush1.msra.mxu0 0.0
        %850 = vmatprep.subr.mxu0 0.0
        %851 = vmatpush1.msra.mxu0 0.0
        %852 = vmatprep.subr.mxu0 0.0
        %853 = vmatpush1.msra.mxu0 0.0
        %854 = vmatprep.subr.mxu0 0.0
        %855 = vmatpush1.msra.mxu0 0.0
        %856 = vmatprep.subr.mxu0 0.0
        %857 = vmatpush1.msra.mxu0 0.0
        %858 = vmatprep.subr.mxu0 0.0
        %859 = vmatpush1.msra.mxu0 0.0
        %860 = vmatprep.subr.mxu0 0.0
        %861 = vmatpush1.msra.mxu0 0.0
        %862 = vmatprep.subr.mxu0 0.0
        %863 = vmatpush1.msra.mxu0 0.0
        %864 = vmatprep.subr.mxu0 0.0
        %865 = vmatpush1.msra.mxu0 0.0
        %866 = vmatprep.subr.mxu0 0.0
        %867 = vmatpush1.msra.mxu0 0.0
        %868 = vmatprep.mubr.f32.mxu0 0.0
        %869 = vmatmul.mubr.f32.gmra.mrb[0].mxu0 %v421
        %v870 = vpop.f32.mrb[0].mxu0
        %v871 = vadd.f32 %v417, %v870
        %v872 = vpop.f32.mrb[0].mxu0
        %873 = vmatprep.mubr.f32.mxu0 0.0
        %874 = vmatmul.mubr.f32.gmra.mrb[0].mxu0 %v424
        %v875 = vpop.f32.mrb[0].mxu0
        %v876 = vadd.f32 %v417, %v875
        %v877 = vpop.f32.mrb[0].mxu0
        %878 = vmatprep.mubr.f32.mxu0 0.0
        %879 = vmatmul.mubr.f32.gmra.mrb[0].mxu0 %v427
        %v880 = vpop.f32.mrb[0].mxu0
        %v881 = vadd.f32 %v417, %v880
        %v882 = vpop.f32.mrb[0].mxu0
        %883 = vmatprep.mubr.f32.mxu0 0.0
        %884 = vmatmul.mubr.f32.gmra.mrb[0].mxu0 %v430
        %v885 = vpop.f32.mrb[0].mxu0
        %v886 = vadd.f32 %v417, %v885
        %v887 = vpop.f32.mrb[0].mxu0
        %888 = vmatprep.mubr.f32.mxu0 0.0
        %889 = vmatmul.mubr.f32.gmra.mrb[0].mxu0 %v433
        %v890 = vpop.f32.mrb[0].mxu0
        %v891 = vadd.f32 %v417, %v890
        %v892 = vpop.f32.mrb[0].mxu0
        %893 = vmatprep.mubr.f32.mxu0 0.0
        %894 = vmatmul.mubr.f32.gmra.mrb[0].mxu0 %v436
        %v895 = vpop.f32.mrb[0].mxu0
        %v896 = vadd.f32 %v417, %v895
        %v897 = vpop.f32.mrb[0].mxu0
        %898 = vmatprep.mubr.f32.mxu0 0.0
        %899 = vmatmul.mubr.f32.gmra.mrb[0].mxu0 %v439
        %v900 = vpop.f32.mrb[0].mxu0
        %v901 = vadd.f32 %v417, %v900
        %v902 = vpop.f32.mrb[0].mxu0
        %903 = vmatprep.mubr.f32.mxu0 0.0
        %904 = vmatmul.mubr.f32.gmra.mrb[0].mxu0 %v442
        %v905 = vpop.f32.mrb[0].mxu0
        %v906 = vadd.f32 %v417, %v905
        %v907 = vpop.f32.mrb[0].mxu0
        %908 = vmatprep.mubr.f32.mxu0 0.0
        %909 = vmatmul.mubr.f32.gmra.mrb[0].mxu0 %v445
        %v910 = vpop.f32.mrb[0].mxu0
        %v911 = vadd.f32 %v417, %v910
        %v912 = vpop.f32.mrb[0].mxu0
        %913 = vmatprep.mubr.f32.mxu0 0.0
        %914 = vmatmul.mubr.f32.gmra.mrb[0].mxu0 %v448
        %v915 = vpop.f32.mrb[0].mxu0
        %v916 = vadd.f32 %v417, %v915
        %v917 = vpop.f32.mrb[0].mxu0
        %918 = vmatprep.mubr.f32.mxu0 0.0
        %919 = vmatmul.mubr.f32.gmra.mrb[0].mxu0 %v451
        %v920 = vpop.f32.mrb[0].mxu0
        %v921 = vadd.f32 %v417, %v920
        %v922 = vpop.f32.mrb[0].mxu0
        %923 = vmatprep.mubr.f32.mxu0 0.0
        %924 = vmatmul.mubr.f32.gmra.mrb[0].mxu0 %v454
        %v925 = vpop.f32.mrb[0].mxu0
        %v926 = vadd.f32 %v417, %v925
        %v927 = vpop.f32.mrb[0].mxu0
        %928 = vmatprep.mubr.f32.mxu0 0.0
        %929 = vmatmul.mubr.f32.gmra.mrb[0].mxu0 %v457
        %v930 = vpop.f32.mrb[0].mxu0
        %v931 = vadd.f32 %v417, %v930
        %v932 = vpop.f32.mrb[0].mxu0
        %933 = vmatprep.mubr.f32.mxu0 0.0
        %934 = vmatmul.mubr.f32.gmra.mrb[0].mxu0 %v460
        %v935 = vpop.f32.mrb[0].mxu0
        %v936 = vadd.f32 %v417, %v935
        %v937 = vpop.f32.mrb[0].mxu0
        %938 = vmatprep.mubr.f32.mxu0 0.0
        %939 = vmatmul.mubr.f32.gmra.mrb[0].mxu0 %v463
        %v940 = vpop.f32.mrb[0].mxu0
        %v941 = vadd.f32 %v417, %v940
        %v942 = vpop.f32.mrb[0].mxu0
        %943 = vmatprep.mubr.f32.mxu0 0.0
        %944 = vmatmul.mubr.f32.gmra.mrb[0].mxu0 %v466
        %v945 = vpop.f32.mrb[0].mxu0
        %v946 = vadd.f32 %v417, %v945
        %v947 = vpop.f32.mrb[0].mxu0
        %948 = vmatprep.mubr.f32.mxu0 0.0
        %949 = vmatmul.mubr.f32.gmra.mrb[0].mxu0 %v469
        %v950 = vpop.f32.mrb[0].mxu0
        %v951 = vadd.f32 %v417, %v950
        %v952 = vpop.f32.mrb[0].mxu0
        %953 = vmatprep.mubr.f32.mxu0 0.0
        %954 = vmatmul.mubr.f32.gmra.mrb[0].mxu0 %v472
        %v955 = vpop.f32.mrb[0].mxu0
        %v956 = vadd.f32 %v417, %v955
        %v957 = vpop.f32.mrb[0].mxu0
        %958 = vmatprep.mubr.f32.mxu0 0.0
        %959 = vmatmul.mubr.f32.gmra.mrb[0].mxu0 %v475
        %v960 = vpop.f32.mrb[0].mxu0
        %v961 = vadd.f32 %v417, %v960
        %v962 = vpop.f32.mrb[0].mxu0
        %963 = vmatprep.mubr.f32.mxu0 0.0
        %964 = vmatmul.mubr.f32.gmra.mrb[0].mxu0 %v478
        %v965 = vpop.f32.mrb[0].mxu0
        %v966 = vadd.f32 %v417, %v965
        %v967 = vpop.f32.mrb[0].mxu0
        %968 = vmatprep.mubr.f32.mxu0 0.0
        %969 = vmatmul.mubr.f32.gmra.mrb[0].mxu0 %v481
        %v970 = vpop.f32.mrb[0].mxu0
        %v971 = vadd.f32 %v417, %v970
        %v972 = vpop.f32.mrb[0].mxu0
        %973 = vmatprep.mubr.f32.mxu0 0.0
        %974 = vmatmul.mubr.f32.gmra.mrb[0].mxu0 %v484
        %v975 = vpop.f32.mrb[0].mxu0
        %v976 = vadd.f32 %v417, %v975
        %v977 = vpop.f32.mrb[0].mxu0
        %978 = vmatprep.mubr.f32.mxu0 0.0
        %979 = vmatmul.mubr.f32.gmra.mrb[0].mxu0 %v487
        %v980 = vpop.f32.mrb[0].mxu0
        %v981 = vadd.f32 %v417, %v980
        %v982 = vpop.f32.mrb[0].mxu0
        %983 = vmatprep.mubr.f32.mxu0 0.0
        %984 = vmatmul.mubr.f32.gmra.mrb[0].mxu0 %v490
        %v985 = vpop.f32.mrb[0].mxu0
        %v986 = vadd.f32 %v417, %v985
        %v987 = vpop.f32.mrb[0].mxu0
        %988 = vmatprep.mubr.f32.mxu0 0.0
        %989 = vmatmul.mubr.f32.gmra.mrb[0].mxu0 %v493
        %v990 = vpop.f32.mrb[0].mxu0
        %v991 = vadd.f32 %v417, %v990
        %v992 = vpop.f32.mrb[0].mxu0
        %993 = vmatprep.mubr.f32.mxu0 0.0
        %994 = vmatmul.mubr.f32.gmra.mrb[0].mxu0 %v496
        %v995 = vpop.f32.mrb[0].mxu0
        %v996 = vadd.f32 %v417, %v995
        %v997 = vpop.f32.mrb[0].mxu0
        %998 = vmatprep.mubr.f32.mxu0 0.0
        %999 = vmatmul.mubr.f32.gmra.mrb[0].mxu0 %v499
        %v1000 = vpop.f32.mrb[0].mxu0
        %v1001 = vadd.f32 %v417, %v1000
        %v1002 = vpop.f32.mrb[0].mxu0
        %1003 = vmatprep.mubr.f32.mxu0 0.0
        %1004 = vmatmul.mubr.f32.gmra.mrb[0].mxu0 %v502
        %v1005 = vpop.f32.mrb[0].mxu0
        %v1006 = vadd.f32 %v417, %v1005
        %v1007 = vpop.f32.mrb[0].mxu0
        %1008 = vmatprep.mubr.f32.mxu0 0.0
        %1009 = vmatmul.mubr.f32.gmra.mrb[0].mxu0 %v505
        %v1010 = vpop.f32.mrb[0].mxu0
        %v1011 = vadd.f32 %v417, %v1010
        %v1012 = vpop.f32.mrb[0].mxu0
        %1013 = vmatprep.mubr.f32.mxu0 0.0
        %1014 = vmatmul.mubr.f32.gmra.mrb[0].mxu0 %v508
        %v1015 = vpop.f32.mrb[0].mxu0
        %v1016 = vadd.f32 %v417, %v1015
        %v1017 = vpop.f32.mrb[0].mxu0
        %1018 = vmatprep.mubr.f32.mxu0 0.0
        %1019 = vmatmul.mubr.f32.gmra.mrb[0].mxu0 %v511
        %v1020 = vpop.f32.mrb[0].mxu0
        %v1021 = vadd.f32 %v417, %v1020
        %v1022 = vpop.f32.mrb[0].mxu0
        %1023 = vmatprep.mubr.f32.mxu0 0.0
        %1024 = vmatmul.mubr.f32.gmra.mrb[0].mxu0 %v514
        %v1025 = vpop.f32.mrb[0].mxu0
        %v1026 = vadd.f32 %v417, %v1025
        %v1027 = vpop.f32.mrb[0].mxu0
        %1028 = vmatprep.mubr.f32.mxu0 0.0
        %1029 = vmatmul.mubr.f32.gmra.mrb[0].mxu0 %v517
        %v1030 = vpop.f32.mrb[0].mxu0
        %v1031 = vadd.f32 %v417, %v1030
        %v1032 = vpop.f32.mrb[0].mxu0
        %1033 = vmatprep.mubr.f32.mxu0 0.0
        %1034 = vmatmul.mubr.f32.gmra.mrb[0].mxu0 %v520
        %v1035 = vpop.f32.mrb[0].mxu0
        %v1036 = vadd.f32 %v417, %v1035
        %v1037 = vpop.f32.mrb[0].mxu0
        %1038 = vmatprep.mubr.f32.mxu0 0.0
        %1039 = vmatmul.mubr.f32.gmra.mrb[0].mxu0 %v523
        %v1040 = vpop.f32.mrb[0].mxu0
        %v1041 = vadd.f32 %v417, %v1040
        %v1042 = vpop.f32.mrb[0].mxu0
        %1043 = vmatprep.mubr.f32.mxu0 0.0
        %1044 = vmatmul.mubr.f32.gmra.mrb[0].mxu0 %v526
        %v1045 = vpop.f32.mrb[0].mxu0
        %v1046 = vadd.f32 %v417, %v1045
        %v1047 = vpop.f32.mrb[0].mxu0
        %1048 = vmatprep.mubr.f32.mxu0 0.0
        %1049 = vmatmul.mubr.f32.gmra.mrb[0].mxu0 %v529
        %v1050 = vpop.f32.mrb[0].mxu0
        %v1051 = vadd.f32 %v417, %v1050
        %v1052 = vpop.f32.mrb[0].mxu0
        %1053 = vmatprep.mubr.f32.mxu0 0.0
        %1054 = vmatmul.mubr.f32.gmra.mrb[0].mxu0 %v532
        %v1055 = vpop.f32.mrb[0].mxu0
        %v1056 = vadd.f32 %v417, %v1055
        %v1057 = vpop.f32.mrb[0].mxu0
        %1058 = vmatprep.mubr.f32.mxu0 0.0
        %1059 = vmatmul.mubr.f32.gmra.mrb[0].mxu0 %v535
        %v1060 = vpop.f32.mrb[0].mxu0
        %v1061 = vadd.f32 %v417, %v1060
        %v1062 = vpop.f32.mrb[0].mxu0
        %1063 = vmatprep.mubr.f32.mxu0 0.0
        %1064 = vmatmul.mubr.f32.gmra.mrb[0].mxu0 %v538
        %v1065 = vpop.f32.mrb[0].mxu0
        %v1066 = vadd.f32 %v417, %v1065
        %v1067 = vpop.f32.mrb[0].mxu0
        %1068 = vmatprep.mubr.f32.mxu0 0.0
        %1069 = vmatmul.mubr.f32.gmra.mrb[0].mxu0 %v541
        %v1070 = vpop.f32.mrb[0].mxu0
        %v1071 = vadd.f32 %v417, %v1070
        %v1072 = vpop.f32.mrb[0].mxu0
        %1073 = vmatprep.mubr.f32.mxu0 0.0
        %1074 = vmatmul.mubr.f32.gmra.mrb[0].mxu0 %v544
        %v1075 = vpop.f32.mrb[0].mxu0
        %v1076 = vadd.f32 %v417, %v1075
        %v1077 = vpop.f32.mrb[0].mxu0
        %1078 = vmatprep.mubr.f32.mxu0 0.0
        %1079 = vmatmul.mubr.f32.gmra.mrb[0].mxu0 %v547
        %v1080 = vpop.f32.mrb[0].mxu0
        %v1081 = vadd.f32 %v417, %v1080
        %v1082 = vpop.f32.mrb[0].mxu0
        %1083 = vmatprep.mubr.f32.mxu0 0.0
        %1084 = vmatmul.mubr.f32.gmra.mrb[0].mxu0 %v550
        %v1085 = vpop.f32.mrb[0].mxu0
        %v1086 = vadd.f32 %v417, %v1085
        %v1087 = vpop.f32.mrb[0].mxu0
        %1088 = vmatprep.mubr.f32.mxu0 0.0
        %1089 = vmatmul.mubr.f32.gmra.mrb[0].mxu0 %v553
        %v1090 = vpop.f32.mrb[0].mxu0
        %v1091 = vadd.f32 %v417, %v1090
        %v1092 = vpop.f32.mrb[0].mxu0
        %1093 = vmatprep.mubr.f32.mxu0 0.0
        %1094 = vmatmul.mubr.f32.gmra.mrb[0].mxu0 %v556
        %v1095 = vpop.f32.mrb[0].mxu0
        %v1096 = vadd.f32 %v417, %v1095
        %v1097 = vpop.f32.mrb[0].mxu0
        %1098 = vmatprep.mubr.f32.mxu0 0.0
        %1099 = vmatmul.mubr.f32.gmra.mrb[0].mxu0 %v559
        %v1100 = vpop.f32.mrb[0].mxu0
        %v1101 = vadd.f32 %v417, %v1100
        %v1102 = vpop.f32.mrb[0].mxu0
        %1103 = vmatprep.mubr.f32.mxu0 0.0
        %1104 = vmatmul.mubr.f32.gmra.mrb[0].mxu0 %v562
        %v1105 = vpop.f32.mrb[0].mxu0
        %v1106 = vadd.f32 %v417, %v1105
        %v1107 = vpop.f32.mrb[0].mxu0
        %1108 = vmatprep.mubr.f32.mxu0 0.0
        %1109 = vmatmul.mubr.f32.gmra.mrb[0].mxu0 %v565
        %v1110 = vpop.f32.mrb[0].mxu0
        %v1111 = vadd.f32 %v417, %v1110
        %v1112 = vpop.f32.mrb[0].mxu0
        %1113 = vmatprep.mubr.f32.mxu0 0.0
        %1114 = vmatmul.mubr.f32.gmra.mrb[0].mxu0 %v568
        %v1115 = vpop.f32.mrb[0].mxu0
        %v1116 = vadd.f32 %v417, %v1115
        %v1117 = vpop.f32.mrb[0].mxu0
        %1118 = vmatprep.mubr.f32.mxu0 0.0
        %1119 = vmatmul.mubr.f32.gmra.mrb[0].mxu0 %v571
        %v1120 = vpop.f32.mrb[0].mxu0
        %v1121 = vadd.f32 %v417, %v1120
        %v1122 = vpop.f32.mrb[0].mxu0
        %1123 = vmatprep.mubr.f32.mxu0 0.0
        %1124 = vmatmul.mubr.f32.gmra.mrb[0].mxu0 %v574
        %v1125 = vpop.f32.mrb[0].mxu0
        %v1126 = vadd.f32 %v417, %v1125
        %v1127 = vpop.f32.mrb[0].mxu0
        %1128 = vmatprep.mubr.f32.mxu0 0.0
        %1129 = vmatmul.mubr.f32.gmra.mrb[0].mxu0 %v577
        %v1130 = vpop.f32.mrb[0].mxu0
        %v1131 = vadd.f32 %v417, %v1130
        %v1132 = vpop.f32.mrb[0].mxu0
        %1133 = vmatprep.mubr.f32.mxu0 0.0
        %1134 = vmatmul.mubr.f32.gmra.mrb[0].mxu0 %v580
        %v1135 = vpop.f32.mrb[0].mxu0
        %v1136 = vadd.f32 %v417, %v1135
        %v1137 = vpop.f32.mrb[0].mxu0
        %1138 = vmatprep.mubr.f32.mxu0 0.0
        %1139 = vmatmul.mubr.f32.gmra.mrb[0].mxu0 %v583
        %v1140 = vpop.f32.mrb[0].mxu0
        %v1141 = vadd.f32 %v417, %v1140
        %v1142 = vpop.f32.mrb[0].mxu0
        %1143 = vmatprep.mubr.f32.mxu0 0.0
        %1144 = vmatmul.mubr.f32.gmra.mrb[0].mxu0 %v586
        %v1145 = vpop.f32.mrb[0].mxu0
        %v1146 = vadd.f32 %v417, %v1145
        %v1147 = vpop.f32.mrb[0].mxu0
        %1148 = vmatprep.mubr.f32.mxu0 0.0
        %1149 = vmatmul.mubr.f32.gmra.mrb[0].mxu0 %v589
        %v1150 = vpop.f32.mrb[0].mxu0
        %v1151 = vadd.f32 %v417, %v1150
        %v1152 = vpop.f32.mrb[0].mxu0
        %1153 = vmatprep.mubr.f32.mxu0 0.0
        %1154 = vmatmul.mubr.f32.gmra.mrb[0].mxu0 %v592
        %v1155 = vpop.f32.mrb[0].mxu0
        %v1156 = vadd.f32 %v417, %v1155
        %v1157 = vpop.f32.mrb[0].mxu0
        %1158 = vmatprep.mubr.f32.mxu0 0.0
        %1159 = vmatmul.mubr.f32.gmra.mrb[0].mxu0 %v595
        %v1160 = vpop.f32.mrb[0].mxu0
        %v1161 = vadd.f32 %v417, %v1160
        %v1162 = vpop.f32.mrb[0].mxu0
        %1163 = vmatprep.mubr.f32.mxu0 0.0
        %1164 = vmatmul.mubr.f32.gmra.mrb[0].mxu0 %v598
        %v1165 = vpop.f32.mrb[0].mxu0
        %v1166 = vadd.f32 %v417, %v1165
        %v1167 = vpop.f32.mrb[0].mxu0
        %1168 = vmatprep.mubr.f32.mxu0 0.0
        %1169 = vmatmul.mubr.f32.gmra.mrb[0].mxu0 %v601
        %v1170 = vpop.f32.mrb[0].mxu0
        %v1171 = vadd.f32 %v417, %v1170
        %v1172 = vpop.f32.mrb[0].mxu0
        %1173 = vmatprep.mubr.f32.mxu0 0.0
        %1174 = vmatmul.mubr.f32.gmra.mrb[0].mxu0 %v604
        %v1175 = vpop.f32.mrb[0].mxu0
        %v1176 = vadd.f32 %v417, %v1175
        %v1177 = vpop.f32.mrb[0].mxu0
        %1178 = vmatprep.mubr.f32.mxu0 0.0
        %1179 = vmatmul.mubr.f32.gmra.mrb[0].mxu0 %v607
        %v1180 = vpop.f32.mrb[0].mxu0
        %v1181 = vadd.f32 %v417, %v1180
        %v1182 = vpop.f32.mrb[0].mxu0
        %1183 = vmatprep.mubr.f32.mxu0 0.0
        %1184 = vmatmul.mubr.f32.gmra.mrb[0].mxu0 %v610
        %v1185 = vpop.f32.mrb[0].mxu0
        %v1186 = vadd.f32 %v417, %v1185
        %v1187 = vpop.f32.mrb[0].mxu0
        %1188 = vmatprep.mubr.f32.mxu0 0.0
        %1189 = vmatmul.mubr.f32.gmra.mrb[0].mxu0 %v613
        %v1190 = vpop.f32.mrb[0].mxu0
        %v1191 = vadd.f32 %v417, %v1190
        %v1192 = vpop.f32.mrb[0].mxu0
        %1193 = vmatprep.mubr.f32.mxu0 0.0
        %1194 = vmatmul.mubr.f32.gmra.mrb[0].mxu0 %v616
        %v1195 = vpop.f32.mrb[0].mxu0
        %v1196 = vadd.f32 %v417, %v1195
        %v1197 = vpop.f32.mrb[0].mxu0
        %1198 = vmatprep.mubr.f32.mxu0 0.0
        %1199 = vmatmul.mubr.f32.gmra.mrb[0].mxu0 %v619
        %v1200 = vpop.f32.mrb[0].mxu0
        %v1201 = vadd.f32 %v417, %v1200
        %v1202 = vpop.f32.mrb[0].mxu0
        %1203 = vmatprep.mubr.f32.mxu0 0.0
        %1204 = vmatmul.mubr.f32.gmra.mrb[0].mxu0 %v622
        %v1205 = vpop.f32.mrb[0].mxu0
        %v1206 = vadd.f32 %v417, %v1205
        %v1207 = vpop.f32.mrb[0].mxu0
        %1208 = vmatprep.mubr.f32.mxu0 0.0
        %1209 = vmatmul.mubr.f32.gmra.mrb[0].mxu0 %v625
        %v1210 = vpop.f32.mrb[0].mxu0
        %v1211 = vadd.f32 %v417, %v1210
        %v1212 = vpop.f32.mrb[0].mxu0
        %1213 = vmatprep.mubr.f32.mxu0 0.0
        %1214 = vmatmul.mubr.f32.gmra.mrb[0].mxu0 %v628
        %v1215 = vpop.f32.mrb[0].mxu0
        %v1216 = vadd.f32 %v417, %v1215
        %v1217 = vpop.f32.mrb[0].mxu0
        %1218 = vmatprep.mubr.f32.mxu0 0.0
        %1219 = vmatmul.mubr.f32.gmra.mrb[0].mxu0 %v631
        %v1220 = vpop.f32.mrb[0].mxu0
        %v1221 = vadd.f32 %v417, %v1220
        %v1222 = vpop.f32.mrb[0].mxu0
        %1223 = vmatprep.mubr.f32.mxu0 0.0
        %1224 = vmatmul.mubr.f32.gmra.mrb[0].mxu0 %v634
        %v1225 = vpop.f32.mrb[0].mxu0
        %v1226 = vadd.f32 %v417, %v1225
        %v1227 = vpop.f32.mrb[0].mxu0
        %1228 = vmatprep.mubr.f32.mxu0 0.0
        %1229 = vmatmul.mubr.f32.gmra.mrb[0].mxu0 %v637
        %v1230 = vpop.f32.mrb[0].mxu0
        %v1231 = vadd.f32 %v417, %v1230
        %v1232 = vpop.f32.mrb[0].mxu0
        %1233 = vmatprep.mubr.f32.mxu0 0.0
        %1234 = vmatmul.mubr.f32.gmra.mrb[0].mxu0 %v640
        %v1235 = vpop.f32.mrb[0].mxu0
        %v1236 = vadd.f32 %v417, %v1235
        %v1237 = vpop.f32.mrb[0].mxu0
        %1238 = vmatprep.mubr.f32.mxu0 0.0
        %1239 = vmatmul.mubr.f32.gmra.mrb[0].mxu0 %v643
        %v1240 = vpop.f32.mrb[0].mxu0
        %v1241 = vadd.f32 %v417, %v1240
        %v1242 = vpop.f32.mrb[0].mxu0
        %1243 = vmatprep.mubr.f32.mxu0 0.0
        %1244 = vmatmul.mubr.f32.gmra.mrb[0].mxu0 %v646
        %v1245 = vpop.f32.mrb[0].mxu0
        %v1246 = vadd.f32 %v417, %v1245
        %v1247 = vpop.f32.mrb[0].mxu0
        %1248 = vmatprep.mubr.f32.mxu0 0.0
        %1249 = vmatmul.mubr.f32.gmra.mrb[0].mxu0 %v649
        %v1250 = vpop.f32.mrb[0].mxu0
        %v1251 = vadd.f32 %v417, %v1250
        %v1252 = vpop.f32.mrb[0].mxu0
        %1253 = vmatprep.mubr.f32.mxu0 0.0
        %1254 = vmatmul.mubr.f32.gmra.mrb[0].mxu0 %v652
        %v1255 = vpop.f32.mrb[0].mxu0
        %v1256 = vadd.f32 %v417, %v1255
        %v1257 = vpop.f32.mrb[0].mxu0
        %1258 = vmatprep.mubr.f32.mxu0 0.0
        %1259 = vmatmul.mubr.f32.gmra.mrb[0].mxu0 %v655
        %v1260 = vpop.f32.mrb[0].mxu0
        %v1261 = vadd.f32 %v417, %v1260
        %v1262 = vpop.f32.mrb[0].mxu0
        %1263 = vmatprep.mubr.f32.mxu0 0.0
        %1264 = vmatmul.mubr.f32.gmra.mrb[0].mxu0 %v658
        %v1265 = vpop.f32.mrb[0].mxu0
        %v1266 = vadd.f32 %v417, %v1265
        %v1267 = vpop.f32.mrb[0].mxu0
        %1268 = vmatprep.mubr.f32.mxu0 0.0
        %1269 = vmatmul.mubr.f32.gmra.mrb[0].mxu0 %v661
        %v1270 = vpop.f32.mrb[0].mxu0
        %v1271 = vadd.f32 %v417, %v1270
        %v1272 = vpop.f32.mrb[0].mxu0
        %1273 = vmatprep.mubr.f32.mxu0 0.0
        %1274 = vmatmul.mubr.f32.gmra.mrb[0].mxu0 %v664
        %v1275 = vpop.f32.mrb[0].mxu0
        %v1276 = vadd.f32 %v417, %v1275
        %v1277 = vpop.f32.mrb[0].mxu0
        %1278 = vmatprep.mubr.f32.mxu0 0.0
        %1279 = vmatmul.mubr.f32.gmra.mrb[0].mxu0 %v667
        %v1280 = vpop.f32.mrb[0].mxu0
        %v1281 = vadd.f32 %v417, %v1280
        %v1282 = vpop.f32.mrb[0].mxu0
        %1283 = vmatprep.mubr.f32.mxu0 0.0
        %1284 = vmatmul.mubr.f32.gmra.mrb[0].mxu0 %v670
        %v1285 = vpop.f32.mrb[0].mxu0
        %v1286 = vadd.f32 %v417, %v1285
        %v1287 = vpop.f32.mrb[0].mxu0
        %1288 = vmatprep.mubr.f32.mxu0 0.0
        %1289 = vmatmul.mubr.f32.gmra.mrb[0].mxu0 %v673
        %v1290 = vpop.f32.mrb[0].mxu0
        %v1291 = vadd.f32 %v417, %v1290
        %v1292 = vpop.f32.mrb[0].mxu0
        %1293 = vmatprep.mubr.f32.mxu0 0.0
        %1294 = vmatmul.mubr.f32.gmra.mrb[0].mxu0 %v676
        %v1295 = vpop.f32.mrb[0].mxu0
        %v1296 = vadd.f32 %v417, %v1295
        %v1297 = vpop.f32.mrb[0].mxu0
        %1298 = vmatprep.mubr.f32.mxu0 0.0
        %1299 = vmatmul.mubr.f32.gmra.mrb[0].mxu0 %v679
        %v1300 = vpop.f32.mrb[0].mxu0
        %v1301 = vadd.f32 %v417, %v1300
        %v1302 = vpop.f32.mrb[0].mxu0
        %1303 = vmatprep.mubr.f32.mxu0 0.0
        %1304 = vmatmul.mubr.f32.gmra.mrb[0].mxu0 %v682
        %v1305 = vpop.f32.mrb[0].mxu0
        %v1306 = vadd.f32 %v417, %v1305
        %v1307 = vpop.f32.mrb[0].mxu0
        %1308 = vmatprep.mubr.f32.mxu0 0.0
        %1309 = vmatmul.mubr.f32.gmra.mrb[0].mxu0 %v685
        %v1310 = vpop.f32.mrb[0].mxu0
        %v1311 = vadd.f32 %v417, %v1310
        %v1312 = vpop.f32.mrb[0].mxu0
        %1313 = vmatprep.mubr.f32.mxu0 0.0
        %1314 = vmatmul.mubr.f32.gmra.mrb[0].mxu0 %v688
        %v1315 = vpop.f32.mrb[0].mxu0
        %v1316 = vadd.f32 %v417, %v1315
        %v1317 = vpop.f32.mrb[0].mxu0
        %1318 = vmatprep.mubr.f32.mxu0 0.0
        %1319 = vmatmul.mubr.f32.gmra.mrb[0].mxu0 %v691
        %v1320 = vpop.f32.mrb[0].mxu0
        %v1321 = vadd.f32 %v417, %v1320
        %v1322 = vpop.f32.mrb[0].mxu0
        %1323 = vmatprep.mubr.f32.mxu0 0.0
        %1324 = vmatmul.mubr.f32.gmra.mrb[0].mxu0 %v694
        %v1325 = vpop.f32.mrb[0].mxu0
        %v1326 = vadd.f32 %v417, %v1325
        %v1327 = vpop.f32.mrb[0].mxu0
        %1328 = vmatprep.mubr.f32.mxu0 0.0
        %1329 = vmatmul.mubr.f32.gmra.mrb[0].mxu0 %v697
        %v1330 = vpop.f32.mrb[0].mxu0
        %v1331 = vadd.f32 %v417, %v1330
        %v1332 = vpop.f32.mrb[0].mxu0
        %1333 = vmatprep.mubr.f32.mxu0 0.0
        %1334 = vmatmul.mubr.f32.gmra.mrb[0].mxu0 %v700
        %v1335 = vpop.f32.mrb[0].mxu0
        %v1336 = vadd.f32 %v417, %v1335
        %v1337 = vpop.f32.mrb[0].mxu0
        %1338 = vmatprep.mubr.f32.mxu0 0.0
        %1339 = vmatmul.mubr.f32.gmra.mrb[0].mxu0 %v703
        %v1340 = vpop.f32.mrb[0].mxu0
        %v1341 = vadd.f32 %v417, %v1340
        %v1342 = vpop.f32.mrb[0].mxu0
        %1343 = vmatprep.mubr.f32.mxu0 0.0
        %1344 = vmatmul.mubr.f32.gmra.mrb[0].mxu0 %v706
        %v1345 = vpop.f32.mrb[0].mxu0
        %v1346 = vadd.f32 %v417, %v1345
        %v1347 = vpop.f32.mrb[0].mxu0
        %1348 = vmatprep.mubr.f32.mxu0 0.0
        %1349 = vmatmul.mubr.f32.gmra.mrb[0].mxu0 %v709
        %v1350 = vpop.f32.mrb[0].mxu0
        %v1351 = vadd.f32 %v417, %v1350
        %v1352 = vpop.f32.mrb[0].mxu0
        %1353 = vmatprep.mubr.f32.mxu0 0.0
        %1354 = vmatmul.mubr.f32.gmra.mrb[0].mxu0 %v712
        %v1355 = vpop.f32.mrb[0].mxu0
        %v1356 = vadd.f32 %v417, %v1355
        %v1357 = vpop.f32.mrb[0].mxu0
        %1358 = vmatprep.mubr.f32.mxu0 0.0
        %1359 = vmatmul.mubr.f32.gmra.mrb[0].mxu0 %v715
        %v1360 = vpop.f32.mrb[0].mxu0
        %v1361 = vadd.f32 %v417, %v1360
        %v1362 = vpop.f32.mrb[0].mxu0
        %1363 = vmatprep.mubr.f32.mxu0 0.0
        %1364 = vmatmul.mubr.f32.gmra.mrb[0].mxu0 %v718
        %v1365 = vpop.f32.mrb[0].mxu0
        %v1366 = vadd.f32 %v417, %v1365
        %v1367 = vpop.f32.mrb[0].mxu0
        %1368 = vmatprep.mubr.f32.mxu0 0.0
        %1369 = vmatmul.mubr.f32.gmra.mrb[0].mxu0 %v721
        %v1370 = vpop.f32.mrb[0].mxu0
        %v1371 = vadd.f32 %v417, %v1370
        %v1372 = vpop.f32.mrb[0].mxu0
        %1373 = vmatprep.mubr.f32.mxu0 0.0
        %1374 = vmatmul.mubr.f32.gmra.mrb[0].mxu0 %v724
        %v1375 = vpop.f32.mrb[0].mxu0
        %v1376 = vadd.f32 %v417, %v1375
        %v1377 = vpop.f32.mrb[0].mxu0
        %1378 = vmatprep.mubr.f32.mxu0 0.0
        %1379 = vmatmul.mubr.f32.gmra.mrb[0].mxu0 %v727
        %v1380 = vpop.f32.mrb[0].mxu0
        %v1381 = vadd.f32 %v417, %v1380
        %v1382 = vpop.f32.mrb[0].mxu0
        %1383 = vmatprep.mubr.f32.mxu0 0.0
        %1384 = vmatmul.mubr.f32.gmra.mrb[0].mxu0 %v730
        %v1385 = vpop.f32.mrb[0].mxu0
        %v1386 = vadd.f32 %v417, %v1385
        %v1387 = vpop.f32.mrb[0].mxu0
        %1388 = vmatprep.mubr.f32.mxu0 0.0
        %1389 = vmatmul.mubr.f32.gmra.mrb[0].mxu0 %v733
        %v1390 = vpop.f32.mrb[0].mxu0
        %v1391 = vadd.f32 %v417, %v1390
        %v1392 = vpop.f32.mrb[0].mxu0
        %1393 = vmatprep.mubr.f32.mxu0 0.0
        %1394 = vmatmul.mubr.f32.gmra.mrb[0].mxu0 %v736
        %v1395 = vpop.f32.mrb[0].mxu0
        %v1396 = vadd.f32 %v417, %v1395
        %v1397 = vpop.f32.mrb[0].mxu0
        %1398 = vmatprep.mubr.f32.mxu0 0.0
        %1399 = vmatmul.mubr.f32.gmra.mrb[0].mxu0 %v739
        %v1400 = vpop.f32.mrb[0].mxu0
        %v1401 = vadd.f32 %v417, %v1400
        %v1402 = vpop.f32.mrb[0].mxu0
        %1403 = vmatprep.mubr.f32.mxu0 0.0
        %1404 = vmatmul.mubr.f32.gmra.mrb[0].mxu0 %v742
        %v1405 = vpop.f32.mrb[0].mxu0
        %v1406 = vadd.f32 %v417, %v1405
        %v1407 = vpop.f32.mrb[0].mxu0
        %1408 = vmatprep.mubr.f32.mxu0 0.0
        %1409 = vmatmul.mubr.f32.gmra.mrb[0].mxu0 %v745
        %v1410 = vpop.f32.mrb[0].mxu0
        %v1411 = vadd.f32 %v417, %v1410
        %v1412 = vpop.f32.mrb[0].mxu0
        %1413 = vmatprep.mubr.f32.mxu0 0.0
        %1414 = vmatmul.mubr.f32.gmra.mrb[0].mxu0 %v748
        %v1415 = vpop.f32.mrb[0].mxu0
        %v1416 = vadd.f32 %v417, %v1415
        %v1417 = vpop.f32.mrb[0].mxu0
        %1418 = vmatprep.mubr.f32.mxu0 0.0
        %1419 = vmatmul.mubr.f32.gmra.mrb[0].mxu0 %v751
        %v1420 = vpop.f32.mrb[0].mxu0
        %v1421 = vadd.f32 %v417, %v1420
        %v1422 = vpop.f32.mrb[0].mxu0
        %1423 = vmatprep.mubr.f32.mxu0 0.0
        %1424 = vmatmul.mubr.f32.gmra.mrb[0].mxu0 %v754
        %v1425 = vpop.f32.mrb[0].mxu0
        %v1426 = vadd.f32 %v417, %v1425
        %v1427 = vpop.f32.mrb[0].mxu0
        %1428 = vmatprep.mubr.f32.mxu0 0.0
        %1429 = vmatmul.mubr.f32.gmra.mrb[0].mxu0 %v757
        %v1430 = vpop.f32.mrb[0].mxu0
        %v1431 = vadd.f32 %v417, %v1430
        %v1432 = vpop.f32.mrb[0].mxu0
        %1433 = vmatprep.mubr.f32.mxu0 0.0
        %1434 = vmatmul.mubr.f32.gmra.mrb[0].mxu0 %v760
        %v1435 = vpop.f32.mrb[0].mxu0
        %v1436 = vadd.f32 %v417, %v1435
        %v1437 = vpop.f32.mrb[0].mxu0
        %1438 = vmatprep.mubr.f32.mxu0 0.0
        %1439 = vmatmul.mubr.f32.gmra.mrb[0].mxu0 %v763
        %v1440 = vpop.f32.mrb[0].mxu0
        %v1441 = vadd.f32 %v417, %v1440
        %v1442 = vpop.f32.mrb[0].mxu0
        %1443 = vmatprep.mubr.f32.mxu0 0.0
        %1444 = vmatmul.mubr.f32.gmra.mrb[0].mxu0 %v766
        %v1445 = vpop.f32.mrb[0].mxu0
        %v1446 = vadd.f32 %v417, %v1445
        %v1447 = vpop.f32.mrb[0].mxu0
        %1448 = vmatprep.mubr.f32.mxu0 0.0
        %1449 = vmatmul.mubr.f32.gmra.mrb[0].mxu0 %v769
        %v1450 = vpop.f32.mrb[0].mxu0
        %v1451 = vadd.f32 %v417, %v1450
        %v1452 = vpop.f32.mrb[0].mxu0
        %1453 = vmatprep.mubr.f32.mxu0 0.0
        %1454 = vmatmul.mubr.f32.gmra.mrb[0].mxu0 %v772
        %v1455 = vpop.f32.mrb[0].mxu0
        %v1456 = vadd.f32 %v417, %v1455
        %v1457 = vpop.f32.mrb[0].mxu0
        %1458 = vmatprep.mubr.f32.mxu0 0.0
        %1459 = vmatmul.mubr.f32.gmra.mrb[0].mxu0 %v775
        %v1460 = vpop.f32.mrb[0].mxu0
        %v1461 = vadd.f32 %v417, %v1460
        %v1462 = vpop.f32.mrb[0].mxu0
        %1463 = vmatprep.mubr.f32.mxu0 0.0
        %1464 = vmatmul.mubr.f32.gmra.mrb[0].mxu0 %v778
        %v1465 = vpop.f32.mrb[0].mxu0
        %v1466 = vadd.f32 %v417, %v1465
        %v1467 = vpop.f32.mrb[0].mxu0
        %1468 = vmatprep.mubr.f32.mxu0 0.0
        %1469 = vmatmul.mubr.f32.gmra.mrb[0].mxu0 %v781
        %v1470 = vpop.f32.mrb[0].mxu0
        %v1471 = vadd.f32 %v417, %v1470
        %v1472 = vpop.f32.mrb[0].mxu0
        %1473 = vmatprep.mubr.f32.mxu0 0.0
        %1474 = vmatmul.mubr.f32.gmra.mrb[0].mxu0 %v784
        %v1475 = vpop.f32.mrb[0].mxu0
        %v1476 = vadd.f32 %v417, %v1475
        %v1477 = vpop.f32.mrb[0].mxu0
        %1478 = vmatprep.mubr.f32.mxu0 0.0
        %1479 = vmatmul.mubr.f32.gmra.mrb[0].mxu0 %v787
        %v1480 = vpop.f32.mrb[0].mxu0
        %v1481 = vadd.f32 %v417, %v1480
        %v1482 = vpop.f32.mrb[0].mxu0
        %1483 = vmatprep.mubr.f32.mxu0 0.0
        %1484 = vmatmul.mubr.f32.gmra.mrb[0].mxu0 %v790
        %v1485 = vpop.f32.mrb[0].mxu0
        %v1486 = vadd.f32 %v417, %v1485
        %v1487 = vpop.f32.mrb[0].mxu0
        %1488 = vmatprep.mubr.f32.mxu0 0.0
        %1489 = vmatmul.mubr.f32.gmra.mrb[0].mxu0 %v793
        %v1490 = vpop.f32.mrb[0].mxu0
        %v1491 = vadd.f32 %v417, %v1490
        %v1492 = vpop.f32.mrb[0].mxu0
        %1493 = vmatprep.mubr.f32.mxu0 0.0
        %1494 = vmatmul.mubr.f32.gmra.mrb[0].mxu0 %v796
        %v1495 = vpop.f32.mrb[0].mxu0
        %v1496 = vadd.f32 %v417, %v1495
        %v1497 = vpop.f32.mrb[0].mxu0
        %1498 = vmatprep.mubr.f32.mxu0 0.0
        %1499 = vmatmul.mubr.f32.gmra.mrb[0].mxu0 %v799
        %v1500 = vpop.f32.mrb[0].mxu0
        %v1501 = vadd.f32 %v417, %v1500
        %v1502 = vpop.f32.mrb[0].mxu0
        %1503 = vmatprep.mubr.f32.mxu0 0.0
        %1504 = vmatmul.mubr.f32.gmra.mrb[0].mxu0 %v802
        %v1505 = vpop.f32.mrb[0].mxu0
        %v1506 = vadd.f32 %v417, %v1505
        %v1507 = vpop.f32.mrb[0].mxu0
        %1508 = vdwg.mxu0
        %v1509 = vmax.f32 %v871, 0.0
        %v1510 = vmax.f32 %v876, 0.0
        %v1511 = vmax.f32 %v881, 0.0
        %v1512 = vmax.f32 %v886, 0.0
        %v1513 = vmax.f32 %v891, 0.0
        %v1514 = vmax.f32 %v896, 0.0
        %v1515 = vmax.f32 %v901, 0.0
        %v1516 = vmax.f32 %v906, 0.0
        %v1517 = vmax.f32 %v911, 0.0
        %v1518 = vmax.f32 %v916, 0.0
        %v1519 = vmax.f32 %v921, 0.0
        %v1520 = vmax.f32 %v926, 0.0
        %v1521 = vmax.f32 %v931, 0.0
        %v1522 = vmax.f32 %v936, 0.0
        %v1523 = vmax.f32 %v941, 0.0
        %v1524 = vmax.f32 %v946, 0.0
        %v1525 = vmax.f32 %v951, 0.0
        %v1526 = vmax.f32 %v956, 0.0
        %v1527 = vmax.f32 %v961, 0.0
        %v1528 = vmax.f32 %v966, 0.0
        %v1529 = vmax.f32 %v971, 0.0
        %v1530 = vmax.f32 %v976, 0.0
        %v1531 = vmax.f32 %v981, 0.0
        %v1532 = vmax.f32 %v986, 0.0
        %v1533 = vmax.f32 %v991, 0.0
        %v1534 = vmax.f32 %v996, 0.0
        %v1535 = vmax.f32 %v1001, 0.0
        %v1536 = vmax.f32 %v1006, 0.0
        %v1537 = vmax.f32 %v1011, 0.0
        %v1538 = vmax.f32 %v1016, 0.0
        %v1539 = vmax.f32 %v1021, 0.0
        %v1540 = vmax.f32 %v1026, 0.0
        %v1541 = vmax.f32 %v1031, 0.0
        %v1542 = vmax.f32 %v1036, 0.0
        %v1543 = vmax.f32 %v1041, 0.0
        %v1544 = vmax.f32 %v1046, 0.0
        %v1545 = vmax.f32 %v1051, 0.0
        %v1546 = vmax.f32 %v1056, 0.0
        %v1547 = vmax.f32 %v1061, 0.0
        %v1548 = vmax.f32 %v1066, 0.0
        %v1549 = vmax.f32 %v1071, 0.0
        %v1550 = vmax.f32 %v1076, 0.0
        %v1551 = vmax.f32 %v1081, 0.0
        %v1552 = vmax.f32 %v1086, 0.0
        %v1553 = vmax.f32 %v1091, 0.0
        %v1554 = vmax.f32 %v1096, 0.0
        %v1555 = vmax.f32 %v1101, 0.0
        %v1556 = vmax.f32 %v1106, 0.0
        %v1557 = vmax.f32 %v1111, 0.0
        %v1558 = vmax.f32 %v1116, 0.0
        %v1559 = vmax.f32 %v1121, 0.0
        %v1560 = vmax.f32 %v1126, 0.0
        %v1561 = vmax.f32 %v1131, 0.0
        %v1562 = vmax.f32 %v1136, 0.0
        %v1563 = vmax.f32 %v1141, 0.0
        %v1564 = vmax.f32 %v1146, 0.0
        %v1565 = vmax.f32 %v1151, 0.0
        %v1566 = vmax.f32 %v1156, 0.0
        %v1567 = vmax.f32 %v1161, 0.0
        %v1568 = vmax.f32 %v1166, 0.0
        %v1569 = vmax.f32 %v1171, 0.0
        %v1570 = vmax.f32 %v1176, 0.0
        %v1571 = vmax.f32 %v1181, 0.0
        %v1572 = vmax.f32 %v1186, 0.0
        %v1573 = vmax.f32 %v1191, 0.0
        %v1574 = vmax.f32 %v1196, 0.0
        %v1575 = vmax.f32 %v1201, 0.0
        %v1576 = vmax.f32 %v1206, 0.0
        %v1577 = vmax.f32 %v1211, 0.0
        %v1578 = vmax.f32 %v1216, 0.0
        %v1579 = vmax.f32 %v1221, 0.0
        %v1580 = vmax.f32 %v1226, 0.0
        %v1581 = vmax.f32 %v1231, 0.0
        %v1582 = vmax.f32 %v1236, 0.0
        %v1583 = vmax.f32 %v1241, 0.0
        %v1584 = vmax.f32 %v1246, 0.0
        %v1585 = vmax.f32 %v1251, 0.0
        %v1586 = vmax.f32 %v1256, 0.0
        %v1587 = vmax.f32 %v1261, 0.0
        %v1588 = vmax.f32 %v1266, 0.0
        %v1589 = vmax.f32 %v1271, 0.0
        %v1590 = vmax.f32 %v1276, 0.0
        %v1591 = vmax.f32 %v1281, 0.0
        %v1592 = vmax.f32 %v1286, 0.0
        %v1593 = vmax.f32 %v1291, 0.0
        %v1594 = vmax.f32 %v1296, 0.0
        %v1595 = vmax.f32 %v1301, 0.0
        %v1596 = vmax.f32 %v1306, 0.0
        %v1597 = vmax.f32 %v1311, 0.0
        %v1598 = vmax.f32 %v1316, 0.0
        %v1599 = vmax.f32 %v1321, 0.0
        %v1600 = vmax.f32 %v1326, 0.0
        %v1601 = vmax.f32 %v1331, 0.0
        %v1602 = vmax.f32 %v1336, 0.0
        %v1603 = vmax.f32 %v1341, 0.0
        %v1604 = vmax.f32 %v1346, 0.0
        %v1605 = vmax.f32 %v1351, 0.0
        %v1606 = vmax.f32 %v1356, 0.0
        %v1607 = vmax.f32 %v1361, 0.0
        %v1608 = vmax.f32 %v1366, 0.0
        %v1609 = vmax.f32 %v1371, 0.0
        %v1610 = vmax.f32 %v1376, 0.0
        %v1611 = vmax.f32 %v1381, 0.0
        %v1612 = vmax.f32 %v1386, 0.0
        %v1613 = vmax.f32 %v1391, 0.0
        %v1614 = vmax.f32 %v1396, 0.0
        %v1615 = vmax.f32 %v1401, 0.0
        %v1616 = vmax.f32 %v1406, 0.0
        %v1617 = vmax.f32 %v1411, 0.0
        %v1618 = vmax.f32 %v1416, 0.0
        %v1619 = vmax.f32 %v1421, 0.0
        %v1620 = vmax.f32 %v1426, 0.0
        %v1621 = vmax.f32 %v1431, 0.0
        %v1622 = vmax.f32 %v1436, 0.0
        %v1623 = vmax.f32 %v1441, 0.0
        %v1624 = vmax.f32 %v1446, 0.0
        %v1625 = vmax.f32 %v1451, 0.0
        %v1626 = vmax.f32 %v1456, 0.0
        %v1627 = vmax.f32 %v1461, 0.0
        %v1628 = vmax.f32 %v1466, 0.0
        %v1629 = vmax.f32 %v1471, 0.0
        %v1630 = vmax.f32 %v1476, 0.0
        %v1631 = vmax.f32 %v1481, 0.0
        %v1632 = vmax.f32 %v1486, 0.0
        %v1633 = vmax.f32 %v1491, 0.0
        %v1634 = vmax.f32 %v1496, 0.0
        %v1635 = vmax.f32 %v1501, 0.0
        %v1636 = vmax.f32 %v1506, 0.0
        %v1637 = vld [vmem:[%s3] sm:$0xff]
        %v1638 = vld [vmem:[%s3 + $0x8] sm:$0xff]
        %v1639 = vld [vmem:[%s3 + $0x10] sm:$0xff]
        %v1640 = vld [vmem:[%s3 + $0x18] sm:$0xff]
        %v1641 = vld [vmem:[%s3 + $0x20] sm:$0xff]
        %v1642 = vld [vmem:[%s3 + $0x28] sm:$0xff]
        %v1643 = vld [vmem:[%s3 + $0x30] sm:$0xff]
        %v1644 = vld [vmem:[%s3 + $0x38] sm:$0xff]
        %v1645 = vld [vmem:[%s4] sm:$0x1]
        %v1647 = vlaneseq
        %v1648 = vshrl.u32 %v1647, 7
        %v1649 = vsub.s32 0, %v1648
        %v1650 = vrot.slane %v1645, %v1649
        %vm1652 = vcmask 523264
        %v1654 = vsel %vm1652, %v1509, 0
        %v1657 = vsel %vm1652, %v1510, 0
        %v1660 = vsel %vm1652, %v1511, 0
        %v1663 = vsel %vm1652, %v1512, 0
        %v1666 = vsel %vm1652, %v1513, 0
        %v1669 = vsel %vm1652, %v1514, 0
        %v1672 = vsel %vm1652, %v1515, 0
        %v1675 = vsel %vm1652, %v1516, 0
        %v1678 = vsel %vm1652, %v1517, 0
        %v1681 = vsel %vm1652, %v1518, 0
        %v1684 = vsel %vm1652, %v1519, 0
        %v1687 = vsel %vm1652, %v1520, 0
        %v1690 = vsel %vm1652, %v1521, 0
        %v1693 = vsel %vm1652, %v1522, 0
        %v1696 = vsel %vm1652, %v1523, 0
        %v1699 = vsel %vm1652, %v1524, 0
        %v1702 = vsel %vm1652, %v1525, 0
        %v1705 = vsel %vm1652, %v1526, 0
        %v1708 = vsel %vm1652, %v1527, 0
        %v1711 = vsel %vm1652, %v1528, 0
        %v1714 = vsel %vm1652, %v1529, 0
        %v1717 = vsel %vm1652, %v1530, 0
        %v1720 = vsel %vm1652, %v1531, 0
        %v1723 = vsel %vm1652, %v1532, 0
        %v1726 = vsel %vm1652, %v1533, 0
        %v1729 = vsel %vm1652, %v1534, 0
        %v1732 = vsel %vm1652, %v1535, 0
        %v1735 = vsel %vm1652, %v1536, 0
        %v1738 = vsel %vm1652, %v1537, 0
        %v1741 = vsel %vm1652, %v1538, 0
        %v1744 = vsel %vm1652, %v1539, 0
        %v1747 = vsel %vm1652, %v1540, 0
        %v1750 = vsel %vm1652, %v1541, 0
        %v1753 = vsel %vm1652, %v1542, 0
        %v1756 = vsel %vm1652, %v1543, 0
        %v1759 = vsel %vm1652, %v1544, 0
        %v1762 = vsel %vm1652, %v1545, 0
        %v1765 = vsel %vm1652, %v1546, 0
        %v1768 = vsel %vm1652, %v1547, 0
        %v1771 = vsel %vm1652, %v1548, 0
        %v1774 = vsel %vm1652, %v1549, 0
        %v1777 = vsel %vm1652, %v1550, 0
        %v1780 = vsel %vm1652, %v1551, 0
        %v1783 = vsel %vm1652, %v1552, 0
        %v1786 = vsel %vm1652, %v1553, 0
        %v1789 = vsel %vm1652, %v1554, 0
        %v1792 = vsel %vm1652, %v1555, 0
        %v1795 = vsel %vm1652, %v1556, 0
        %v1798 = vsel %vm1652, %v1557, 0
        %v1801 = vsel %vm1652, %v1558, 0
        %v1804 = vsel %vm1652, %v1559, 0
        %v1807 = vsel %vm1652, %v1560, 0
        %v1810 = vsel %vm1652, %v1561, 0
        %v1813 = vsel %vm1652, %v1562, 0
        %v1816 = vsel %vm1652, %v1563, 0
        %v1819 = vsel %vm1652, %v1564, 0
        %v1822 = vsel %vm1652, %v1565, 0
        %v1825 = vsel %vm1652, %v1566, 0
        %v1828 = vsel %vm1652, %v1567, 0
        %v1831 = vsel %vm1652, %v1568, 0
        %v1834 = vsel %vm1652, %v1569, 0
        %v1837 = vsel %vm1652, %v1570, 0
        %v1840 = vsel %vm1652, %v1571, 0
        %v1843 = vsel %vm1652, %v1572, 0
        %v1846 = vsel %vm1652, %v1573, 0
        %v1849 = vsel %vm1652, %v1574, 0
        %v1852 = vsel %vm1652, %v1575, 0
        %v1855 = vsel %vm1652, %v1576, 0
        %v1858 = vsel %vm1652, %v1577, 0
        %v1861 = vsel %vm1652, %v1578, 0
        %v1864 = vsel %vm1652, %v1579, 0
        %v1867 = vsel %vm1652, %v1580, 0
        %v1870 = vsel %vm1652, %v1581, 0
        %v1873 = vsel %vm1652, %v1582, 0
        %v1876 = vsel %vm1652, %v1583, 0
        %v1879 = vsel %vm1652, %v1584, 0
        %v1882 = vsel %vm1652, %v1585, 0
        %v1885 = vsel %vm1652, %v1586, 0
        %v1888 = vsel %vm1652, %v1587, 0
        %v1891 = vsel %vm1652, %v1588, 0
        %v1894 = vsel %vm1652, %v1589, 0
        %v1897 = vsel %vm1652, %v1590, 0
        %v1900 = vsel %vm1652, %v1591, 0
        %v1903 = vsel %vm1652, %v1592, 0
        %v1906 = vsel %vm1652, %v1593, 0
        %v1909 = vsel %vm1652, %v1594, 0
        %v1912 = vsel %vm1652, %v1595, 0
        %v1915 = vsel %vm1652, %v1596, 0
        %v1918 = vsel %vm1652, %v1597, 0
        %v1921 = vsel %vm1652, %v1598, 0
        %v1924 = vsel %vm1652, %v1599, 0
        %v1927 = vsel %vm1652, %v1600, 0
        %v1930 = vsel %vm1652, %v1601, 0
        %v1933 = vsel %vm1652, %v1602, 0
        %v1936 = vsel %vm1652, %v1603, 0
        %v1939 = vsel %vm1652, %v1604, 0
        %v1942 = vsel %vm1652, %v1605, 0
        %v1945 = vsel %vm1652, %v1606, 0
        %v1948 = vsel %vm1652, %v1607, 0
        %v1951 = vsel %vm1652, %v1608, 0
        %v1954 = vsel %vm1652, %v1609, 0
        %v1957 = vsel %vm1652, %v1610, 0
        %v1960 = vsel %vm1652, %v1611, 0
        %v1963 = vsel %vm1652, %v1612, 0
        %v1966 = vsel %vm1652, %v1613, 0
        %v1969 = vsel %vm1652, %v1614, 0
        %v1972 = vsel %vm1652, %v1615, 0
        %v1975 = vsel %vm1652, %v1616, 0
        %v1978 = vsel %vm1652, %v1617, 0
        %v1981 = vsel %vm1652, %v1618, 0
        %v1984 = vsel %vm1652, %v1619, 0
        %v1987 = vsel %vm1652, %v1620, 0
        %v1990 = vsel %vm1652, %v1621, 0
        %v1993 = vsel %vm1652, %v1622, 0
        %v1996 = vsel %vm1652, %v1623, 0
        %v1999 = vsel %vm1652, %v1624, 0
        %v2002 = vsel %vm1652, %v1625, 0
        %v2005 = vsel %vm1652, %v1626, 0
        %v2008 = vsel %vm1652, %v1627, 0
        %v2011 = vsel %vm1652, %v1628, 0
        %v2014 = vsel %vm1652, %v1629, 0
        %v2017 = vsel %vm1652, %v1630, 0
        %v2020 = vsel %vm1652, %v1631, 0
        %v2023 = vsel %vm1652, %v1632, 0
        %v2026 = vsel %vm1652, %v1633, 0
        %v2029 = vsel %vm1652, %v1634, 0
        %v2032 = vsel %vm1652, %v1635, 0
        %v2035 = vsel %vm1652, %v1636, 0
        %2037 = vmatprep.subr.mxu0 0.0
        %2038 = vmatpush1.msra.mxu0 %v1637
        %2039 = vmatprep.subr.mxu0 0.0
        %2040 = vmatpush1.msra.mxu0 %v1638
        %2041 = vmatprep.subr.mxu0 0.0
        %2042 = vmatpush1.msra.mxu0 %v1639
        %2043 = vmatprep.subr.mxu0 0.0
        %2044 = vmatpush1.msra.mxu0 %v1640
        %2045 = vmatprep.subr.mxu0 0.0
        %2046 = vmatpush1.msra.mxu0 %v1641
        %2047 = vmatprep.subr.mxu0 0.0
        %2048 = vmatpush1.msra.mxu0 %v1642
        %2049 = vmatprep.subr.mxu0 0.0
        %2050 = vmatpush1.msra.mxu0 %v1643
        %2051 = vmatprep.subr.mxu0 0.0
        %2052 = vmatpush1.msra.mxu0 %v1644
        %2053 = vmatprep.subr.mxu0 0.0
        %2054 = vmatpush1.msra.mxu0 0.0
        %2055 = vmatprep.subr.mxu0 0.0
        %2056 = vmatpush1.msra.mxu0 0.0
        %2057 = vmatprep.subr.mxu0 0.0
        %2058 = vmatpush1.msra.mxu0 0.0
        %2059 = vmatprep.subr.mxu0 0.0
        %2060 = vmatpush1.msra.mxu0 0.0
        %2061 = vmatprep.subr.mxu0 0.0
        %2062 = vmatpush1.msra.mxu0 0.0
        %2063 = vmatprep.subr.mxu0 0.0
        %2064 = vmatpush1.msra.mxu0 0.0
        %2065 = vmatprep.subr.mxu0 0.0
        %2066 = vmatpush1.msra.mxu0 0.0
        %2067 = vmatprep.subr.mxu0 0.0
        %2068 = vmatpush1.msra.mxu0 0.0
        %2069 = vmatprep.subr.mxu0 0.0
        %2070 = vmatpush1.msra.mxu0 0.0
        %2071 = vmatprep.subr.mxu0 0.0
        %2072 = vmatpush1.msra.mxu0 0.0
        %2073 = vmatprep.subr.mxu0 0.0
        %2074 = vmatpush1.msra.mxu0 0.0
        %2075 = vmatprep.subr.mxu0 0.0
        %2076 = vmatpush1.msra.mxu0 0.0
        %2077 = vmatprep.subr.mxu0 0.0
        %2078 = vmatpush1.msra.mxu0 0.0
        %2079 = vmatprep.subr.mxu0 0.0
        %2080 = vmatpush1.msra.mxu0 0.0
        %2081 = vmatprep.subr.mxu0 0.0
        %2082 = vmatpush1.msra.mxu0 0.0
        %2083 = vmatprep.subr.mxu0 0.0
        %2084 = vmatpush1.msra.mxu0 0.0
        %2085 = vmatprep.subr.mxu0 0.0
        %2086 = vmatpush1.msra.mxu0 0.0
        %2087 = vmatprep.subr.mxu0 0.0
        %2088 = vmatpush1.msra.mxu0 0.0
        %2089 = vmatprep.subr.mxu0 0.0
        %2090 = vmatpush1.msra.mxu0 0.0
        %2091 = vmatprep.subr.mxu0 0.0
        %2092 = vmatpush1.msra.mxu0 0.0
        %2093 = vmatprep.subr.mxu0 0.0
        %2094 = vmatpush1.msra.mxu0 0.0
        %2095 = vmatprep.subr.mxu0 0.0
        %2096 = vmatpush1.msra.mxu0 0.0
        %2097 = vmatprep.subr.mxu0 0.0
        %2098 = vmatpush1.msra.mxu0 0.0
        %2099 = vmatprep.subr.mxu0 0.0
        %2100 = vmatpush1.msra.mxu0 0.0
        %2101 = vmatprep.mubr.f32.mxu0 0.0
        %2102 = vmatmul.mubr.f32.gmra.mrb[0].mxu0 %v1654
        %v2103 = vpop.f32.mrb[0].mxu0
        %v2104 = vadd.f32 %v1650, %v2103
        %v2105 = vpop.f32.mrb[0].mxu0
        %2106 = vmatprep.mubr.f32.mxu0 0.0
        %2107 = vmatmul.mubr.f32.gmra.mrb[0].mxu0 %v1657
        %v2108 = vpop.f32.mrb[0].mxu0
        %v2109 = vadd.f32 %v1650, %v2108
        %v2110 = vpop.f32.mrb[0].mxu0
        %2111 = vmatprep.mubr.f32.mxu0 0.0
        %2112 = vmatmul.mubr.f32.gmra.mrb[0].mxu0 %v1660
        %v2113 = vpop.f32.mrb[0].mxu0
        %v2114 = vadd.f32 %v1650, %v2113
        %v2115 = vpop.f32.mrb[0].mxu0
        %2116 = vmatprep.mubr.f32.mxu0 0.0
        %2117 = vmatmul.mubr.f32.gmra.mrb[0].mxu0 %v1663
        %v2118 = vpop.f32.mrb[0].mxu0
        %v2119 = vadd.f32 %v1650, %v2118
        %v2120 = vpop.f32.mrb[0].mxu0
        %2121 = vmatprep.mubr.f32.mxu0 0.0
        %2122 = vmatmul.mubr.f32.gmra.mrb[0].mxu0 %v1666
        %v2123 = vpop.f32.mrb[0].mxu0
        %v2124 = vadd.f32 %v1650, %v2123
        %v2125 = vpop.f32.mrb[0].mxu0
        %2126 = vmatprep.mubr.f32.mxu0 0.0
        %2127 = vmatmul.mubr.f32.gmra.mrb[0].mxu0 %v1669
        %v2128 = vpop.f32.mrb[0].mxu0
        %v2129 = vadd.f32 %v1650, %v2128
        %v2130 = vpop.f32.mrb[0].mxu0
        %2131 = vmatprep.mubr.f32.mxu0 0.0
        %2132 = vmatmul.mubr.f32.gmra.mrb[0].mxu0 %v1672
        %v2133 = vpop.f32.mrb[0].mxu0
        %v2134 = vadd.f32 %v1650, %v2133
        %v2135 = vpop.f32.mrb[0].mxu0
        %2136 = vmatprep.mubr.f32.mxu0 0.0
        %2137 = vmatmul.mubr.f32.gmra.mrb[0].mxu0 %v1675
        %v2138 = vpop.f32.mrb[0].mxu0
        %v2139 = vadd.f32 %v1650, %v2138
        %v2140 = vpop.f32.mrb[0].mxu0
        %2141 = vmatprep.mubr.f32.mxu0 0.0
        %2142 = vmatmul.mubr.f32.gmra.mrb[0].mxu0 %v1678
        %v2143 = vpop.f32.mrb[0].mxu0
        %v2144 = vadd.f32 %v1650, %v2143
        %v2145 = vpop.f32.mrb[0].mxu0
        %2146 = vmatprep.mubr.f32.mxu0 0.0
        %2147 = vmatmul.mubr.f32.gmra.mrb[0].mxu0 %v1681
        %v2148 = vpop.f32.mrb[0].mxu0
        %v2149 = vadd.f32 %v1650, %v2148
        %v2150 = vpop.f32.mrb[0].mxu0
        %2151 = vmatprep.mubr.f32.mxu0 0.0
        %2152 = vmatmul.mubr.f32.gmra.mrb[0].mxu0 %v1684
        %v2153 = vpop.f32.mrb[0].mxu0
        %v2154 = vadd.f32 %v1650, %v2153
        %v2155 = vpop.f32.mrb[0].mxu0
        %2156 = vmatprep.mubr.f32.mxu0 0.0
        %2157 = vmatmul.mubr.f32.gmra.mrb[0].mxu0 %v1687
        %v2158 = vpop.f32.mrb[0].mxu0
        %v2159 = vadd.f32 %v1650, %v2158
        %v2160 = vpop.f32.mrb[0].mxu0
        %2161 = vmatprep.mubr.f32.mxu0 0.0
        %2162 = vmatmul.mubr.f32.gmra.mrb[0].mxu0 %v1690
        %v2163 = vpop.f32.mrb[0].mxu0
        %v2164 = vadd.f32 %v1650, %v2163
        %v2165 = vpop.f32.mrb[0].mxu0
        %2166 = vmatprep.mubr.f32.mxu0 0.0
        %2167 = vmatmul.mubr.f32.gmra.mrb[0].mxu0 %v1693
        %v2168 = vpop.f32.mrb[0].mxu0
        %v2169 = vadd.f32 %v1650, %v2168
        %v2170 = vpop.f32.mrb[0].mxu0
        %2171 = vmatprep.mubr.f32.mxu0 0.0
        %2172 = vmatmul.mubr.f32.gmra.mrb[0].mxu0 %v1696
        %v2173 = vpop.f32.mrb[0].mxu0
        %v2174 = vadd.f32 %v1650, %v2173
        %v2175 = vpop.f32.mrb[0].mxu0
        %2176 = vmatprep.mubr.f32.mxu0 0.0
        %2177 = vmatmul.mubr.f32.gmra.mrb[0].mxu0 %v1699
        %v2178 = vpop.f32.mrb[0].mxu0
        %v2179 = vadd.f32 %v1650, %v2178
        %v2180 = vpop.f32.mrb[0].mxu0
        %2181 = vmatprep.mubr.f32.mxu0 0.0
        %2182 = vmatmul.mubr.f32.gmra.mrb[0].mxu0 %v1702
        %v2183 = vpop.f32.mrb[0].mxu0
        %v2184 = vadd.f32 %v1650, %v2183
        %v2185 = vpop.f32.mrb[0].mxu0
        %2186 = vmatprep.mubr.f32.mxu0 0.0
        %2187 = vmatmul.mubr.f32.gmra.mrb[0].mxu0 %v1705
        %v2188 = vpop.f32.mrb[0].mxu0
        %v2189 = vadd.f32 %v1650, %v2188
        %v2190 = vpop.f32.mrb[0].mxu0
        %2191 = vmatprep.mubr.f32.mxu0 0.0
        %2192 = vmatmul.mubr.f32.gmra.mrb[0].mxu0 %v1708
        %v2193 = vpop.f32.mrb[0].mxu0
        %v2194 = vadd.f32 %v1650, %v2193
        %v2195 = vpop.f32.mrb[0].mxu0
        %2196 = vmatprep.mubr.f32.mxu0 0.0
        %2197 = vmatmul.mubr.f32.gmra.mrb[0].mxu0 %v1711
        %v2198 = vpop.f32.mrb[0].mxu0
        %v2199 = vadd.f32 %v1650, %v2198
        %v2200 = vpop.f32.mrb[0].mxu0
        %2201 = vmatprep.mubr.f32.mxu0 0.0
        %2202 = vmatmul.mubr.f32.gmra.mrb[0].mxu0 %v1714
        %v2203 = vpop.f32.mrb[0].mxu0
        %v2204 = vadd.f32 %v1650, %v2203
        %v2205 = vpop.f32.mrb[0].mxu0
        %2206 = vmatprep.mubr.f32.mxu0 0.0
        %2207 = vmatmul.mubr.f32.gmra.mrb[0].mxu0 %v1717
        %v2208 = vpop.f32.mrb[0].mxu0
        %v2209 = vadd.f32 %v1650, %v2208
        %v2210 = vpop.f32.mrb[0].mxu0
        %2211 = vmatprep.mubr.f32.mxu0 0.0
        %2212 = vmatmul.mubr.f32.gmra.mrb[0].mxu0 %v1720
        %v2213 = vpop.f32.mrb[0].mxu0
        %v2214 = vadd.f32 %v1650, %v2213
        %v2215 = vpop.f32.mrb[0].mxu0
        %2216 = vmatprep.mubr.f32.mxu0 0.0
        %2217 = vmatmul.mubr.f32.gmra.mrb[0].mxu0 %v1723
        %v2218 = vpop.f32.mrb[0].mxu0
        %v2219 = vadd.f32 %v1650, %v2218
        %v2220 = vpop.f32.mrb[0].mxu0
        %2221 = vmatprep.mubr.f32.mxu0 0.0
        %2222 = vmatmul.mubr.f32.gmra.mrb[0].mxu0 %v1726
        %v2223 = vpop.f32.mrb[0].mxu0
        %v2224 = vadd.f32 %v1650, %v2223
        %v2225 = vpop.f32.mrb[0].mxu0
        %2226 = vmatprep.mubr.f32.mxu0 0.0
        %2227 = vmatmul.mubr.f32.gmra.mrb[0].mxu0 %v1729
        %v2228 = vpop.f32.mrb[0].mxu0
        %v2229 = vadd.f32 %v1650, %v2228
        %v2230 = vpop.f32.mrb[0].mxu0
        %2231 = vmatprep.mubr.f32.mxu0 0.0
        %2232 = vmatmul.mubr.f32.gmra.mrb[0].mxu0 %v1732
        %v2233 = vpop.f32.mrb[0].mxu0
        %v2234 = vadd.f32 %v1650, %v2233
        %v2235 = vpop.f32.mrb[0].mxu0
        %2236 = vmatprep.mubr.f32.mxu0 0.0
        %2237 = vmatmul.mubr.f32.gmra.mrb[0].mxu0 %v1735
        %v2238 = vpop.f32.mrb[0].mxu0
        %v2239 = vadd.f32 %v1650, %v2238
        %v2240 = vpop.f32.mrb[0].mxu0
        %2241 = vmatprep.mubr.f32.mxu0 0.0
        %2242 = vmatmul.mubr.f32.gmra.mrb[0].mxu0 %v1738
        %v2243 = vpop.f32.mrb[0].mxu0
        %v2244 = vadd.f32 %v1650, %v2243
        %v2245 = vpop.f32.mrb[0].mxu0
        %2246 = vmatprep.mubr.f32.mxu0 0.0
        %2247 = vmatmul.mubr.f32.gmra.mrb[0].mxu0 %v1741
        %v2248 = vpop.f32.mrb[0].mxu0
        %v2249 = vadd.f32 %v1650, %v2248
        %v2250 = vpop.f32.mrb[0].mxu0
        %2251 = vmatprep.mubr.f32.mxu0 0.0
        %2252 = vmatmul.mubr.f32.gmra.mrb[0].mxu0 %v1744
        %v2253 = vpop.f32.mrb[0].mxu0
        %v2254 = vadd.f32 %v1650, %v2253
        %v2255 = vpop.f32.mrb[0].mxu0
        %2256 = vmatprep.mubr.f32.mxu0 0.0
        %2257 = vmatmul.mubr.f32.gmra.mrb[0].mxu0 %v1747
        %v2258 = vpop.f32.mrb[0].mxu0
        %v2259 = vadd.f32 %v1650, %v2258
        %v2260 = vpop.f32.mrb[0].mxu0
        %2261 = vmatprep.mubr.f32.mxu0 0.0
        %2262 = vmatmul.mubr.f32.gmra.mrb[0].mxu0 %v1750
        %v2263 = vpop.f32.mrb[0].mxu0
        %v2264 = vadd.f32 %v1650, %v2263
        %v2265 = vpop.f32.mrb[0].mxu0
        %2266 = vmatprep.mubr.f32.mxu0 0.0
        %2267 = vmatmul.mubr.f32.gmra.mrb[0].mxu0 %v1753
        %v2268 = vpop.f32.mrb[0].mxu0
        %v2269 = vadd.f32 %v1650, %v2268
        %v2270 = vpop.f32.mrb[0].mxu0
        %2271 = vmatprep.mubr.f32.mxu0 0.0
        %2272 = vmatmul.mubr.f32.gmra.mrb[0].mxu0 %v1756
        %v2273 = vpop.f32.mrb[0].mxu0
        %v2274 = vadd.f32 %v1650, %v2273
        %v2275 = vpop.f32.mrb[0].mxu0
        %2276 = vmatprep.mubr.f32.mxu0 0.0
        %2277 = vmatmul.mubr.f32.gmra.mrb[0].mxu0 %v1759
        %v2278 = vpop.f32.mrb[0].mxu0
        %v2279 = vadd.f32 %v1650, %v2278
        %v2280 = vpop.f32.mrb[0].mxu0
        %2281 = vmatprep.mubr.f32.mxu0 0.0
        %2282 = vmatmul.mubr.f32.gmra.mrb[0].mxu0 %v1762
        %v2283 = vpop.f32.mrb[0].mxu0
        %v2284 = vadd.f32 %v1650, %v2283
        %v2285 = vpop.f32.mrb[0].mxu0
        %2286 = vmatprep.mubr.f32.mxu0 0.0
        %2287 = vmatmul.mubr.f32.gmra.mrb[0].mxu0 %v1765
        %v2288 = vpop.f32.mrb[0].mxu0
        %v2289 = vadd.f32 %v1650, %v2288
        %v2290 = vpop.f32.mrb[0].mxu0
        %2291 = vmatprep.mubr.f32.mxu0 0.0
        %2292 = vmatmul.mubr.f32.gmra.mrb[0].mxu0 %v1768
        %v2293 = vpop.f32.mrb[0].mxu0
        %v2294 = vadd.f32 %v1650, %v2293
        %v2295 = vpop.f32.mrb[0].mxu0
        %2296 = vmatprep.mubr.f32.mxu0 0.0
        %2297 = vmatmul.mubr.f32.gmra.mrb[0].mxu0 %v1771
        %v2298 = vpop.f32.mrb[0].mxu0
        %v2299 = vadd.f32 %v1650, %v2298
        %v2300 = vpop.f32.mrb[0].mxu0
        %2301 = vmatprep.mubr.f32.mxu0 0.0
        %2302 = vmatmul.mubr.f32.gmra.mrb[0].mxu0 %v1774
        %v2303 = vpop.f32.mrb[0].mxu0
        %v2304 = vadd.f32 %v1650, %v2303
        %v2305 = vpop.f32.mrb[0].mxu0
        %2306 = vmatprep.mubr.f32.mxu0 0.0
        %2307 = vmatmul.mubr.f32.gmra.mrb[0].mxu0 %v1777
        %v2308 = vpop.f32.mrb[0].mxu0
        %v2309 = vadd.f32 %v1650, %v2308
        %v2310 = vpop.f32.mrb[0].mxu0
        %2311 = vmatprep.mubr.f32.mxu0 0.0
        %2312 = vmatmul.mubr.f32.gmra.mrb[0].mxu0 %v1780
        %v2313 = vpop.f32.mrb[0].mxu0
        %v2314 = vadd.f32 %v1650, %v2313
        %v2315 = vpop.f32.mrb[0].mxu0
        %2316 = vmatprep.mubr.f32.mxu0 0.0
        %2317 = vmatmul.mubr.f32.gmra.mrb[0].mxu0 %v1783
        %v2318 = vpop.f32.mrb[0].mxu0
        %v2319 = vadd.f32 %v1650, %v2318
        %v2320 = vpop.f32.mrb[0].mxu0
        %2321 = vmatprep.mubr.f32.mxu0 0.0
        %2322 = vmatmul.mubr.f32.gmra.mrb[0].mxu0 %v1786
        %v2323 = vpop.f32.mrb[0].mxu0
        %v2324 = vadd.f32 %v1650, %v2323
        %v2325 = vpop.f32.mrb[0].mxu0
        %2326 = vmatprep.mubr.f32.mxu0 0.0
        %2327 = vmatmul.mubr.f32.gmra.mrb[0].mxu0 %v1789
        %v2328 = vpop.f32.mrb[0].mxu0
        %v2329 = vadd.f32 %v1650, %v2328
        %v2330 = vpop.f32.mrb[0].mxu0
        %2331 = vmatprep.mubr.f32.mxu0 0.0
        %2332 = vmatmul.mubr.f32.gmra.mrb[0].mxu0 %v1792
        %v2333 = vpop.f32.mrb[0].mxu0
        %v2334 = vadd.f32 %v1650, %v2333
        %v2335 = vpop.f32.mrb[0].mxu0
        %2336 = vmatprep.mubr.f32.mxu0 0.0
        %2337 = vmatmul.mubr.f32.gmra.mrb[0].mxu0 %v1795
        %v2338 = vpop.f32.mrb[0].mxu0
        %v2339 = vadd.f32 %v1650, %v2338
        %v2340 = vpop.f32.mrb[0].mxu0
        %2341 = vmatprep.mubr.f32.mxu0 0.0
        %2342 = vmatmul.mubr.f32.gmra.mrb[0].mxu0 %v1798
        %v2343 = vpop.f32.mrb[0].mxu0
        %v2344 = vadd.f32 %v1650, %v2343
        %v2345 = vpop.f32.mrb[0].mxu0
        %2346 = vmatprep.mubr.f32.mxu0 0.0
        %2347 = vmatmul.mubr.f32.gmra.mrb[0].mxu0 %v1801
        %v2348 = vpop.f32.mrb[0].mxu0
        %v2349 = vadd.f32 %v1650, %v2348
        %v2350 = vpop.f32.mrb[0].mxu0
        %2351 = vmatprep.mubr.f32.mxu0 0.0
        %2352 = vmatmul.mubr.f32.gmra.mrb[0].mxu0 %v1804
        %v2353 = vpop.f32.mrb[0].mxu0
        %v2354 = vadd.f32 %v1650, %v2353
        %v2355 = vpop.f32.mrb[0].mxu0
        %2356 = vmatprep.mubr.f32.mxu0 0.0
        %2357 = vmatmul.mubr.f32.gmra.mrb[0].mxu0 %v1807
        %v2358 = vpop.f32.mrb[0].mxu0
        %v2359 = vadd.f32 %v1650, %v2358
        %v2360 = vpop.f32.mrb[0].mxu0
        %2361 = vmatprep.mubr.f32.mxu0 0.0
        %2362 = vmatmul.mubr.f32.gmra.mrb[0].mxu0 %v1810
        %v2363 = vpop.f32.mrb[0].mxu0
        %v2364 = vadd.f32 %v1650, %v2363
        %v2365 = vpop.f32.mrb[0].mxu0
        %2366 = vmatprep.mubr.f32.mxu0 0.0
        %2367 = vmatmul.mubr.f32.gmra.mrb[0].mxu0 %v1813
        %v2368 = vpop.f32.mrb[0].mxu0
        %v2369 = vadd.f32 %v1650, %v2368
        %v2370 = vpop.f32.mrb[0].mxu0
        %2371 = vmatprep.mubr.f32.mxu0 0.0
        %2372 = vmatmul.mubr.f32.gmra.mrb[0].mxu0 %v1816
        %v2373 = vpop.f32.mrb[0].mxu0
        %v2374 = vadd.f32 %v1650, %v2373
        %v2375 = vpop.f32.mrb[0].mxu0
        %2376 = vmatprep.mubr.f32.mxu0 0.0
        %2377 = vmatmul.mubr.f32.gmra.mrb[0].mxu0 %v1819
        %v2378 = vpop.f32.mrb[0].mxu0
        %v2379 = vadd.f32 %v1650, %v2378
        %v2380 = vpop.f32.mrb[0].mxu0
        %2381 = vmatprep.mubr.f32.mxu0 0.0
        %2382 = vmatmul.mubr.f32.gmra.mrb[0].mxu0 %v1822
        %v2383 = vpop.f32.mrb[0].mxu0
        %v2384 = vadd.f32 %v1650, %v2383
        %v2385 = vpop.f32.mrb[0].mxu0
        %2386 = vmatprep.mubr.f32.mxu0 0.0
        %2387 = vmatmul.mubr.f32.gmra.mrb[0].mxu0 %v1825
        %v2388 = vpop.f32.mrb[0].mxu0
        %v2389 = vadd.f32 %v1650, %v2388
        %v2390 = vpop.f32.mrb[0].mxu0
        %2391 = vmatprep.mubr.f32.mxu0 0.0
        %2392 = vmatmul.mubr.f32.gmra.mrb[0].mxu0 %v1828
        %v2393 = vpop.f32.mrb[0].mxu0
        %v2394 = vadd.f32 %v1650, %v2393
        %v2395 = vpop.f32.mrb[0].mxu0
        %2396 = vmatprep.mubr.f32.mxu0 0.0
        %2397 = vmatmul.mubr.f32.gmra.mrb[0].mxu0 %v1831
        %v2398 = vpop.f32.mrb[0].mxu0
        %v2399 = vadd.f32 %v1650, %v2398
        %v2400 = vpop.f32.mrb[0].mxu0
        %2401 = vmatprep.mubr.f32.mxu0 0.0
        %2402 = vmatmul.mubr.f32.gmra.mrb[0].mxu0 %v1834
        %v2403 = vpop.f32.mrb[0].mxu0
        %v2404 = vadd.f32 %v1650, %v2403
        %v2405 = vpop.f32.mrb[0].mxu0
        %2406 = vmatprep.mubr.f32.mxu0 0.0
        %2407 = vmatmul.mubr.f32.gmra.mrb[0].mxu0 %v1837
        %v2408 = vpop.f32.mrb[0].mxu0
        %v2409 = vadd.f32 %v1650, %v2408
        %v2410 = vpop.f32.mrb[0].mxu0
        %2411 = vmatprep.mubr.f32.mxu0 0.0
        %2412 = vmatmul.mubr.f32.gmra.mrb[0].mxu0 %v1840
        %v2413 = vpop.f32.mrb[0].mxu0
        %v2414 = vadd.f32 %v1650, %v2413
        %v2415 = vpop.f32.mrb[0].mxu0
        %2416 = vmatprep.mubr.f32.mxu0 0.0
        %2417 = vmatmul.mubr.f32.gmra.mrb[0].mxu0 %v1843
        %v2418 = vpop.f32.mrb[0].mxu0
        %v2419 = vadd.f32 %v1650, %v2418
        %v2420 = vpop.f32.mrb[0].mxu0
        %2421 = vmatprep.mubr.f32.mxu0 0.0
        %2422 = vmatmul.mubr.f32.gmra.mrb[0].mxu0 %v1846
        %v2423 = vpop.f32.mrb[0].mxu0
        %v2424 = vadd.f32 %v1650, %v2423
        %v2425 = vpop.f32.mrb[0].mxu0
        %2426 = vmatprep.mubr.f32.mxu0 0.0
        %2427 = vmatmul.mubr.f32.gmra.mrb[0].mxu0 %v1849
        %v2428 = vpop.f32.mrb[0].mxu0
        %v2429 = vadd.f32 %v1650, %v2428
        %v2430 = vpop.f32.mrb[0].mxu0
        %2431 = vmatprep.mubr.f32.mxu0 0.0
        %2432 = vmatmul.mubr.f32.gmra.mrb[0].mxu0 %v1852
        %v2433 = vpop.f32.mrb[0].mxu0
        %v2434 = vadd.f32 %v1650, %v2433
        %v2435 = vpop.f32.mrb[0].mxu0
        %2436 = vmatprep.mubr.f32.mxu0 0.0
        %2437 = vmatmul.mubr.f32.gmra.mrb[0].mxu0 %v1855
        %v2438 = vpop.f32.mrb[0].mxu0
        %v2439 = vadd.f32 %v1650, %v2438
        %v2440 = vpop.f32.mrb[0].mxu0
        %2441 = vmatprep.mubr.f32.mxu0 0.0
        %2442 = vmatmul.mubr.f32.gmra.mrb[0].mxu0 %v1858
        %v2443 = vpop.f32.mrb[0].mxu0
        %v2444 = vadd.f32 %v1650, %v2443
        %v2445 = vpop.f32.mrb[0].mxu0
        %2446 = vmatprep.mubr.f32.mxu0 0.0
        %2447 = vmatmul.mubr.f32.gmra.mrb[0].mxu0 %v1861
        %v2448 = vpop.f32.mrb[0].mxu0
        %v2449 = vadd.f32 %v1650, %v2448
        %v2450 = vpop.f32.mrb[0].mxu0
        %2451 = vmatprep.mubr.f32.mxu0 0.0
        %2452 = vmatmul.mubr.f32.gmra.mrb[0].mxu0 %v1864
        %v2453 = vpop.f32.mrb[0].mxu0
        %v2454 = vadd.f32 %v1650, %v2453
        %v2455 = vpop.f32.mrb[0].mxu0
        %2456 = vmatprep.mubr.f32.mxu0 0.0
        %2457 = vmatmul.mubr.f32.gmra.mrb[0].mxu0 %v1867
        %v2458 = vpop.f32.mrb[0].mxu0
        %v2459 = vadd.f32 %v1650, %v2458
        %v2460 = vpop.f32.mrb[0].mxu0
        %2461 = vmatprep.mubr.f32.mxu0 0.0
        %2462 = vmatmul.mubr.f32.gmra.mrb[0].mxu0 %v1870
        %v2463 = vpop.f32.mrb[0].mxu0
        %v2464 = vadd.f32 %v1650, %v2463
        %v2465 = vpop.f32.mrb[0].mxu0
        %2466 = vmatprep.mubr.f32.mxu0 0.0
        %2467 = vmatmul.mubr.f32.gmra.mrb[0].mxu0 %v1873
        %v2468 = vpop.f32.mrb[0].mxu0
        %v2469 = vadd.f32 %v1650, %v2468
        %v2470 = vpop.f32.mrb[0].mxu0
        %2471 = vmatprep.mubr.f32.mxu0 0.0
        %2472 = vmatmul.mubr.f32.gmra.mrb[0].mxu0 %v1876
        %v2473 = vpop.f32.mrb[0].mxu0
        %v2474 = vadd.f32 %v1650, %v2473
        %v2475 = vpop.f32.mrb[0].mxu0
        %2476 = vmatprep.mubr.f32.mxu0 0.0
        %2477 = vmatmul.mubr.f32.gmra.mrb[0].mxu0 %v1879
        %v2478 = vpop.f32.mrb[0].mxu0
        %v2479 = vadd.f32 %v1650, %v2478
        %v2480 = vpop.f32.mrb[0].mxu0
        %2481 = vmatprep.mubr.f32.mxu0 0.0
        %2482 = vmatmul.mubr.f32.gmra.mrb[0].mxu0 %v1882
        %v2483 = vpop.f32.mrb[0].mxu0
        %v2484 = vadd.f32 %v1650, %v2483
        %v2485 = vpop.f32.mrb[0].mxu0
        %2486 = vmatprep.mubr.f32.mxu0 0.0
        %2487 = vmatmul.mubr.f32.gmra.mrb[0].mxu0 %v1885
        %v2488 = vpop.f32.mrb[0].mxu0
        %v2489 = vadd.f32 %v1650, %v2488
        %v2490 = vpop.f32.mrb[0].mxu0
        %2491 = vmatprep.mubr.f32.mxu0 0.0
        %2492 = vmatmul.mubr.f32.gmra.mrb[0].mxu0 %v1888
        %v2493 = vpop.f32.mrb[0].mxu0
        %v2494 = vadd.f32 %v1650, %v2493
        %v2495 = vpop.f32.mrb[0].mxu0
        %2496 = vmatprep.mubr.f32.mxu0 0.0
        %2497 = vmatmul.mubr.f32.gmra.mrb[0].mxu0 %v1891
        %v2498 = vpop.f32.mrb[0].mxu0
        %v2499 = vadd.f32 %v1650, %v2498
        %v2500 = vpop.f32.mrb[0].mxu0
        %2501 = vmatprep.mubr.f32.mxu0 0.0
        %2502 = vmatmul.mubr.f32.gmra.mrb[0].mxu0 %v1894
        %v2503 = vpop.f32.mrb[0].mxu0
        %v2504 = vadd.f32 %v1650, %v2503
        %v2505 = vpop.f32.mrb[0].mxu0
        %2506 = vmatprep.mubr.f32.mxu0 0.0
        %2507 = vmatmul.mubr.f32.gmra.mrb[0].mxu0 %v1897
        %v2508 = vpop.f32.mrb[0].mxu0
        %v2509 = vadd.f32 %v1650, %v2508
        %v2510 = vpop.f32.mrb[0].mxu0
        %2511 = vmatprep.mubr.f32.mxu0 0.0
        %2512 = vmatmul.mubr.f32.gmra.mrb[0].mxu0 %v1900
        %v2513 = vpop.f32.mrb[0].mxu0
        %v2514 = vadd.f32 %v1650, %v2513
        %v2515 = vpop.f32.mrb[0].mxu0
        %2516 = vmatprep.mubr.f32.mxu0 0.0
        %2517 = vmatmul.mubr.f32.gmra.mrb[0].mxu0 %v1903
        %v2518 = vpop.f32.mrb[0].mxu0
        %v2519 = vadd.f32 %v1650, %v2518
        %v2520 = vpop.f32.mrb[0].mxu0
        %2521 = vmatprep.mubr.f32.mxu0 0.0
        %2522 = vmatmul.mubr.f32.gmra.mrb[0].mxu0 %v1906
        %v2523 = vpop.f32.mrb[0].mxu0
        %v2524 = vadd.f32 %v1650, %v2523
        %v2525 = vpop.f32.mrb[0].mxu0
        %2526 = vmatprep.mubr.f32.mxu0 0.0
        %2527 = vmatmul.mubr.f32.gmra.mrb[0].mxu0 %v1909
        %v2528 = vpop.f32.mrb[0].mxu0
        %v2529 = vadd.f32 %v1650, %v2528
        %v2530 = vpop.f32.mrb[0].mxu0
        %2531 = vmatprep.mubr.f32.mxu0 0.0
        %2532 = vmatmul.mubr.f32.gmra.mrb[0].mxu0 %v1912
        %v2533 = vpop.f32.mrb[0].mxu0
        %v2534 = vadd.f32 %v1650, %v2533
        %v2535 = vpop.f32.mrb[0].mxu0
        %2536 = vmatprep.mubr.f32.mxu0 0.0
        %2537 = vmatmul.mubr.f32.gmra.mrb[0].mxu0 %v1915
        %v2538 = vpop.f32.mrb[0].mxu0
        %v2539 = vadd.f32 %v1650, %v2538
        %v2540 = vpop.f32.mrb[0].mxu0
        %2541 = vmatprep.mubr.f32.mxu0 0.0
        %2542 = vmatmul.mubr.f32.gmra.mrb[0].mxu0 %v1918
        %v2543 = vpop.f32.mrb[0].mxu0
        %v2544 = vadd.f32 %v1650, %v2543
        %v2545 = vpop.f32.mrb[0].mxu0
        %2546 = vmatprep.mubr.f32.mxu0 0.0
        %2547 = vmatmul.mubr.f32.gmra.mrb[0].mxu0 %v1921
        %v2548 = vpop.f32.mrb[0].mxu0
        %v2549 = vadd.f32 %v1650, %v2548
        %v2550 = vpop.f32.mrb[0].mxu0
        %2551 = vmatprep.mubr.f32.mxu0 0.0
        %2552 = vmatmul.mubr.f32.gmra.mrb[0].mxu0 %v1924
        %v2553 = vpop.f32.mrb[0].mxu0
        %v2554 = vadd.f32 %v1650, %v2553
        %v2555 = vpop.f32.mrb[0].mxu0
        %2556 = vmatprep.mubr.f32.mxu0 0.0
        %2557 = vmatmul.mubr.f32.gmra.mrb[0].mxu0 %v1927
        %v2558 = vpop.f32.mrb[0].mxu0
        %v2559 = vadd.f32 %v1650, %v2558
        %v2560 = vpop.f32.mrb[0].mxu0
        %2561 = vmatprep.mubr.f32.mxu0 0.0
        %2562 = vmatmul.mubr.f32.gmra.mrb[0].mxu0 %v1930
        %v2563 = vpop.f32.mrb[0].mxu0
        %v2564 = vadd.f32 %v1650, %v2563
        %v2565 = vpop.f32.mrb[0].mxu0
        %2566 = vmatprep.mubr.f32.mxu0 0.0
        %2567 = vmatmul.mubr.f32.gmra.mrb[0].mxu0 %v1933
        %v2568 = vpop.f32.mrb[0].mxu0
        %v2569 = vadd.f32 %v1650, %v2568
        %v2570 = vpop.f32.mrb[0].mxu0
        %2571 = vmatprep.mubr.f32.mxu0 0.0
        %2572 = vmatmul.mubr.f32.gmra.mrb[0].mxu0 %v1936
        %v2573 = vpop.f32.mrb[0].mxu0
        %v2574 = vadd.f32 %v1650, %v2573
        %v2575 = vpop.f32.mrb[0].mxu0
        %2576 = vmatprep.mubr.f32.mxu0 0.0
        %2577 = vmatmul.mubr.f32.gmra.mrb[0].mxu0 %v1939
        %v2578 = vpop.f32.mrb[0].mxu0
        %v2579 = vadd.f32 %v1650, %v2578
        %v2580 = vpop.f32.mrb[0].mxu0
        %2581 = vmatprep.mubr.f32.mxu0 0.0
        %2582 = vmatmul.mubr.f32.gmra.mrb[0].mxu0 %v1942
        %v2583 = vpop.f32.mrb[0].mxu0
        %v2584 = vadd.f32 %v1650, %v2583
        %v2585 = vpop.f32.mrb[0].mxu0
        %2586 = vmatprep.mubr.f32.mxu0 0.0
        %2587 = vmatmul.mubr.f32.gmra.mrb[0].mxu0 %v1945
        %v2588 = vpop.f32.mrb[0].mxu0
        %v2589 = vadd.f32 %v1650, %v2588
        %v2590 = vpop.f32.mrb[0].mxu0
        %2591 = vmatprep.mubr.f32.mxu0 0.0
        %2592 = vmatmul.mubr.f32.gmra.mrb[0].mxu0 %v1948
        %v2593 = vpop.f32.mrb[0].mxu0
        %v2594 = vadd.f32 %v1650, %v2593
        %v2595 = vpop.f32.mrb[0].mxu0
        %2596 = vmatprep.mubr.f32.mxu0 0.0
        %2597 = vmatmul.mubr.f32.gmra.mrb[0].mxu0 %v1951
        %v2598 = vpop.f32.mrb[0].mxu0
        %v2599 = vadd.f32 %v1650, %v2598
        %v2600 = vpop.f32.mrb[0].mxu0
        %2601 = vmatprep.mubr.f32.mxu0 0.0
        %2602 = vmatmul.mubr.f32.gmra.mrb[0].mxu0 %v1954
        %v2603 = vpop.f32.mrb[0].mxu0
        %v2604 = vadd.f32 %v1650, %v2603
        %v2605 = vpop.f32.mrb[0].mxu0
        %2606 = vmatprep.mubr.f32.mxu0 0.0
        %2607 = vmatmul.mubr.f32.gmra.mrb[0].mxu0 %v1957
        %v2608 = vpop.f32.mrb[0].mxu0
        %v2609 = vadd.f32 %v1650, %v2608
        %v2610 = vpop.f32.mrb[0].mxu0
        %2611 = vmatprep.mubr.f32.mxu0 0.0
        %2612 = vmatmul.mubr.f32.gmra.mrb[0].mxu0 %v1960
        %v2613 = vpop.f32.mrb[0].mxu0
        %v2614 = vadd.f32 %v1650, %v2613
        %v2615 = vpop.f32.mrb[0].mxu0
        %2616 = vmatprep.mubr.f32.mxu0 0.0
        %2617 = vmatmul.mubr.f32.gmra.mrb[0].mxu0 %v1963
        %v2618 = vpop.f32.mrb[0].mxu0
        %v2619 = vadd.f32 %v1650, %v2618
        %v2620 = vpop.f32.mrb[0].mxu0
        %2621 = vmatprep.mubr.f32.mxu0 0.0
        %2622 = vmatmul.mubr.f32.gmra.mrb[0].mxu0 %v1966
        %v2623 = vpop.f32.mrb[0].mxu0
        %v2624 = vadd.f32 %v1650, %v2623
        %v2625 = vpop.f32.mrb[0].mxu0
        %2626 = vmatprep.mubr.f32.mxu0 0.0
        %2627 = vmatmul.mubr.f32.gmra.mrb[0].mxu0 %v1969
        %v2628 = vpop.f32.mrb[0].mxu0
        %v2629 = vadd.f32 %v1650, %v2628
        %v2630 = vpop.f32.mrb[0].mxu0
        %2631 = vmatprep.mubr.f32.mxu0 0.0
        %2632 = vmatmul.mubr.f32.gmra.mrb[0].mxu0 %v1972
        %v2633 = vpop.f32.mrb[0].mxu0
        %v2634 = vadd.f32 %v1650, %v2633
        %v2635 = vpop.f32.mrb[0].mxu0
        %2636 = vmatprep.mubr.f32.mxu0 0.0
        %2637 = vmatmul.mubr.f32.gmra.mrb[0].mxu0 %v1975
        %v2638 = vpop.f32.mrb[0].mxu0
        %v2639 = vadd.f32 %v1650, %v2638
        %v2640 = vpop.f32.mrb[0].mxu0
        %2641 = vmatprep.mubr.f32.mxu0 0.0
        %2642 = vmatmul.mubr.f32.gmra.mrb[0].mxu0 %v1978
        %v2643 = vpop.f32.mrb[0].mxu0
        %v2644 = vadd.f32 %v1650, %v2643
        %v2645 = vpop.f32.mrb[0].mxu0
        %2646 = vmatprep.mubr.f32.mxu0 0.0
        %2647 = vmatmul.mubr.f32.gmra.mrb[0].mxu0 %v1981
        %v2648 = vpop.f32.mrb[0].mxu0
        %v2649 = vadd.f32 %v1650, %v2648
        %v2650 = vpop.f32.mrb[0].mxu0
        %2651 = vmatprep.mubr.f32.mxu0 0.0
        %2652 = vmatmul.mubr.f32.gmra.mrb[0].mxu0 %v1984
        %v2653 = vpop.f32.mrb[0].mxu0
        %v2654 = vadd.f32 %v1650, %v2653
        %v2655 = vpop.f32.mrb[0].mxu0
        %2656 = vmatprep.mubr.f32.mxu0 0.0
        %2657 = vmatmul.mubr.f32.gmra.mrb[0].mxu0 %v1987
        %v2658 = vpop.f32.mrb[0].mxu0
        %v2659 = vadd.f32 %v1650, %v2658
        %v2660 = vpop.f32.mrb[0].mxu0
        %2661 = vmatprep.mubr.f32.mxu0 0.0
        %2662 = vmatmul.mubr.f32.gmra.mrb[0].mxu0 %v1990
        %v2663 = vpop.f32.mrb[0].mxu0
        %v2664 = vadd.f32 %v1650, %v2663
        %v2665 = vpop.f32.mrb[0].mxu0
        %2666 = vmatprep.mubr.f32.mxu0 0.0
        %2667 = vmatmul.mubr.f32.gmra.mrb[0].mxu0 %v1993
        %v2668 = vpop.f32.mrb[0].mxu0
        %v2669 = vadd.f32 %v1650, %v2668
        %v2670 = vpop.f32.mrb[0].mxu0
        %2671 = vmatprep.mubr.f32.mxu0 0.0
        %2672 = vmatmul.mubr.f32.gmra.mrb[0].mxu0 %v1996
        %v2673 = vpop.f32.mrb[0].mxu0
        %v2674 = vadd.f32 %v1650, %v2673
        %v2675 = vpop.f32.mrb[0].mxu0
        %2676 = vmatprep.mubr.f32.mxu0 0.0
        %2677 = vmatmul.mubr.f32.gmra.mrb[0].mxu0 %v1999
        %v2678 = vpop.f32.mrb[0].mxu0
        %v2679 = vadd.f32 %v1650, %v2678
        %v2680 = vpop.f32.mrb[0].mxu0
        %2681 = vmatprep.mubr.f32.mxu0 0.0
        %2682 = vmatmul.mubr.f32.gmra.mrb[0].mxu0 %v2002
        %v2683 = vpop.f32.mrb[0].mxu0
        %v2684 = vadd.f32 %v1650, %v2683
        %v2685 = vpop.f32.mrb[0].mxu0
        %2686 = vmatprep.mubr.f32.mxu0 0.0
        %2687 = vmatmul.mubr.f32.gmra.mrb[0].mxu0 %v2005
        %v2688 = vpop.f32.mrb[0].mxu0
        %v2689 = vadd.f32 %v1650, %v2688
        %v2690 = vpop.f32.mrb[0].mxu0
        %2691 = vmatprep.mubr.f32.mxu0 0.0
        %2692 = vmatmul.mubr.f32.gmra.mrb[0].mxu0 %v2008
        %v2693 = vpop.f32.mrb[0].mxu0
        %v2694 = vadd.f32 %v1650, %v2693
        %v2695 = vpop.f32.mrb[0].mxu0
        %2696 = vmatprep.mubr.f32.mxu0 0.0
        %2697 = vmatmul.mubr.f32.gmra.mrb[0].mxu0 %v2011
        %v2698 = vpop.f32.mrb[0].mxu0
        %v2699 = vadd.f32 %v1650, %v2698
        %v2700 = vpop.f32.mrb[0].mxu0
        %2701 = vmatprep.mubr.f32.mxu0 0.0
        %2702 = vmatmul.mubr.f32.gmra.mrb[0].mxu0 %v2014
        %v2703 = vpop.f32.mrb[0].mxu0
        %v2704 = vadd.f32 %v1650, %v2703
        %v2705 = vpop.f32.mrb[0].mxu0
        %2706 = vmatprep.mubr.f32.mxu0 0.0
        %2707 = vmatmul.mubr.f32.gmra.mrb[0].mxu0 %v2017
        %v2708 = vpop.f32.mrb[0].mxu0
        %v2709 = vadd.f32 %v1650, %v2708
        %v2710 = vpop.f32.mrb[0].mxu0
        %2711 = vmatprep.mubr.f32.mxu0 0.0
        %2712 = vmatmul.mubr.f32.gmra.mrb[0].mxu0 %v2020
        %v2713 = vpop.f32.mrb[0].mxu0
        %v2714 = vadd.f32 %v1650, %v2713
        %v2715 = vpop.f32.mrb[0].mxu0
        %2716 = vmatprep.mubr.f32.mxu0 0.0
        %2717 = vmatmul.mubr.f32.gmra.mrb[0].mxu0 %v2023
        %v2718 = vpop.f32.mrb[0].mxu0
        %v2719 = vadd.f32 %v1650, %v2718
        %v2720 = vpop.f32.mrb[0].mxu0
        %2721 = vmatprep.mubr.f32.mxu0 0.0
        %2722 = vmatmul.mubr.f32.gmra.mrb[0].mxu0 %v2026
        %v2723 = vpop.f32.mrb[0].mxu0
        %v2724 = vadd.f32 %v1650, %v2723
        %v2725 = vpop.f32.mrb[0].mxu0
        %2726 = vmatprep.mubr.f32.mxu0 0.0
        %2727 = vmatmul.mubr.f32.gmra.mrb[0].mxu0 %v2029
        %v2728 = vpop.f32.mrb[0].mxu0
        %v2729 = vadd.f32 %v1650, %v2728
        %v2730 = vpop.f32.mrb[0].mxu0
        %2731 = vmatprep.mubr.f32.mxu0 0.0
        %2732 = vmatmul.mubr.f32.gmra.mrb[0].mxu0 %v2032
        %v2733 = vpop.f32.mrb[0].mxu0
        %v2734 = vadd.f32 %v1650, %v2733
        %v2735 = vpop.f32.mrb[0].mxu0
        %2736 = vmatprep.mubr.f32.mxu0 0.0
        %2737 = vmatmul.mubr.f32.gmra.mrb[0].mxu0 %v2035
        %v2738 = vpop.f32.mrb[0].mxu0
        %v2739 = vadd.f32 %v1650, %v2738
        %v2740 = vpop.f32.mrb[0].mxu0
        %2741 = vdwg.mxu0
        %v2742 = vmax.f32 %v2104, 0.0
        %v2743 = vmax.f32 %v2109, 0.0
        %v2744 = vmax.f32 %v2114, 0.0
        %v2745 = vmax.f32 %v2119, 0.0
        %v2746 = vmax.f32 %v2124, 0.0
        %v2747 = vmax.f32 %v2129, 0.0
        %v2748 = vmax.f32 %v2134, 0.0
        %v2749 = vmax.f32 %v2139, 0.0
        %v2750 = vmax.f32 %v2144, 0.0
        %v2751 = vmax.f32 %v2149, 0.0
        %v2752 = vmax.f32 %v2154, 0.0
        %v2753 = vmax.f32 %v2159, 0.0
        %v2754 = vmax.f32 %v2164, 0.0
        %v2755 = vmax.f32 %v2169, 0.0
        %v2756 = vmax.f32 %v2174, 0.0
        %v2757 = vmax.f32 %v2179, 0.0
        %v2758 = vmax.f32 %v2184, 0.0
        %v2759 = vmax.f32 %v2189, 0.0
        %v2760 = vmax.f32 %v2194, 0.0
        %v2761 = vmax.f32 %v2199, 0.0
        %v2762 = vmax.f32 %v2204, 0.0
        %v2763 = vmax.f32 %v2209, 0.0
        %v2764 = vmax.f32 %v2214, 0.0
        %v2765 = vmax.f32 %v2219, 0.0
        %v2766 = vmax.f32 %v2224, 0.0
        %v2767 = vmax.f32 %v2229, 0.0
        %v2768 = vmax.f32 %v2234, 0.0
        %v2769 = vmax.f32 %v2239, 0.0
        %v2770 = vmax.f32 %v2244, 0.0
        %v2771 = vmax.f32 %v2249, 0.0
        %v2772 = vmax.f32 %v2254, 0.0
        %v2773 = vmax.f32 %v2259, 0.0
        %v2774 = vmax.f32 %v2264, 0.0
        %v2775 = vmax.f32 %v2269, 0.0
        %v2776 = vmax.f32 %v2274, 0.0
        %v2777 = vmax.f32 %v2279, 0.0
        %v2778 = vmax.f32 %v2284, 0.0
        %v2779 = vmax.f32 %v2289, 0.0
        %v2780 = vmax.f32 %v2294, 0.0
        %v2781 = vmax.f32 %v2299, 0.0
        %v2782 = vmax.f32 %v2304, 0.0
        %v2783 = vmax.f32 %v2309, 0.0
        %v2784 = vmax.f32 %v2314, 0.0
        %v2785 = vmax.f32 %v2319, 0.0
        %v2786 = vmax.f32 %v2324, 0.0
        %v2787 = vmax.f32 %v2329, 0.0
        %v2788 = vmax.f32 %v2334, 0.0
        %v2789 = vmax.f32 %v2339, 0.0
        %v2790 = vmax.f32 %v2344, 0.0
        %v2791 = vmax.f32 %v2349, 0.0
        %v2792 = vmax.f32 %v2354, 0.0
        %v2793 = vmax.f32 %v2359, 0.0
        %v2794 = vmax.f32 %v2364, 0.0
        %v2795 = vmax.f32 %v2369, 0.0
        %v2796 = vmax.f32 %v2374, 0.0
        %v2797 = vmax.f32 %v2379, 0.0
        %v2798 = vmax.f32 %v2384, 0.0
        %v2799 = vmax.f32 %v2389, 0.0
        %v2800 = vmax.f32 %v2394, 0.0
        %v2801 = vmax.f32 %v2399, 0.0
        %v2802 = vmax.f32 %v2404, 0.0
        %v2803 = vmax.f32 %v2409, 0.0
        %v2804 = vmax.f32 %v2414, 0.0
        %v2805 = vmax.f32 %v2419, 0.0
        %v2806 = vmax.f32 %v2424, 0.0
        %v2807 = vmax.f32 %v2429, 0.0
        %v2808 = vmax.f32 %v2434, 0.0
        %v2809 = vmax.f32 %v2439, 0.0
        %v2810 = vmax.f32 %v2444, 0.0
        %v2811 = vmax.f32 %v2449, 0.0
        %v2812 = vmax.f32 %v2454, 0.0
        %v2813 = vmax.f32 %v2459, 0.0
        %v2814 = vmax.f32 %v2464, 0.0
        %v2815 = vmax.f32 %v2469, 0.0
        %v2816 = vmax.f32 %v2474, 0.0
        %v2817 = vmax.f32 %v2479, 0.0
        %v2818 = vmax.f32 %v2484, 0.0
        %v2819 = vmax.f32 %v2489, 0.0
        %v2820 = vmax.f32 %v2494, 0.0
        %v2821 = vmax.f32 %v2499, 0.0
        %v2822 = vmax.f32 %v2504, 0.0
        %v2823 = vmax.f32 %v2509, 0.0
        %v2824 = vmax.f32 %v2514, 0.0
        %v2825 = vmax.f32 %v2519, 0.0
        %v2826 = vmax.f32 %v2524, 0.0
        %v2827 = vmax.f32 %v2529, 0.0
        %v2828 = vmax.f32 %v2534, 0.0
        %v2829 = vmax.f32 %v2539, 0.0
        %v2830 = vmax.f32 %v2544, 0.0
        %v2831 = vmax.f32 %v2549, 0.0
        %v2832 = vmax.f32 %v2554, 0.0
        %v2833 = vmax.f32 %v2559, 0.0
        %v2834 = vmax.f32 %v2564, 0.0
        %v2835 = vmax.f32 %v2569, 0.0
        %v2836 = vmax.f32 %v2574, 0.0
        %v2837 = vmax.f32 %v2579, 0.0
        %v2838 = vmax.f32 %v2584, 0.0
        %v2839 = vmax.f32 %v2589, 0.0
        %v2840 = vmax.f32 %v2594, 0.0
        %v2841 = vmax.f32 %v2599, 0.0
        %v2842 = vmax.f32 %v2604, 0.0
        %v2843 = vmax.f32 %v2609, 0.0
        %v2844 = vmax.f32 %v2614, 0.0
        %v2845 = vmax.f32 %v2619, 0.0
        %v2846 = vmax.f32 %v2624, 0.0
        %v2847 = vmax.f32 %v2629, 0.0
        %v2848 = vmax.f32 %v2634, 0.0
        %v2849 = vmax.f32 %v2639, 0.0
        %v2850 = vmax.f32 %v2644, 0.0
        %v2851 = vmax.f32 %v2649, 0.0
        %v2852 = vmax.f32 %v2654, 0.0
        %v2853 = vmax.f32 %v2659, 0.0
        %v2854 = vmax.f32 %v2664, 0.0
        %v2855 = vmax.f32 %v2669, 0.0
        %v2856 = vmax.f32 %v2674, 0.0
        %v2857 = vmax.f32 %v2679, 0.0
        %v2858 = vmax.f32 %v2684, 0.0
        %v2859 = vmax.f32 %v2689, 0.0
        %v2860 = vmax.f32 %v2694, 0.0
        %v2861 = vmax.f32 %v2699, 0.0
        %v2862 = vmax.f32 %v2704, 0.0
        %v2863 = vmax.f32 %v2709, 0.0
        %v2864 = vmax.f32 %v2714, 0.0
        %v2865 = vmax.f32 %v2719, 0.0
        %v2866 = vmax.f32 %v2724, 0.0
        %v2867 = vmax.f32 %v2729, 0.0
        %v2868 = vmax.f32 %v2734, 0.0
        %v2869 = vmax.f32 %v2739, 0.0
        %v2870 = vld [vmem:[%s5] sm:$0x1]
        %v2872 = vlaneseq
        %v2873 = vshrl.u32 %v2872, 7
        %v2874 = vsub.s32 0, %v2873
        %v2875 = vrot.slane %v2870, %v2874
        %v2877 = vmul.f32 %v2742, %v2875
        %v2878 = vmul.f32 %v2743, %v2875
        %v2879 = vmul.f32 %v2744, %v2875
        %v2880 = vmul.f32 %v2745, %v2875
        %v2881 = vmul.f32 %v2746, %v2875
        %v2882 = vmul.f32 %v2747, %v2875
        %v2883 = vmul.f32 %v2748, %v2875
        %v2884 = vmul.f32 %v2749, %v2875
        %v2885 = vmul.f32 %v2750, %v2875
        %v2886 = vmul.f32 %v2751, %v2875
        %v2887 = vmul.f32 %v2752, %v2875
        %v2888 = vmul.f32 %v2753, %v2875
        %v2889 = vmul.f32 %v2754, %v2875
        %v2890 = vmul.f32 %v2755, %v2875
        %v2891 = vmul.f32 %v2756, %v2875
        %v2892 = vmul.f32 %v2757, %v2875
        %v2893 = vmul.f32 %v2758, %v2875
        %v2894 = vmul.f32 %v2759, %v2875
        %v2895 = vmul.f32 %v2760, %v2875
        %v2896 = vmul.f32 %v2761, %v2875
        %v2897 = vmul.f32 %v2762, %v2875
        %v2898 = vmul.f32 %v2763, %v2875
        %v2899 = vmul.f32 %v2764, %v2875
        %v2900 = vmul.f32 %v2765, %v2875
        %v2901 = vmul.f32 %v2766, %v2875
        %v2902 = vmul.f32 %v2767, %v2875
        %v2903 = vmul.f32 %v2768, %v2875
        %v2904 = vmul.f32 %v2769, %v2875
        %v2905 = vmul.f32 %v2770, %v2875
        %v2906 = vmul.f32 %v2771, %v2875
        %v2907 = vmul.f32 %v2772, %v2875
        %v2908 = vmul.f32 %v2773, %v2875
        %v2909 = vmul.f32 %v2774, %v2875
        %v2910 = vmul.f32 %v2775, %v2875
        %v2911 = vmul.f32 %v2776, %v2875
        %v2912 = vmul.f32 %v2777, %v2875
        %v2913 = vmul.f32 %v2778, %v2875
        %v2914 = vmul.f32 %v2779, %v2875
        %v2915 = vmul.f32 %v2780, %v2875
        %v2916 = vmul.f32 %v2781, %v2875
        %v2917 = vmul.f32 %v2782, %v2875
        %v2918 = vmul.f32 %v2783, %v2875
        %v2919 = vmul.f32 %v2784, %v2875
        %v2920 = vmul.f32 %v2785, %v2875
        %v2921 = vmul.f32 %v2786, %v2875
        %v2922 = vmul.f32 %v2787, %v2875
        %v2923 = vmul.f32 %v2788, %v2875
        %v2924 = vmul.f32 %v2789, %v2875
        %v2925 = vmul.f32 %v2790, %v2875
        %v2926 = vmul.f32 %v2791, %v2875
        %v2927 = vmul.f32 %v2792, %v2875
        %v2928 = vmul.f32 %v2793, %v2875
        %v2929 = vmul.f32 %v2794, %v2875
        %v2930 = vmul.f32 %v2795, %v2875
        %v2931 = vmul.f32 %v2796, %v2875
        %v2932 = vmul.f32 %v2797, %v2875
        %v2933 = vmul.f32 %v2798, %v2875
        %v2934 = vmul.f32 %v2799, %v2875
        %v2935 = vmul.f32 %v2800, %v2875
        %v2936 = vmul.f32 %v2801, %v2875
        %v2937 = vmul.f32 %v2802, %v2875
        %v2938 = vmul.f32 %v2803, %v2875
        %v2939 = vmul.f32 %v2804, %v2875
        %v2940 = vmul.f32 %v2805, %v2875
        %v2941 = vmul.f32 %v2806, %v2875
        %v2942 = vmul.f32 %v2807, %v2875
        %v2943 = vmul.f32 %v2808, %v2875
        %v2944 = vmul.f32 %v2809, %v2875
        %v2945 = vmul.f32 %v2810, %v2875
        %v2946 = vmul.f32 %v2811, %v2875
        %v2947 = vmul.f32 %v2812, %v2875
        %v2948 = vmul.f32 %v2813, %v2875
        %v2949 = vmul.f32 %v2814, %v2875
        %v2950 = vmul.f32 %v2815, %v2875
        %v2951 = vmul.f32 %v2816, %v2875
        %v2952 = vmul.f32 %v2817, %v2875
        %v2953 = vmul.f32 %v2818, %v2875
        %v2954 = vmul.f32 %v2819, %v2875
        %v2955 = vmul.f32 %v2820, %v2875
        %v2956 = vmul.f32 %v2821, %v2875
        %v2957 = vmul.f32 %v2822, %v2875
        %v2958 = vmul.f32 %v2823, %v2875
        %v2959 = vmul.f32 %v2824, %v2875
        %v2960 = vmul.f32 %v2825, %v2875
        %v2961 = vmul.f32 %v2826, %v2875
        %v2962 = vmul.f32 %v2827, %v2875
        %v2963 = vmul.f32 %v2828, %v2875
        %v2964 = vmul.f32 %v2829, %v2875
        %v2965 = vmul.f32 %v2830, %v2875
        %v2966 = vmul.f32 %v2831, %v2875
        %v2967 = vmul.f32 %v2832, %v2875
        %v2968 = vmul.f32 %v2833, %v2875
        %v2969 = vmul.f32 %v2834, %v2875
        %v2970 = vmul.f32 %v2835, %v2875
        %v2971 = vmul.f32 %v2836, %v2875
        %v2972 = vmul.f32 %v2837, %v2875
        %v2973 = vmul.f32 %v2838, %v2875
        %v2974 = vmul.f32 %v2839, %v2875
        %v2975 = vmul.f32 %v2840, %v2875
        %v2976 = vmul.f32 %v2841, %v2875
        %v2977 = vmul.f32 %v2842, %v2875
        %v2978 = vmul.f32 %v2843, %v2875
        %v2979 = vmul.f32 %v2844, %v2875
        %v2980 = vmul.f32 %v2845, %v2875
        %v2981 = vmul.f32 %v2846, %v2875
        %v2982 = vmul.f32 %v2847, %v2875
        %v2983 = vmul.f32 %v2848, %v2875
        %v2984 = vmul.f32 %v2849, %v2875
        %v2985 = vmul.f32 %v2850, %v2875
        %v2986 = vmul.f32 %v2851, %v2875
        %v2987 = vmul.f32 %v2852, %v2875
        %v2988 = vmul.f32 %v2853, %v2875
        %v2989 = vmul.f32 %v2854, %v2875
        %v2990 = vmul.f32 %v2855, %v2875
        %v2991 = vmul.f32 %v2856, %v2875
        %v2992 = vmul.f32 %v2857, %v2875
        %v2993 = vmul.f32 %v2858, %v2875
        %v2994 = vmul.f32 %v2859, %v2875
        %v2995 = vmul.f32 %v2860, %v2875
        %v2996 = vmul.f32 %v2861, %v2875
        %v2997 = vmul.f32 %v2862, %v2875
        %v2998 = vmul.f32 %v2863, %v2875
        %v2999 = vmul.f32 %v2864, %v2875
        %v3000 = vmul.f32 %v2865, %v2875
        %v3001 = vmul.f32 %v2866, %v2875
        %v3002 = vmul.f32 %v2867, %v2875
        %v3003 = vmul.f32 %v2868, %v2875
        %v3004 = vmul.f32 %v2869, %v2875
        %v3005 = vsel %vm1652, %v2877, 0.0
        %3006 = vadd.xlane.f32.xlu0 %v3005
        %v3007 = vpop.xlane.xlu0 %3006
        %v3008 = vsel %vm1652, %v2878, 0.0
        %3009 = vadd.xlane.f32.xlu0 %v3008
        %v3010 = vpop.xlane.xlu0 %3009
        %v3011 = vsel %vm1652, %v2879, 0.0
        %3012 = vadd.xlane.f32.xlu0 %v3011
        %v3013 = vpop.xlane.xlu0 %3012
        %v3014 = vsel %vm1652, %v2880, 0.0
        %3015 = vadd.xlane.f32.xlu0 %v3014
        %v3016 = vpop.xlane.xlu0 %3015
        %v3017 = vsel %vm1652, %v2881, 0.0
        %3018 = vadd.xlane.f32.xlu0 %v3017
        %v3019 = vpop.xlane.xlu0 %3018
        %v3020 = vsel %vm1652, %v2882, 0.0
        %3021 = vadd.xlane.f32.xlu0 %v3020
        %v3022 = vpop.xlane.xlu0 %3021
        %v3023 = vsel %vm1652, %v2883, 0.0
        %3024 = vadd.xlane.f32.xlu0 %v3023
        %v3025 = vpop.xlane.xlu0 %3024
        %v3026 = vsel %vm1652, %v2884, 0.0
        %3027 = vadd.xlane.f32.xlu0 %v3026
        %v3028 = vpop.xlane.xlu0 %3027
        %v3029 = vsel %vm1652, %v2885, 0.0
        %3030 = vadd.xlane.f32.xlu0 %v3029
        %v3031 = vpop.xlane.xlu0 %3030
        %v3032 = vsel %vm1652, %v2886, 0.0
        %3033 = vadd.xlane.f32.xlu0 %v3032
        %v3034 = vpop.xlane.xlu0 %3033
        %v3035 = vsel %vm1652, %v2887, 0.0
        %3036 = vadd.xlane.f32.xlu0 %v3035
        %v3037 = vpop.xlane.xlu0 %3036
        %v3038 = vsel %vm1652, %v2888, 0.0
        %3039 = vadd.xlane.f32.xlu0 %v3038
        %v3040 = vpop.xlane.xlu0 %3039
        %v3041 = vsel %vm1652, %v2889, 0.0
        %3042 = vadd.xlane.f32.xlu0 %v3041
        %v3043 = vpop.xlane.xlu0 %3042
        %v3044 = vsel %vm1652, %v2890, 0.0
        %3045 = vadd.xlane.f32.xlu0 %v3044
        %v3046 = vpop.xlane.xlu0 %3045
        %v3047 = vsel %vm1652, %v2891, 0.0
        %3048 = vadd.xlane.f32.xlu0 %v3047
        %v3049 = vpop.xlane.xlu0 %3048
        %v3050 = vsel %vm1652, %v2892, 0.0
        %3051 = vadd.xlane.f32.xlu0 %v3050
        %v3052 = vpop.xlane.xlu0 %3051
        %v3053 = vsel %vm1652, %v2893, 0.0
        %3054 = vadd.xlane.f32.xlu0 %v3053
        %v3055 = vpop.xlane.xlu0 %3054
        %v3056 = vsel %vm1652, %v2894, 0.0
        %3057 = vadd.xlane.f32.xlu0 %v3056
        %v3058 = vpop.xlane.xlu0 %3057
        %v3059 = vsel %vm1652, %v2895, 0.0
        %3060 = vadd.xlane.f32.xlu0 %v3059
        %v3061 = vpop.xlane.xlu0 %3060
        %v3062 = vsel %vm1652, %v2896, 0.0
        %3063 = vadd.xlane.f32.xlu0 %v3062
        %v3064 = vpop.xlane.xlu0 %3063
        %v3065 = vsel %vm1652, %v2897, 0.0
        %3066 = vadd.xlane.f32.xlu0 %v3065
        %v3067 = vpop.xlane.xlu0 %3066
        %v3068 = vsel %vm1652, %v2898, 0.0
        %3069 = vadd.xlane.f32.xlu0 %v3068
        %v3070 = vpop.xlane.xlu0 %3069
        %v3071 = vsel %vm1652, %v2899, 0.0
        %3072 = vadd.xlane.f32.xlu0 %v3071
        %v3073 = vpop.xlane.xlu0 %3072
        %v3074 = vsel %vm1652, %v2900, 0.0
        %3075 = vadd.xlane.f32.xlu0 %v3074
        %v3076 = vpop.xlane.xlu0 %3075
        %v3077 = vsel %vm1652, %v2901, 0.0
        %3078 = vadd.xlane.f32.xlu0 %v3077
        %v3079 = vpop.xlane.xlu0 %3078
        %v3080 = vsel %vm1652, %v2902, 0.0
        %3081 = vadd.xlane.f32.xlu0 %v3080
        %v3082 = vpop.xlane.xlu0 %3081
        %v3083 = vsel %vm1652, %v2903, 0.0
        %3084 = vadd.xlane.f32.xlu0 %v3083
        %v3085 = vpop.xlane.xlu0 %3084
        %v3086 = vsel %vm1652, %v2904, 0.0
        %3087 = vadd.xlane.f32.xlu0 %v3086
        %v3088 = vpop.xlane.xlu0 %3087
        %v3089 = vsel %vm1652, %v2905, 0.0
        %3090 = vadd.xlane.f32.xlu0 %v3089
        %v3091 = vpop.xlane.xlu0 %3090
        %v3092 = vsel %vm1652, %v2906, 0.0
        %3093 = vadd.xlane.f32.xlu0 %v3092
        %v3094 = vpop.xlane.xlu0 %3093
        %v3095 = vsel %vm1652, %v2907, 0.0
        %3096 = vadd.xlane.f32.xlu0 %v3095
        %v3097 = vpop.xlane.xlu0 %3096
        %v3098 = vsel %vm1652, %v2908, 0.0
        %3099 = vadd.xlane.f32.xlu0 %v3098
        %v3100 = vpop.xlane.xlu0 %3099
        %v3101 = vsel %vm1652, %v2909, 0.0
        %3102 = vadd.xlane.f32.xlu0 %v3101
        %v3103 = vpop.xlane.xlu0 %3102
        %v3104 = vsel %vm1652, %v2910, 0.0
        %3105 = vadd.xlane.f32.xlu0 %v3104
        %v3106 = vpop.xlane.xlu0 %3105
        %v3107 = vsel %vm1652, %v2911, 0.0
        %3108 = vadd.xlane.f32.xlu0 %v3107
        %v3109 = vpop.xlane.xlu0 %3108
        %v3110 = vsel %vm1652, %v2912, 0.0
        %3111 = vadd.xlane.f32.xlu0 %v3110
        %v3112 = vpop.xlane.xlu0 %3111
        %v3113 = vsel %vm1652, %v2913, 0.0
        %3114 = vadd.xlane.f32.xlu0 %v3113
        %v3115 = vpop.xlane.xlu0 %3114
        %v3116 = vsel %vm1652, %v2914, 0.0
        %3117 = vadd.xlane.f32.xlu0 %v3116
        %v3118 = vpop.xlane.xlu0 %3117
        %v3119 = vsel %vm1652, %v2915, 0.0
        %3120 = vadd.xlane.f32.xlu0 %v3119
        %v3121 = vpop.xlane.xlu0 %3120
        %v3122 = vsel %vm1652, %v2916, 0.0
        %3123 = vadd.xlane.f32.xlu0 %v3122
        %v3124 = vpop.xlane.xlu0 %3123
        %v3125 = vsel %vm1652, %v2917, 0.0
        %3126 = vadd.xlane.f32.xlu0 %v3125
        %v3127 = vpop.xlane.xlu0 %3126
        %v3128 = vsel %vm1652, %v2918, 0.0
        %3129 = vadd.xlane.f32.xlu0 %v3128
        %v3130 = vpop.xlane.xlu0 %3129
        %v3131 = vsel %vm1652, %v2919, 0.0
        %3132 = vadd.xlane.f32.xlu0 %v3131
        %v3133 = vpop.xlane.xlu0 %3132
        %v3134 = vsel %vm1652, %v2920, 0.0
        %3135 = vadd.xlane.f32.xlu0 %v3134
        %v3136 = vpop.xlane.xlu0 %3135
        %v3137 = vsel %vm1652, %v2921, 0.0
        %3138 = vadd.xlane.f32.xlu0 %v3137
        %v3139 = vpop.xlane.xlu0 %3138
        %v3140 = vsel %vm1652, %v2922, 0.0
        %3141 = vadd.xlane.f32.xlu0 %v3140
        %v3142 = vpop.xlane.xlu0 %3141
        %v3143 = vsel %vm1652, %v2923, 0.0
        %3144 = vadd.xlane.f32.xlu0 %v3143
        %v3145 = vpop.xlane.xlu0 %3144
        %v3146 = vsel %vm1652, %v2924, 0.0
        %3147 = vadd.xlane.f32.xlu0 %v3146
        %v3148 = vpop.xlane.xlu0 %3147
        %v3149 = vsel %vm1652, %v2925, 0.0
        %3150 = vadd.xlane.f32.xlu0 %v3149
        %v3151 = vpop.xlane.xlu0 %3150
        %v3152 = vsel %vm1652, %v2926, 0.0
        %3153 = vadd.xlane.f32.xlu0 %v3152
        %v3154 = vpop.xlane.xlu0 %3153
        %v3155 = vsel %vm1652, %v2927, 0.0
        %3156 = vadd.xlane.f32.xlu0 %v3155
        %v3157 = vpop.xlane.xlu0 %3156
        %v3158 = vsel %vm1652, %v2928, 0.0
        %3159 = vadd.xlane.f32.xlu0 %v3158
        %v3160 = vpop.xlane.xlu0 %3159
        %v3161 = vsel %vm1652, %v2929, 0.0
        %3162 = vadd.xlane.f32.xlu0 %v3161
        %v3163 = vpop.xlane.xlu0 %3162
        %v3164 = vsel %vm1652, %v2930, 0.0
        %3165 = vadd.xlane.f32.xlu0 %v3164
        %v3166 = vpop.xlane.xlu0 %3165
        %v3167 = vsel %vm1652, %v2931, 0.0
        %3168 = vadd.xlane.f32.xlu0 %v3167
        %v3169 = vpop.xlane.xlu0 %3168
        %v3170 = vsel %vm1652, %v2932, 0.0
        %3171 = vadd.xlane.f32.xlu0 %v3170
        %v3172 = vpop.xlane.xlu0 %3171
        %v3173 = vsel %vm1652, %v2933, 0.0
        %3174 = vadd.xlane.f32.xlu0 %v3173
        %v3175 = vpop.xlane.xlu0 %3174
        %v3176 = vsel %vm1652, %v2934, 0.0
        %3177 = vadd.xlane.f32.xlu0 %v3176
        %v3178 = vpop.xlane.xlu0 %3177
        %v3179 = vsel %vm1652, %v2935, 0.0
        %3180 = vadd.xlane.f32.xlu0 %v3179
        %v3181 = vpop.xlane.xlu0 %3180
        %v3182 = vsel %vm1652, %v2936, 0.0
        %3183 = vadd.xlane.f32.xlu0 %v3182
        %v3184 = vpop.xlane.xlu0 %3183
        %v3185 = vsel %vm1652, %v2937, 0.0
        %3186 = vadd.xlane.f32.xlu0 %v3185
        %v3187 = vpop.xlane.xlu0 %3186
        %v3188 = vsel %vm1652, %v2938, 0.0
        %3189 = vadd.xlane.f32.xlu0 %v3188
        %v3190 = vpop.xlane.xlu0 %3189
        %v3191 = vsel %vm1652, %v2939, 0.0
        %3192 = vadd.xlane.f32.xlu0 %v3191
        %v3193 = vpop.xlane.xlu0 %3192
        %v3194 = vsel %vm1652, %v2940, 0.0
        %3195 = vadd.xlane.f32.xlu0 %v3194
        %v3196 = vpop.xlane.xlu0 %3195
        %v3197 = vsel %vm1652, %v2941, 0.0
        %3198 = vadd.xlane.f32.xlu0 %v3197
        %v3199 = vpop.xlane.xlu0 %3198
        %v3200 = vsel %vm1652, %v2942, 0.0
        %3201 = vadd.xlane.f32.xlu0 %v3200
        %v3202 = vpop.xlane.xlu0 %3201
        %v3203 = vsel %vm1652, %v2943, 0.0
        %3204 = vadd.xlane.f32.xlu0 %v3203
        %v3205 = vpop.xlane.xlu0 %3204
        %v3206 = vsel %vm1652, %v2944, 0.0
        %3207 = vadd.xlane.f32.xlu0 %v3206
        %v3208 = vpop.xlane.xlu0 %3207
        %v3209 = vsel %vm1652, %v2945, 0.0
        %3210 = vadd.xlane.f32.xlu0 %v3209
        %v3211 = vpop.xlane.xlu0 %3210
        %v3212 = vsel %vm1652, %v2946, 0.0
        %3213 = vadd.xlane.f32.xlu0 %v3212
        %v3214 = vpop.xlane.xlu0 %3213
        %v3215 = vsel %vm1652, %v2947, 0.0
        %3216 = vadd.xlane.f32.xlu0 %v3215
        %v3217 = vpop.xlane.xlu0 %3216
        %v3218 = vsel %vm1652, %v2948, 0.0
        %3219 = vadd.xlane.f32.xlu0 %v3218
        %v3220 = vpop.xlane.xlu0 %3219
        %v3221 = vsel %vm1652, %v2949, 0.0
        %3222 = vadd.xlane.f32.xlu0 %v3221
        %v3223 = vpop.xlane.xlu0 %3222
        %v3224 = vsel %vm1652, %v2950, 0.0
        %3225 = vadd.xlane.f32.xlu0 %v3224
        %v3226 = vpop.xlane.xlu0 %3225
        %v3227 = vsel %vm1652, %v2951, 0.0
        %3228 = vadd.xlane.f32.xlu0 %v3227
        %v3229 = vpop.xlane.xlu0 %3228
        %v3230 = vsel %vm1652, %v2952, 0.0
        %3231 = vadd.xlane.f32.xlu0 %v3230
        %v3232 = vpop.xlane.xlu0 %3231
        %v3233 = vsel %vm1652, %v2953, 0.0
        %3234 = vadd.xlane.f32.xlu0 %v3233
        %v3235 = vpop.xlane.xlu0 %3234
        %v3236 = vsel %vm1652, %v2954, 0.0
        %3237 = vadd.xlane.f32.xlu0 %v3236
        %v3238 = vpop.xlane.xlu0 %3237
        %v3239 = vsel %vm1652, %v2955, 0.0
        %3240 = vadd.xlane.f32.xlu0 %v3239
        %v3241 = vpop.xlane.xlu0 %3240
        %v3242 = vsel %vm1652, %v2956, 0.0
        %3243 = vadd.xlane.f32.xlu0 %v3242
        %v3244 = vpop.xlane.xlu0 %3243
        %v3245 = vsel %vm1652, %v2957, 0.0
        %3246 = vadd.xlane.f32.xlu0 %v3245
        %v3247 = vpop.xlane.xlu0 %3246
        %v3248 = vsel %vm1652, %v2958, 0.0
        %3249 = vadd.xlane.f32.xlu0 %v3248
        %v3250 = vpop.xlane.xlu0 %3249
        %v3251 = vsel %vm1652, %v2959, 0.0
        %3252 = vadd.xlane.f32.xlu0 %v3251
        %v3253 = vpop.xlane.xlu0 %3252
        %v3254 = vsel %vm1652, %v2960, 0.0
        %3255 = vadd.xlane.f32.xlu0 %v3254
        %v3256 = vpop.xlane.xlu0 %3255
        %v3257 = vsel %vm1652, %v2961, 0.0
        %3258 = vadd.xlane.f32.xlu0 %v3257
        %v3259 = vpop.xlane.xlu0 %3258
        %v3260 = vsel %vm1652, %v2962, 0.0
        %3261 = vadd.xlane.f32.xlu0 %v3260
        %v3262 = vpop.xlane.xlu0 %3261
        %v3263 = vsel %vm1652, %v2963, 0.0
        %3264 = vadd.xlane.f32.xlu0 %v3263
        %v3265 = vpop.xlane.xlu0 %3264
        %v3266 = vsel %vm1652, %v2964, 0.0
        %3267 = vadd.xlane.f32.xlu0 %v3266
        %v3268 = vpop.xlane.xlu0 %3267
        %v3269 = vsel %vm1652, %v2965, 0.0
        %3270 = vadd.xlane.f32.xlu0 %v3269
        %v3271 = vpop.xlane.xlu0 %3270
        %v3272 = vsel %vm1652, %v2966, 0.0
        %3273 = vadd.xlane.f32.xlu0 %v3272
        %v3274 = vpop.xlane.xlu0 %3273
        %v3275 = vsel %vm1652, %v2967, 0.0
        %3276 = vadd.xlane.f32.xlu0 %v3275
        %v3277 = vpop.xlane.xlu0 %3276
        %v3278 = vsel %vm1652, %v2968, 0.0
        %3279 = vadd.xlane.f32.xlu0 %v3278
        %v3280 = vpop.xlane.xlu0 %3279
        %v3281 = vsel %vm1652, %v2969, 0.0
        %3282 = vadd.xlane.f32.xlu0 %v3281
        %v3283 = vpop.xlane.xlu0 %3282
        %v3284 = vsel %vm1652, %v2970, 0.0
        %3285 = vadd.xlane.f32.xlu0 %v3284
        %v3286 = vpop.xlane.xlu0 %3285
        %v3287 = vsel %vm1652, %v2971, 0.0
        %3288 = vadd.xlane.f32.xlu0 %v3287
        %v3289 = vpop.xlane.xlu0 %3288
        %v3290 = vsel %vm1652, %v2972, 0.0
        %3291 = vadd.xlane.f32.xlu0 %v3290
        %v3292 = vpop.xlane.xlu0 %3291
        %v3293 = vsel %vm1652, %v2973, 0.0
        %3294 = vadd.xlane.f32.xlu0 %v3293
        %v3295 = vpop.xlane.xlu0 %3294
        %v3296 = vsel %vm1652, %v2974, 0.0
        %3297 = vadd.xlane.f32.xlu0 %v3296
        %v3298 = vpop.xlane.xlu0 %3297
        %v3299 = vsel %vm1652, %v2975, 0.0
        %3300 = vadd.xlane.f32.xlu0 %v3299
        %v3301 = vpop.xlane.xlu0 %3300
        %v3302 = vsel %vm1652, %v2976, 0.0
        %3303 = vadd.xlane.f32.xlu0 %v3302
        %v3304 = vpop.xlane.xlu0 %3303
        %v3305 = vsel %vm1652, %v2977, 0.0
        %3306 = vadd.xlane.f32.xlu0 %v3305
        %v3307 = vpop.xlane.xlu0 %3306
        %v3308 = vsel %vm1652, %v2978, 0.0
        %3309 = vadd.xlane.f32.xlu0 %v3308
        %v3310 = vpop.xlane.xlu0 %3309
        %v3311 = vsel %vm1652, %v2979, 0.0
        %3312 = vadd.xlane.f32.xlu0 %v3311
        %v3313 = vpop.xlane.xlu0 %3312
        %v3314 = vsel %vm1652, %v2980, 0.0
        %3315 = vadd.xlane.f32.xlu0 %v3314
        %v3316 = vpop.xlane.xlu0 %3315
        %v3317 = vsel %vm1652, %v2981, 0.0
        %3318 = vadd.xlane.f32.xlu0 %v3317
        %v3319 = vpop.xlane.xlu0 %3318
        %v3320 = vsel %vm1652, %v2982, 0.0
        %3321 = vadd.xlane.f32.xlu0 %v3320
        %v3322 = vpop.xlane.xlu0 %3321
        %v3323 = vsel %vm1652, %v2983, 0.0
        %3324 = vadd.xlane.f32.xlu0 %v3323
        %v3325 = vpop.xlane.xlu0 %3324
        %v3326 = vsel %vm1652, %v2984, 0.0
        %3327 = vadd.xlane.f32.xlu0 %v3326
        %v3328 = vpop.xlane.xlu0 %3327
        %v3329 = vsel %vm1652, %v2985, 0.0
        %3330 = vadd.xlane.f32.xlu0 %v3329
        %v3331 = vpop.xlane.xlu0 %3330
        %v3332 = vsel %vm1652, %v2986, 0.0
        %3333 = vadd.xlane.f32.xlu0 %v3332
        %v3334 = vpop.xlane.xlu0 %3333
        %v3335 = vsel %vm1652, %v2987, 0.0
        %3336 = vadd.xlane.f32.xlu0 %v3335
        %v3337 = vpop.xlane.xlu0 %3336
        %v3338 = vsel %vm1652, %v2988, 0.0
        %3339 = vadd.xlane.f32.xlu0 %v3338
        %v3340 = vpop.xlane.xlu0 %3339
        %v3341 = vsel %vm1652, %v2989, 0.0
        %3342 = vadd.xlane.f32.xlu0 %v3341
        %v3343 = vpop.xlane.xlu0 %3342
        %v3344 = vsel %vm1652, %v2990, 0.0
        %3345 = vadd.xlane.f32.xlu0 %v3344
        %v3346 = vpop.xlane.xlu0 %3345
        %v3347 = vsel %vm1652, %v2991, 0.0
        %3348 = vadd.xlane.f32.xlu0 %v3347
        %v3349 = vpop.xlane.xlu0 %3348
        %v3350 = vsel %vm1652, %v2992, 0.0
        %3351 = vadd.xlane.f32.xlu0 %v3350
        %v3352 = vpop.xlane.xlu0 %3351
        %v3353 = vsel %vm1652, %v2993, 0.0
        %3354 = vadd.xlane.f32.xlu0 %v3353
        %v3355 = vpop.xlane.xlu0 %3354
        %v3356 = vsel %vm1652, %v2994, 0.0
        %3357 = vadd.xlane.f32.xlu0 %v3356
        %v3358 = vpop.xlane.xlu0 %3357
        %v3359 = vsel %vm1652, %v2995, 0.0
        %3360 = vadd.xlane.f32.xlu0 %v3359
        %v3361 = vpop.xlane.xlu0 %3360
        %v3362 = vsel %vm1652, %v2996, 0.0
        %3363 = vadd.xlane.f32.xlu0 %v3362
        %v3364 = vpop.xlane.xlu0 %3363
        %v3365 = vsel %vm1652, %v2997, 0.0
        %3366 = vadd.xlane.f32.xlu0 %v3365
        %v3367 = vpop.xlane.xlu0 %3366
        %v3368 = vsel %vm1652, %v2998, 0.0
        %3369 = vadd.xlane.f32.xlu0 %v3368
        %v3370 = vpop.xlane.xlu0 %3369
        %v3371 = vsel %vm1652, %v2999, 0.0
        %3372 = vadd.xlane.f32.xlu0 %v3371
        %v3373 = vpop.xlane.xlu0 %3372
        %v3374 = vsel %vm1652, %v3000, 0.0
        %3375 = vadd.xlane.f32.xlu0 %v3374
        %v3376 = vpop.xlane.xlu0 %3375
        %v3377 = vsel %vm1652, %v3001, 0.0
        %3378 = vadd.xlane.f32.xlu0 %v3377
        %v3379 = vpop.xlane.xlu0 %3378
        %v3380 = vsel %vm1652, %v3002, 0.0
        %3381 = vadd.xlane.f32.xlu0 %v3380
        %v3382 = vpop.xlane.xlu0 %3381
        %v3383 = vsel %vm1652, %v3003, 0.0
        %3384 = vadd.xlane.f32.xlu0 %v3383
        %v3385 = vpop.xlane.xlu0 %3384
        %v3386 = vsel %vm1652, %v3004, 0.0
        %3387 = vadd.xlane.f32.xlu0 %v3386
        %v3388 = vpop.xlane.xlu0 %3387
        %s3389 = sld [smem:[#allocation2]]
        %v3390 = vstv %s3389
        %v3391 = vadd.f32 %v3007, %v3390
        %v3392 = vadd.f32 %v3010, %v3390
        %v3393 = vadd.f32 %v3013, %v3390
        %v3394 = vadd.f32 %v3016, %v3390
        %v3395 = vadd.f32 %v3019, %v3390
        %v3396 = vadd.f32 %v3022, %v3390
        %v3397 = vadd.f32 %v3025, %v3390
        %v3398 = vadd.f32 %v3028, %v3390
        %v3399 = vadd.f32 %v3031, %v3390
        %v3400 = vadd.f32 %v3034, %v3390
        %v3401 = vadd.f32 %v3037, %v3390
        %v3402 = vadd.f32 %v3040, %v3390
        %v3403 = vadd.f32 %v3043, %v3390
        %v3404 = vadd.f32 %v3046, %v3390
        %v3405 = vadd.f32 %v3049, %v3390
        %v3406 = vadd.f32 %v3052, %v3390
        %v3407 = vadd.f32 %v3055, %v3390
        %v3408 = vadd.f32 %v3058, %v3390
        %v3409 = vadd.f32 %v3061, %v3390
        %v3410 = vadd.f32 %v3064, %v3390
        %v3411 = vadd.f32 %v3067, %v3390
        %v3412 = vadd.f32 %v3070, %v3390
        %v3413 = vadd.f32 %v3073, %v3390
        %v3414 = vadd.f32 %v3076, %v3390
        %v3415 = vadd.f32 %v3079, %v3390
        %v3416 = vadd.f32 %v3082, %v3390
        %v3417 = vadd.f32 %v3085, %v3390
        %v3418 = vadd.f32 %v3088, %v3390
        %v3419 = vadd.f32 %v3091, %v3390
        %v3420 = vadd.f32 %v3094, %v3390
        %v3421 = vadd.f32 %v3097, %v3390
        %v3422 = vadd.f32 %v3100, %v3390
        %v3423 = vadd.f32 %v3103, %v3390
        %v3424 = vadd.f32 %v3106, %v3390
        %v3425 = vadd.f32 %v3109, %v3390
        %v3426 = vadd.f32 %v3112, %v3390
        %v3427 = vadd.f32 %v3115, %v3390
        %v3428 = vadd.f32 %v3118, %v3390
        %v3429 = vadd.f32 %v3121, %v3390
        %v3430 = vadd.f32 %v3124, %v3390
        %v3431 = vadd.f32 %v3127, %v3390
        %v3432 = vadd.f32 %v3130, %v3390
        %v3433 = vadd.f32 %v3133, %v3390
        %v3434 = vadd.f32 %v3136, %v3390
        %v3435 = vadd.f32 %v3139, %v3390
        %v3436 = vadd.f32 %v3142, %v3390
        %v3437 = vadd.f32 %v3145, %v3390
        %v3438 = vadd.f32 %v3148, %v3390
        %v3439 = vadd.f32 %v3151, %v3390
        %v3440 = vadd.f32 %v3154, %v3390
        %v3441 = vadd.f32 %v3157, %v3390
        %v3442 = vadd.f32 %v3160, %v3390
        %v3443 = vadd.f32 %v3163, %v3390
        %v3444 = vadd.f32 %v3166, %v3390
        %v3445 = vadd.f32 %v3169, %v3390
        %v3446 = vadd.f32 %v3172, %v3390
        %v3447 = vadd.f32 %v3175, %v3390
        %v3448 = vadd.f32 %v3178, %v3390
        %v3449 = vadd.f32 %v3181, %v3390
        %v3450 = vadd.f32 %v3184, %v3390
        %v3451 = vadd.f32 %v3187, %v3390
        %v3452 = vadd.f32 %v3190, %v3390
        %v3453 = vadd.f32 %v3193, %v3390
        %v3454 = vadd.f32 %v3196, %v3390
        %v3455 = vadd.f32 %v3199, %v3390
        %v3456 = vadd.f32 %v3202, %v3390
        %v3457 = vadd.f32 %v3205, %v3390
        %v3458 = vadd.f32 %v3208, %v3390
        %v3459 = vadd.f32 %v3211, %v3390
        %v3460 = vadd.f32 %v3214, %v3390
        %v3461 = vadd.f32 %v3217, %v3390
        %v3462 = vadd.f32 %v3220, %v3390
        %v3463 = vadd.f32 %v3223, %v3390
        %v3464 = vadd.f32 %v3226, %v3390
        %v3465 = vadd.f32 %v3229, %v3390
        %v3466 = vadd.f32 %v3232, %v3390
        %v3467 = vadd.f32 %v3235, %v3390
        %v3468 = vadd.f32 %v3238, %v3390
        %v3469 = vadd.f32 %v3241, %v3390
        %v3470 = vadd.f32 %v3244, %v3390
        %v3471 = vadd.f32 %v3247, %v3390
        %v3472 = vadd.f32 %v3250, %v3390
        %v3473 = vadd.f32 %v3253, %v3390
        %v3474 = vadd.f32 %v3256, %v3390
        %v3475 = vadd.f32 %v3259, %v3390
        %v3476 = vadd.f32 %v3262, %v3390
        %v3477 = vadd.f32 %v3265, %v3390
        %v3478 = vadd.f32 %v3268, %v3390
        %v3479 = vadd.f32 %v3271, %v3390
        %v3480 = vadd.f32 %v3274, %v3390
        %v3481 = vadd.f32 %v3277, %v3390
        %v3482 = vadd.f32 %v3280, %v3390
        %v3483 = vadd.f32 %v3283, %v3390
        %v3484 = vadd.f32 %v3286, %v3390
        %v3485 = vadd.f32 %v3289, %v3390
        %v3486 = vadd.f32 %v3292, %v3390
        %v3487 = vadd.f32 %v3295, %v3390
        %v3488 = vadd.f32 %v3298, %v3390
        %v3489 = vadd.f32 %v3301, %v3390
        %v3490 = vadd.f32 %v3304, %v3390
        %v3491 = vadd.f32 %v3307, %v3390
        %v3492 = vadd.f32 %v3310, %v3390
        %v3493 = vadd.f32 %v3313, %v3390
        %v3494 = vadd.f32 %v3316, %v3390
        %v3495 = vadd.f32 %v3319, %v3390
        %v3496 = vadd.f32 %v3322, %v3390
        %v3497 = vadd.f32 %v3325, %v3390
        %v3498 = vadd.f32 %v3328, %v3390
        %v3499 = vadd.f32 %v3331, %v3390
        %v3500 = vadd.f32 %v3334, %v3390
        %v3501 = vadd.f32 %v3337, %v3390
        %v3502 = vadd.f32 %v3340, %v3390
        %v3503 = vadd.f32 %v3343, %v3390
        %v3504 = vadd.f32 %v3346, %v3390
        %v3505 = vadd.f32 %v3349, %v3390
        %v3506 = vadd.f32 %v3352, %v3390
        %v3507 = vadd.f32 %v3355, %v3390
        %v3508 = vadd.f32 %v3358, %v3390
        %v3509 = vadd.f32 %v3361, %v3390
        %v3510 = vadd.f32 %v3364, %v3390
        %v3511 = vadd.f32 %v3367, %v3390
        %v3512 = vadd.f32 %v3370, %v3390
        %v3513 = vadd.f32 %v3373, %v3390
        %v3514 = vadd.f32 %v3376, %v3390
        %v3515 = vadd.f32 %v3379, %v3390
        %v3516 = vadd.f32 %v3382, %v3390
        %v3517 = vadd.f32 %v3385, %v3390
        %v3518 = vadd.f32 %v3388, %v3390
        %v3535 = vlaneseq
        %v3536 = vand.u32 %v3535, 127
        %v3537 = vlaneseq
        %v3538 = vshrl.u32 %v3537, 7
        %v3539 = vsub.s32 %v3536, %v3538
        %v3540 = vrot.slane %v3391, %v3539
        %v3541 = vadd.s32 %v3536, 4294967288
        %v3542 = vlaneseq
        %v3543 = vshrl.u32 %v3542, 7
        %v3544 = vsub.s32 %v3541, %v3543
        %v3545 = vrot.slane %v3392, %v3544
        %vm3546 = vcmask 130112
        %v3547 = vsel %vm3546, %v3545, %v3540
        %v3548 = vadd.s32 %v3536, 4294967280
        %v3549 = vlaneseq
        %v3550 = vshrl.u32 %v3549, 7
        %v3551 = vsub.s32 %v3548, %v3550
        %v3552 = vrot.slane %v3393, %v3551
        %vm3553 = vcmask 195712
        %v3554 = vsel %vm3553, %v3552, %v3547
        %v3555 = vadd.s32 %v3536, 4294967272
        %v3556 = vlaneseq
        %v3557 = vshrl.u32 %v3556, 7
        %v3558 = vsub.s32 %v3555, %v3557
        %v3559 = vrot.slane %v3394, %v3558
        %vm3560 = vcmask 261312
        %v3561 = vsel %vm3560, %v3559, %v3554
        %v3562 = vadd.s32 %v3536, 4294967264
        %v3563 = vlaneseq
        %v3564 = vshrl.u32 %v3563, 7
        %v3565 = vsub.s32 %v3562, %v3564
        %v3566 = vrot.slane %v3395, %v3565
        %vm3567 = vcmask 326912
        %v3568 = vsel %vm3567, %v3566, %v3561
        %v3569 = vadd.s32 %v3536, 4294967256
        %v3570 = vlaneseq
        %v3571 = vshrl.u32 %v3570, 7
        %v3572 = vsub.s32 %v3569, %v3571
        %v3573 = vrot.slane %v3396, %v3572
        %vm3574 = vcmask 392512
        %v3575 = vsel %vm3574, %v3573, %v3568
        %v3576 = vadd.s32 %v3536, 4294967248
        %v3577 = vlaneseq
        %v3578 = vshrl.u32 %v3577, 7
        %v3579 = vsub.s32 %v3576, %v3578
        %v3580 = vrot.slane %v3397, %v3579
        %vm3581 = vcmask 458112
        %v3582 = vsel %vm3581, %v3580, %v3575
        %v3583 = vadd.s32 %v3536, 4294967240
        %v3584 = vlaneseq
        %v3585 = vshrl.u32 %v3584, 7
        %v3586 = vsub.s32 %v3583, %v3585
        %v3587 = vrot.slane %v3398, %v3586
        %vm3588 = vcmask 523712
        %v3589 = vsel %vm3588, %v3587, %v3582
        %v3590 = vadd.s32 %v3536, 4294967232
        %v3591 = vlaneseq
        %v3592 = vshrl.u32 %v3591, 7
        %v3593 = vsub.s32 %v3590, %v3592
        %v3594 = vrot.slane %v3399, %v3593
        %vm3595 = vcmask 589312
        %v3596 = vsel %vm3595, %v3594, %v3589
        %v3597 = vadd.s32 %v3536, 4294967224
        %v3598 = vlaneseq
        %v3599 = vshrl.u32 %v3598, 7
        %v3600 = vsub.s32 %v3597, %v3599
        %v3601 = vrot.slane %v3400, %v3600
        %vm3602 = vcmask 654912
        %v3603 = vsel %vm3602, %v3601, %v3596
        %v3604 = vadd.s32 %v3536, 4294967216
        %v3605 = vlaneseq
        %v3606 = vshrl.u32 %v3605, 7
        %v3607 = vsub.s32 %v3604, %v3606
        %v3608 = vrot.slane %v3401, %v3607
        %vm3609 = vcmask 720512
        %v3610 = vsel %vm3609, %v3608, %v3603
        %v3611 = vadd.s32 %v3536, 4294967208
        %v3612 = vlaneseq
        %v3613 = vshrl.u32 %v3612, 7
        %v3614 = vsub.s32 %v3611, %v3613
        %v3615 = vrot.slane %v3402, %v3614
        %vm3616 = vcmask 786112
        %v3617 = vsel %vm3616, %v3615, %v3610
        %v3618 = vadd.s32 %v3536, 4294967200
        %v3619 = vlaneseq
        %v3620 = vshrl.u32 %v3619, 7
        %v3621 = vsub.s32 %v3618, %v3620
        %v3622 = vrot.slane %v3403, %v3621
        %vm3623 = vcmask 851712
        %v3624 = vsel %vm3623, %v3622, %v3617
        %v3625 = vadd.s32 %v3536, 4294967192
        %v3626 = vlaneseq
        %v3627 = vshrl.u32 %v3626, 7
        %v3628 = vsub.s32 %v3625, %v3627
        %v3629 = vrot.slane %v3404, %v3628
        %vm3630 = vcmask 917312
        %v3631 = vsel %vm3630, %v3629, %v3624
        %v3632 = vadd.s32 %v3536, 4294967184
        %v3633 = vlaneseq
        %v3634 = vshrl.u32 %v3633, 7
        %v3635 = vsub.s32 %v3632, %v3634
        %v3636 = vrot.slane %v3405, %v3635
        %vm3637 = vcmask 982912
        %v3638 = vsel %vm3637, %v3636, %v3631
        %v3639 = vadd.s32 %v3536, 4294967176
        %v3640 = vlaneseq
        %v3641 = vshrl.u32 %v3640, 7
        %v3642 = vsub.s32 %v3639, %v3641
        %v3643 = vrot.slane %v3406, %v3642
        %vm3644 = vcmask 1048512
        %v3645 = vsel %vm3644, %v3643, %v3638
        %3646 = vst [vmem:[%s273] ss:$8 sm:$0x1] %v3645
        %3647 = vst [vmem:[%s273] ss:$8 sm:$0x0] %v3645
        %v3664 = vlaneseq
        %v3665 = vshrl.u32 %v3664, 7
        %v3666 = vsub.s32 %v3536, %v3665
        %v3667 = vrot.slane %v3407, %v3666
        %v3668 = vlaneseq
        %v3669 = vshrl.u32 %v3668, 7
        %v3670 = vsub.s32 %v3541, %v3669
        %v3671 = vrot.slane %v3408, %v3670
        %v3672 = vsel %vm3546, %v3671, %v3667
        %v3673 = vlaneseq
        %v3674 = vshrl.u32 %v3673, 7
        %v3675 = vsub.s32 %v3548, %v3674
        %v3676 = vrot.slane %v3409, %v3675
        %v3677 = vsel %vm3553, %v3676, %v3672
        %v3678 = vlaneseq
        %v3679 = vshrl.u32 %v3678, 7
        %v3680 = vsub.s32 %v3555, %v3679
        %v3681 = vrot.slane %v3410, %v3680
        %v3682 = vsel %vm3560, %v3681, %v3677
        %v3683 = vlaneseq
        %v3684 = vshrl.u32 %v3683, 7
        %v3685 = vsub.s32 %v3562, %v3684
        %v3686 = vrot.slane %v3411, %v3685
        %v3687 = vsel %vm3567, %v3686, %v3682
        %v3688 = vlaneseq
        %v3689 = vshrl.u32 %v3688, 7
        %v3690 = vsub.s32 %v3569, %v3689
        %v3691 = vrot.slane %v3412, %v3690
        %v3692 = vsel %vm3574, %v3691, %v3687
        %v3693 = vlaneseq
        %v3694 = vshrl.u32 %v3693, 7
        %v3695 = vsub.s32 %v3576, %v3694
        %v3696 = vrot.slane %v3413, %v3695
        %v3697 = vsel %vm3581, %v3696, %v3692
        %v3698 = vlaneseq
        %v3699 = vshrl.u32 %v3698, 7
        %v3700 = vsub.s32 %v3583, %v3699
        %v3701 = vrot.slane %v3414, %v3700
        %v3702 = vsel %vm3588, %v3701, %v3697
        %v3703 = vlaneseq
        %v3704 = vshrl.u32 %v3703, 7
        %v3705 = vsub.s32 %v3590, %v3704
        %v3706 = vrot.slane %v3415, %v3705
        %v3707 = vsel %vm3595, %v3706, %v3702
        %v3708 = vlaneseq
        %v3709 = vshrl.u32 %v3708, 7
        %v3710 = vsub.s32 %v3597, %v3709
        %v3711 = vrot.slane %v3416, %v3710
        %v3712 = vsel %vm3602, %v3711, %v3707
        %v3713 = vlaneseq
        %v3714 = vshrl.u32 %v3713, 7
        %v3715 = vsub.s32 %v3604, %v3714
        %v3716 = vrot.slane %v3417, %v3715
        %v3717 = vsel %vm3609, %v3716, %v3712
        %v3718 = vlaneseq
        %v3719 = vshrl.u32 %v3718, 7
        %v3720 = vsub.s32 %v3611, %v3719
        %v3721 = vrot.slane %v3418, %v3720
        %v3722 = vsel %vm3616, %v3721, %v3717
        %v3723 = vlaneseq
        %v3724 = vshrl.u32 %v3723, 7
        %v3725 = vsub.s32 %v3618, %v3724
        %v3726 = vrot.slane %v3419, %v3725
        %v3727 = vsel %vm3623, %v3726, %v3722
        %v3728 = vlaneseq
        %v3729 = vshrl.u32 %v3728, 7
        %v3730 = vsub.s32 %v3625, %v3729
        %v3731 = vrot.slane %v3420, %v3730
        %v3732 = vsel %vm3630, %v3731, %v3727
        %v3733 = vlaneseq
        %v3734 = vshrl.u32 %v3733, 7
        %v3735 = vsub.s32 %v3632, %v3734
        %v3736 = vrot.slane %v3421, %v3735
        %v3737 = vsel %vm3637, %v3736, %v3732
        %v3738 = vlaneseq
        %v3739 = vshrl.u32 %v3738, 7
        %v3740 = vsub.s32 %v3639, %v3739
        %v3741 = vrot.slane %v3422, %v3740
        %v3742 = vsel %vm3644, %v3741, %v3737
        %s3743 = scalar_lea.vmem %s273, 1 [#allocation3]
        %3744 = vst [vmem:[%s3743] ss:$8 sm:$0x1] %v3742
        %3745 = vst [vmem:[%s3743] ss:$8 sm:$0x0] %v3742
        %v3762 = vlaneseq
        %v3763 = vshrl.u32 %v3762, 7
        %v3764 = vsub.s32 %v3536, %v3763
        %v3765 = vrot.slane %v3423, %v3764
        %v3766 = vlaneseq
        %v3767 = vshrl.u32 %v3766, 7
        %v3768 = vsub.s32 %v3541, %v3767
        %v3769 = vrot.slane %v3424, %v3768
        %v3770 = vsel %vm3546, %v3769, %v3765
        %v3771 = vlaneseq
        %v3772 = vshrl.u32 %v3771, 7
        %v3773 = vsub.s32 %v3548, %v3772
        %v3774 = vrot.slane %v3425, %v3773
        %v3775 = vsel %vm3553, %v3774, %v3770
        %v3776 = vlaneseq
        %v3777 = vshrl.u32 %v3776, 7
        %v3778 = vsub.s32 %v3555, %v3777
        %v3779 = vrot.slane %v3426, %v3778
        %v3780 = vsel %vm3560, %v3779, %v3775
        %v3781 = vlaneseq
        %v3782 = vshrl.u32 %v3781, 7
        %v3783 = vsub.s32 %v3562, %v3782
        %v3784 = vrot.slane %v3427, %v3783
        %v3785 = vsel %vm3567, %v3784, %v3780
        %v3786 = vlaneseq
        %v3787 = vshrl.u32 %v3786, 7
        %v3788 = vsub.s32 %v3569, %v3787
        %v3789 = vrot.slane %v3428, %v3788
        %v3790 = vsel %vm3574, %v3789, %v3785
        %v3791 = vlaneseq
        %v3792 = vshrl.u32 %v3791, 7
        %v3793 = vsub.s32 %v3576, %v3792
        %v3794 = vrot.slane %v3429, %v3793
        %v3795 = vsel %vm3581, %v3794, %v3790
        %v3796 = vlaneseq
        %v3797 = vshrl.u32 %v3796, 7
        %v3798 = vsub.s32 %v3583, %v3797
        %v3799 = vrot.slane %v3430, %v3798
        %v3800 = vsel %vm3588, %v3799, %v3795
        %v3801 = vlaneseq
        %v3802 = vshrl.u32 %v3801, 7
        %v3803 = vsub.s32 %v3590, %v3802
        %v3804 = vrot.slane %v3431, %v3803
        %v3805 = vsel %vm3595, %v3804, %v3800
        %v3806 = vlaneseq
        %v3807 = vshrl.u32 %v3806, 7
        %v3808 = vsub.s32 %v3597, %v3807
        %v3809 = vrot.slane %v3432, %v3808
        %v3810 = vsel %vm3602, %v3809, %v3805
        %v3811 = vlaneseq
        %v3812 = vshrl.u32 %v3811, 7
        %v3813 = vsub.s32 %v3604, %v3812
        %v3814 = vrot.slane %v3433, %v3813
        %v3815 = vsel %vm3609, %v3814, %v3810
        %v3816 = vlaneseq
        %v3817 = vshrl.u32 %v3816, 7
        %v3818 = vsub.s32 %v3611, %v3817
        %v3819 = vrot.slane %v3434, %v3818
        %v3820 = vsel %vm3616, %v3819, %v3815
        %v3821 = vlaneseq
        %v3822 = vshrl.u32 %v3821, 7
        %v3823 = vsub.s32 %v3618, %v3822
        %v3824 = vrot.slane %v3435, %v3823
        %v3825 = vsel %vm3623, %v3824, %v3820
        %v3826 = vlaneseq
        %v3827 = vshrl.u32 %v3826, 7
        %v3828 = vsub.s32 %v3625, %v3827
        %v3829 = vrot.slane %v3436, %v3828
        %v3830 = vsel %vm3630, %v3829, %v3825
        %v3831 = vlaneseq
        %v3832 = vshrl.u32 %v3831, 7
        %v3833 = vsub.s32 %v3632, %v3832
        %v3834 = vrot.slane %v3437, %v3833
        %v3835 = vsel %vm3637, %v3834, %v3830
        %v3836 = vlaneseq
        %v3837 = vshrl.u32 %v3836, 7
        %v3838 = vsub.s32 %v3639, %v3837
        %v3839 = vrot.slane %v3438, %v3838
        %v3840 = vsel %vm3644, %v3839, %v3835
        %s3841 = scalar_lea.vmem %s273, 2 [#allocation3]
        %3842 = vst [vmem:[%s3841] ss:$8 sm:$0x1] %v3840
        %3843 = vst [vmem:[%s3841] ss:$8 sm:$0x0] %v3840
        %v3860 = vlaneseq
        %v3861 = vshrl.u32 %v3860, 7
        %v3862 = vsub.s32 %v3536, %v3861
        %v3863 = vrot.slane %v3439, %v3862
        %v3864 = vlaneseq
        %v3865 = vshrl.u32 %v3864, 7
        %v3866 = vsub.s32 %v3541, %v3865
        %v3867 = vrot.slane %v3440, %v3866
        %v3868 = vsel %vm3546, %v3867, %v3863
        %v3869 = vlaneseq
        %v3870 = vshrl.u32 %v3869, 7
        %v3871 = vsub.s32 %v3548, %v3870
        %v3872 = vrot.slane %v3441, %v3871
        %v3873 = vsel %vm3553, %v3872, %v3868
        %v3874 = vlaneseq
        %v3875 = vshrl.u32 %v3874, 7
        %v3876 = vsub.s32 %v3555, %v3875
        %v3877 = vrot.slane %v3442, %v3876
        %v3878 = vsel %vm3560, %v3877, %v3873
        %v3879 = vlaneseq
        %v3880 = vshrl.u32 %v3879, 7
        %v3881 = vsub.s32 %v3562, %v3880
        %v3882 = vrot.slane %v3443, %v3881
        %v3883 = vsel %vm3567, %v3882, %v3878
        %v3884 = vlaneseq
        %v3885 = vshrl.u32 %v3884, 7
        %v3886 = vsub.s32 %v3569, %v3885
        %v3887 = vrot.slane %v3444, %v3886
        %v3888 = vsel %vm3574, %v3887, %v3883
        %v3889 = vlaneseq
        %v3890 = vshrl.u32 %v3889, 7
        %v3891 = vsub.s32 %v3576, %v3890
        %v3892 = vrot.slane %v3445, %v3891
        %v3893 = vsel %vm3581, %v3892, %v3888
        %v3894 = vlaneseq
        %v3895 = vshrl.u32 %v3894, 7
        %v3896 = vsub.s32 %v3583, %v3895
        %v3897 = vrot.slane %v3446, %v3896
        %v3898 = vsel %vm3588, %v3897, %v3893
        %v3899 = vlaneseq
        %v3900 = vshrl.u32 %v3899, 7
        %v3901 = vsub.s32 %v3590, %v3900
        %v3902 = vrot.slane %v3447, %v3901
        %v3903 = vsel %vm3595, %v3902, %v3898
        %v3904 = vlaneseq
        %v3905 = vshrl.u32 %v3904, 7
        %v3906 = vsub.s32 %v3597, %v3905
        %v3907 = vrot.slane %v3448, %v3906
        %v3908 = vsel %vm3602, %v3907, %v3903
        %v3909 = vlaneseq
        %v3910 = vshrl.u32 %v3909, 7
        %v3911 = vsub.s32 %v3604, %v3910
        %v3912 = vrot.slane %v3449, %v3911
        %v3913 = vsel %vm3609, %v3912, %v3908
        %v3914 = vlaneseq
        %v3915 = vshrl.u32 %v3914, 7
        %v3916 = vsub.s32 %v3611, %v3915
        %v3917 = vrot.slane %v3450, %v3916
        %v3918 = vsel %vm3616, %v3917, %v3913
        %v3919 = vlaneseq
        %v3920 = vshrl.u32 %v3919, 7
        %v3921 = vsub.s32 %v3618, %v3920
        %v3922 = vrot.slane %v3451, %v3921
        %v3923 = vsel %vm3623, %v3922, %v3918
        %v3924 = vlaneseq
        %v3925 = vshrl.u32 %v3924, 7
        %v3926 = vsub.s32 %v3625, %v3925
        %v3927 = vrot.slane %v3452, %v3926
        %v3928 = vsel %vm3630, %v3927, %v3923
        %v3929 = vlaneseq
        %v3930 = vshrl.u32 %v3929, 7
        %v3931 = vsub.s32 %v3632, %v3930
        %v3932 = vrot.slane %v3453, %v3931
        %v3933 = vsel %vm3637, %v3932, %v3928
        %v3934 = vlaneseq
        %v3935 = vshrl.u32 %v3934, 7
        %v3936 = vsub.s32 %v3639, %v3935
        %v3937 = vrot.slane %v3454, %v3936
        %v3938 = vsel %vm3644, %v3937, %v3933
        %s3939 = scalar_lea.vmem %s273, 3 [#allocation3]
        %3940 = vst [vmem:[%s3939] ss:$8 sm:$0x1] %v3938
        %3941 = vst [vmem:[%s3939] ss:$8 sm:$0x0] %v3938
        %v3958 = vlaneseq
        %v3959 = vshrl.u32 %v3958, 7
        %v3960 = vsub.s32 %v3536, %v3959
        %v3961 = vrot.slane %v3455, %v3960
        %v3962 = vlaneseq
        %v3963 = vshrl.u32 %v3962, 7
        %v3964 = vsub.s32 %v3541, %v3963
        %v3965 = vrot.slane %v3456, %v3964
        %v3966 = vsel %vm3546, %v3965, %v3961
        %v3967 = vlaneseq
        %v3968 = vshrl.u32 %v3967, 7
        %v3969 = vsub.s32 %v3548, %v3968
        %v3970 = vrot.slane %v3457, %v3969
        %v3971 = vsel %vm3553, %v3970, %v3966
        %v3972 = vlaneseq
        %v3973 = vshrl.u32 %v3972, 7
        %v3974 = vsub.s32 %v3555, %v3973
        %v3975 = vrot.slane %v3458, %v3974
        %v3976 = vsel %vm3560, %v3975, %v3971
        %v3977 = vlaneseq
        %v3978 = vshrl.u32 %v3977, 7
        %v3979 = vsub.s32 %v3562, %v3978
        %v3980 = vrot.slane %v3459, %v3979
        %v3981 = vsel %vm3567, %v3980, %v3976
        %v3982 = vlaneseq
        %v3983 = vshrl.u32 %v3982, 7
        %v3984 = vsub.s32 %v3569, %v3983
        %v3985 = vrot.slane %v3460, %v3984
        %v3986 = vsel %vm3574, %v3985, %v3981
        %v3987 = vlaneseq
        %v3988 = vshrl.u32 %v3987, 7
        %v3989 = vsub.s32 %v3576, %v3988
        %v3990 = vrot.slane %v3461, %v3989
        %v3991 = vsel %vm3581, %v3990, %v3986
        %v3992 = vlaneseq
        %v3993 = vshrl.u32 %v3992, 7
        %v3994 = vsub.s32 %v3583, %v3993
        %v3995 = vrot.slane %v3462, %v3994
        %v3996 = vsel %vm3588, %v3995, %v3991
        %v3997 = vlaneseq
        %v3998 = vshrl.u32 %v3997, 7
        %v3999 = vsub.s32 %v3590, %v3998
        %v4000 = vrot.slane %v3463, %v3999
        %v4001 = vsel %vm3595, %v4000, %v3996
        %v4002 = vlaneseq
        %v4003 = vshrl.u32 %v4002, 7
        %v4004 = vsub.s32 %v3597, %v4003
        %v4005 = vrot.slane %v3464, %v4004
        %v4006 = vsel %vm3602, %v4005, %v4001
        %v4007 = vlaneseq
        %v4008 = vshrl.u32 %v4007, 7
        %v4009 = vsub.s32 %v3604, %v4008
        %v4010 = vrot.slane %v3465, %v4009
        %v4011 = vsel %vm3609, %v4010, %v4006
        %v4012 = vlaneseq
        %v4013 = vshrl.u32 %v4012, 7
        %v4014 = vsub.s32 %v3611, %v4013
        %v4015 = vrot.slane %v3466, %v4014
        %v4016 = vsel %vm3616, %v4015, %v4011
        %v4017 = vlaneseq
        %v4018 = vshrl.u32 %v4017, 7
        %v4019 = vsub.s32 %v3618, %v4018
        %v4020 = vrot.slane %v3467, %v4019
        %v4021 = vsel %vm3623, %v4020, %v4016
        %v4022 = vlaneseq
        %v4023 = vshrl.u32 %v4022, 7
        %v4024 = vsub.s32 %v3625, %v4023
        %v4025 = vrot.slane %v3468, %v4024
        %v4026 = vsel %vm3630, %v4025, %v4021
        %v4027 = vlaneseq
        %v4028 = vshrl.u32 %v4027, 7
        %v4029 = vsub.s32 %v3632, %v4028
        %v4030 = vrot.slane %v3469, %v4029
        %v4031 = vsel %vm3637, %v4030, %v4026
        %v4032 = vlaneseq
        %v4033 = vshrl.u32 %v4032, 7
        %v4034 = vsub.s32 %v3639, %v4033
        %v4035 = vrot.slane %v3470, %v4034
        %v4036 = vsel %vm3644, %v4035, %v4031
        %s4037 = scalar_lea.vmem %s273, 4 [#allocation3]
        %4038 = vst [vmem:[%s4037] ss:$8 sm:$0x1] %v4036
        %4039 = vst [vmem:[%s4037] ss:$8 sm:$0x0] %v4036
        %v4056 = vlaneseq
        %v4057 = vshrl.u32 %v4056, 7
        %v4058 = vsub.s32 %v3536, %v4057
        %v4059 = vrot.slane %v3471, %v4058
        %v4060 = vlaneseq
        %v4061 = vshrl.u32 %v4060, 7
        %v4062 = vsub.s32 %v3541, %v4061
        %v4063 = vrot.slane %v3472, %v4062
        %v4064 = vsel %vm3546, %v4063, %v4059
        %v4065 = vlaneseq
        %v4066 = vshrl.u32 %v4065, 7
        %v4067 = vsub.s32 %v3548, %v4066
        %v4068 = vrot.slane %v3473, %v4067
        %v4069 = vsel %vm3553, %v4068, %v4064
        %v4070 = vlaneseq
        %v4071 = vshrl.u32 %v4070, 7
        %v4072 = vsub.s32 %v3555, %v4071
        %v4073 = vrot.slane %v3474, %v4072
        %v4074 = vsel %vm3560, %v4073, %v4069
        %v4075 = vlaneseq
        %v4076 = vshrl.u32 %v4075, 7
        %v4077 = vsub.s32 %v3562, %v4076
        %v4078 = vrot.slane %v3475, %v4077
        %v4079 = vsel %vm3567, %v4078, %v4074
        %v4080 = vlaneseq
        %v4081 = vshrl.u32 %v4080, 7
        %v4082 = vsub.s32 %v3569, %v4081
        %v4083 = vrot.slane %v3476, %v4082
        %v4084 = vsel %vm3574, %v4083, %v4079
        %v4085 = vlaneseq
        %v4086 = vshrl.u32 %v4085, 7
        %v4087 = vsub.s32 %v3576, %v4086
        %v4088 = vrot.slane %v3477, %v4087
        %v4089 = vsel %vm3581, %v4088, %v4084
        %v4090 = vlaneseq
        %v4091 = vshrl.u32 %v4090, 7
        %v4092 = vsub.s32 %v3583, %v4091
        %v4093 = vrot.slane %v3478, %v4092
        %v4094 = vsel %vm3588, %v4093, %v4089
        %v4095 = vlaneseq
        %v4096 = vshrl.u32 %v4095, 7
        %v4097 = vsub.s32 %v3590, %v4096
        %v4098 = vrot.slane %v3479, %v4097
        %v4099 = vsel %vm3595, %v4098, %v4094
        %v4100 = vlaneseq
        %v4101 = vshrl.u32 %v4100, 7
        %v4102 = vsub.s32 %v3597, %v4101
        %v4103 = vrot.slane %v3480, %v4102
        %v4104 = vsel %vm3602, %v4103, %v4099
        %v4105 = vlaneseq
        %v4106 = vshrl.u32 %v4105, 7
        %v4107 = vsub.s32 %v3604, %v4106
        %v4108 = vrot.slane %v3481, %v4107
        %v4109 = vsel %vm3609, %v4108, %v4104
        %v4110 = vlaneseq
        %v4111 = vshrl.u32 %v4110, 7
        %v4112 = vsub.s32 %v3611, %v4111
        %v4113 = vrot.slane %v3482, %v4112
        %v4114 = vsel %vm3616, %v4113, %v4109
        %v4115 = vlaneseq
        %v4116 = vshrl.u32 %v4115, 7
        %v4117 = vsub.s32 %v3618, %v4116
        %v4118 = vrot.slane %v3483, %v4117
        %v4119 = vsel %vm3623, %v4118, %v4114
        %v4120 = vlaneseq
        %v4121 = vshrl.u32 %v4120, 7
        %v4122 = vsub.s32 %v3625, %v4121
        %v4123 = vrot.slane %v3484, %v4122
        %v4124 = vsel %vm3630, %v4123, %v4119
        %v4125 = vlaneseq
        %v4126 = vshrl.u32 %v4125, 7
        %v4127 = vsub.s32 %v3632, %v4126
        %v4128 = vrot.slane %v3485, %v4127
        %v4129 = vsel %vm3637, %v4128, %v4124
        %v4130 = vlaneseq
        %v4131 = vshrl.u32 %v4130, 7
        %v4132 = vsub.s32 %v3639, %v4131
        %v4133 = vrot.slane %v3486, %v4132
        %v4134 = vsel %vm3644, %v4133, %v4129
        %s4135 = scalar_lea.vmem %s273, 5 [#allocation3]
        %4136 = vst [vmem:[%s4135] ss:$8 sm:$0x1] %v4134
        %4137 = vst [vmem:[%s4135] ss:$8 sm:$0x0] %v4134
        %v4154 = vlaneseq
        %v4155 = vshrl.u32 %v4154, 7
        %v4156 = vsub.s32 %v3536, %v4155
        %v4157 = vrot.slane %v3487, %v4156
        %v4158 = vlaneseq
        %v4159 = vshrl.u32 %v4158, 7
        %v4160 = vsub.s32 %v3541, %v4159
        %v4161 = vrot.slane %v3488, %v4160
        %v4162 = vsel %vm3546, %v4161, %v4157
        %v4163 = vlaneseq
        %v4164 = vshrl.u32 %v4163, 7
        %v4165 = vsub.s32 %v3548, %v4164
        %v4166 = vrot.slane %v3489, %v4165
        %v4167 = vsel %vm3553, %v4166, %v4162
        %v4168 = vlaneseq
        %v4169 = vshrl.u32 %v4168, 7
        %v4170 = vsub.s32 %v3555, %v4169
        %v4171 = vrot.slane %v3490, %v4170
        %v4172 = vsel %vm3560, %v4171, %v4167
        %v4173 = vlaneseq
        %v4174 = vshrl.u32 %v4173, 7
        %v4175 = vsub.s32 %v3562, %v4174
        %v4176 = vrot.slane %v3491, %v4175
        %v4177 = vsel %vm3567, %v4176, %v4172
        %v4178 = vlaneseq
        %v4179 = vshrl.u32 %v4178, 7
        %v4180 = vsub.s32 %v3569, %v4179
        %v4181 = vrot.slane %v3492, %v4180
        %v4182 = vsel %vm3574, %v4181, %v4177
        %v4183 = vlaneseq
        %v4184 = vshrl.u32 %v4183, 7
        %v4185 = vsub.s32 %v3576, %v4184
        %v4186 = vrot.slane %v3493, %v4185
        %v4187 = vsel %vm3581, %v4186, %v4182
        %v4188 = vlaneseq
        %v4189 = vshrl.u32 %v4188, 7
        %v4190 = vsub.s32 %v3583, %v4189
        %v4191 = vrot.slane %v3494, %v4190
        %v4192 = vsel %vm3588, %v4191, %v4187
        %v4193 = vlaneseq
        %v4194 = vshrl.u32 %v4193, 7
        %v4195 = vsub.s32 %v3590, %v4194
        %v4196 = vrot.slane %v3495, %v4195
        %v4197 = vsel %vm3595, %v4196, %v4192
        %v4198 = vlaneseq
        %v4199 = vshrl.u32 %v4198, 7
        %v4200 = vsub.s32 %v3597, %v4199
        %v4201 = vrot.slane %v3496, %v4200
        %v4202 = vsel %vm3602, %v4201, %v4197
        %v4203 = vlaneseq
        %v4204 = vshrl.u32 %v4203, 7
        %v4205 = vsub.s32 %v3604, %v4204
        %v4206 = vrot.slane %v3497, %v4205
        %v4207 = vsel %vm3609, %v4206, %v4202
        %v4208 = vlaneseq
        %v4209 = vshrl.u32 %v4208, 7
        %v4210 = vsub.s32 %v3611, %v4209
        %v4211 = vrot.slane %v3498, %v4210
        %v4212 = vsel %vm3616, %v4211, %v4207
        %v4213 = vlaneseq
        %v4214 = vshrl.u32 %v4213, 7
        %v4215 = vsub.s32 %v3618, %v4214
        %v4216 = vrot.slane %v3499, %v4215
        %v4217 = vsel %vm3623, %v4216, %v4212
        %v4218 = vlaneseq
        %v4219 = vshrl.u32 %v4218, 7
        %v4220 = vsub.s32 %v3625, %v4219
        %v4221 = vrot.slane %v3500, %v4220
        %v4222 = vsel %vm3630, %v4221, %v4217
        %v4223 = vlaneseq
        %v4224 = vshrl.u32 %v4223, 7
        %v4225 = vsub.s32 %v3632, %v4224
        %v4226 = vrot.slane %v3501, %v4225
        %v4227 = vsel %vm3637, %v4226, %v4222
        %v4228 = vlaneseq
        %v4229 = vshrl.u32 %v4228, 7
        %v4230 = vsub.s32 %v3639, %v4229
        %v4231 = vrot.slane %v3502, %v4230
        %v4232 = vsel %vm3644, %v4231, %v4227
        %s4233 = scalar_lea.vmem %s273, 6 [#allocation3]
        %4234 = vst [vmem:[%s4233] ss:$8 sm:$0x1] %v4232
        %4235 = vst [vmem:[%s4233] ss:$8 sm:$0x0] %v4232
        %v4252 = vlaneseq
        %v4253 = vshrl.u32 %v4252, 7
        %v4254 = vsub.s32 %v3536, %v4253
        %v4255 = vrot.slane %v3503, %v4254
        %v4256 = vlaneseq
        %v4257 = vshrl.u32 %v4256, 7
        %v4258 = vsub.s32 %v3541, %v4257
        %v4259 = vrot.slane %v3504, %v4258
        %v4260 = vsel %vm3546, %v4259, %v4255
        %v4261 = vlaneseq
        %v4262 = vshrl.u32 %v4261, 7
        %v4263 = vsub.s32 %v3548, %v4262
        %v4264 = vrot.slane %v3505, %v4263
        %v4265 = vsel %vm3553, %v4264, %v4260
        %v4266 = vlaneseq
        %v4267 = vshrl.u32 %v4266, 7
        %v4268 = vsub.s32 %v3555, %v4267
        %v4269 = vrot.slane %v3506, %v4268
        %v4270 = vsel %vm3560, %v4269, %v4265
        %v4271 = vlaneseq
        %v4272 = vshrl.u32 %v4271, 7
        %v4273 = vsub.s32 %v3562, %v4272
        %v4274 = vrot.slane %v3507, %v4273
        %v4275 = vsel %vm3567, %v4274, %v4270
        %v4276 = vlaneseq
        %v4277 = vshrl.u32 %v4276, 7
        %v4278 = vsub.s32 %v3569, %v4277
        %v4279 = vrot.slane %v3508, %v4278
        %v4280 = vsel %vm3574, %v4279, %v4275
        %v4281 = vlaneseq
        %v4282 = vshrl.u32 %v4281, 7
        %v4283 = vsub.s32 %v3576, %v4282
        %v4284 = vrot.slane %v3509, %v4283
        %v4285 = vsel %vm3581, %v4284, %v4280
        %v4286 = vlaneseq
        %v4287 = vshrl.u32 %v4286, 7
        %v4288 = vsub.s32 %v3583, %v4287
        %v4289 = vrot.slane %v3510, %v4288
        %v4290 = vsel %vm3588, %v4289, %v4285
        %v4291 = vlaneseq
        %v4292 = vshrl.u32 %v4291, 7
        %v4293 = vsub.s32 %v3590, %v4292
        %v4294 = vrot.slane %v3511, %v4293
        %v4295 = vsel %vm3595, %v4294, %v4290
        %v4296 = vlaneseq
        %v4297 = vshrl.u32 %v4296, 7
        %v4298 = vsub.s32 %v3597, %v4297
        %v4299 = vrot.slane %v3512, %v4298
        %v4300 = vsel %vm3602, %v4299, %v4295
        %v4301 = vlaneseq
        %v4302 = vshrl.u32 %v4301, 7
        %v4303 = vsub.s32 %v3604, %v4302
        %v4304 = vrot.slane %v3513, %v4303
        %v4305 = vsel %vm3609, %v4304, %v4300
        %v4306 = vlaneseq
        %v4307 = vshrl.u32 %v4306, 7
        %v4308 = vsub.s32 %v3611, %v4307
        %v4309 = vrot.slane %v3514, %v4308
        %v4310 = vsel %vm3616, %v4309, %v4305
        %v4311 = vlaneseq
        %v4312 = vshrl.u32 %v4311, 7
        %v4313 = vsub.s32 %v3618, %v4312
        %v4314 = vrot.slane %v3515, %v4313
        %v4315 = vsel %vm3623, %v4314, %v4310
        %v4316 = vlaneseq
        %v4317 = vshrl.u32 %v4316, 7
        %v4318 = vsub.s32 %v3625, %v4317
        %v4319 = vrot.slane %v3516, %v4318
        %v4320 = vsel %vm3630, %v4319, %v4315
        %v4321 = vlaneseq
        %v4322 = vshrl.u32 %v4321, 7
        %v4323 = vsub.s32 %v3632, %v4322
        %v4324 = vrot.slane %v3517, %v4323
        %v4325 = vsel %vm3637, %v4324, %v4320
        %v4326 = vlaneseq
        %v4327 = vshrl.u32 %v4326, 7
        %v4328 = vsub.s32 %v3639, %v4327
        %v4329 = vrot.slane %v3518, %v4328
        %v4330 = vsel %vm3644, %v4329, %v4325
        %s4331 = scalar_lea.vmem %s273, 7 [#allocation3]
        %4332 = vst [vmem:[%s4331] ss:$8 sm:$0x1] %v4330
        %4333 = vst [vmem:[%s4331] ss:$8 sm:$0x0] %v4330
        %s4334 = sand.u32 %s182, 1
        %s4335 = scalar_lea.sflag [#allocation4], %s4334
        %s4336 = sand.u32 %s182, 1
        %s4337 = smul.addr %s4336, 8
        %s4338 = scalar_lea.vmem [#allocation3], %s4337
        // Predicated region
        $region49: #{tpu_custom_call.1} parent=47 // pred_check
          %p4339 = pneg %p192
        $region50: #{tpu_custom_call.1} parent=47 // pred_check_branch
          %4341 = sbr.rel (%p4339) target = $region52
        $region51: #{tpu_custom_call.1} parent=47 // pred_region
          %s4343 = ssub.s32 128, 128
          %4344 = vsyncadd %s4335, %s4343
          %s4345 = smul.addr %s22, 128
          %s4346 = scalar_lea.hbm %s7, %s4345
          %s4348 = sshll.u32 %s4338, 4
          %s4349 = int_to_ptr.vmem [resolvable:$true] %s4348
          %4351 = dma.vmem_to_hbm [thread:$0]  %s4349, 128, %s4346, %s4335
        $region52: #{tpu_custom_call.1} parent=47 // pred_fallthru
          _
      $region48: #{tpu_custom_call.1} parent=5 // pred_fallthru
        _
      %p4352 = scmp.le.s32.totalorder 2, %s17
      // Predicated region
      $region53: #{tpu_custom_call.1} parent=5 // pred_check
        %p4353 = pneg %p4352
      $region54: #{tpu_custom_call.1} parent=5 // pred_check_branch
        %4355 = sbr.rel (%p4353) target = $region56
      $region55: #{tpu_custom_call.1} parent=5 // pred_region
        %s4356 = ssub.s32 %s17, 2
        // Predicated region
        $region57: #{tpu_custom_call.1} parent=55 // pred_check
          %p4357 = pneg %p198
        $region58: #{tpu_custom_call.1} parent=55 // pred_check_branch
          %4359 = sbr.rel (%p4357) target = $region60
        $region59: #{tpu_custom_call.1} parent=55 // pred_region
          %s4360 = sand.u32 %s183, 1
          %s4361 = scalar_lea.sflag [#allocation4], %s4360
          %s4362 = sand.u32 %s183, 1
          %s4363 = smul.addr %s4362, 8
          %s4364 = scalar_lea.vmem [#allocation3], %s4363
          %4365 = dma.done %s4361, 128
        $region60: #{tpu_custom_call.1} parent=55 // pred_fallthru
          _
      $region56: #{tpu_custom_call.1} parent=5 // pred_fallthru
        _
    $region6: #{tpu_custom_call.1} parent=1 // loop_footer
      %s21 = sadd.s32 1, %s17
    $region7: #{tpu_custom_call.1} parent=1 // loop_footer_branch
      %16 = sbr.rel target = $region3
    $region8: #{tpu_custom_call.1} parent=1 // loop_exit
      _
    %4366 = vsyncpa [#allocation4], 1
    %s4367 = scalar_lea.sflag [#allocation4], 1
    %4368 = vsyncpa %s4367, 1

</llo_original>
